<compile_context>
chip_gen: v5e
topology: v5e:2x2
jax: 0.10.0
libtpu: 0.0.40
codegen_flags: <defaults>
</compile_context>

<pallas_src>
import numpy as np

import jax
import jax.numpy as jnp
from jax.experimental import pallas as pl
from jax.experimental.pallas import tpu as pltpu


# ----------------------------------------------------------------------------
# Host-side (one-time) weight folding
# ----------------------------------------------------------------------------
def _conv_row_routing(h_in, b_tile):
    """Per-tap 0/1 row routing for Conv2d(k=3,s=2,p=1), block-diag over batch.

    Output row i of image b pulls input row (2*i + kh - 1) of image b.
    Shape: (3, B_TILE*H_out, B_TILE*H_in), bf16 (values are exactly 0/1).
    """
    h_out = h_in // 2
    r = np.zeros((3, h_out, h_in), np.float32)
    for kh in range(3):
        for i in range(h_out):
            src = 2 * i + kh - 1
            if 0 <= src < h_in:
                r[kh, i, src] = 1.0
    eye = np.eye(b_tile, dtype=np.float32)
    rb = np.stack([np.kron(eye, r[kh]) for kh in range(3)])
    return jnp.asarray(rb, jnp.bfloat16)


def _convT_row_routing(h_in, b_tile):
    """Row routing for ConvTranspose2d(k=3,s=2,p=1,output_padding=1).

    Output row p gets input row i (tap kh) iff p == 2*i + kh - 1.
    Returned hstacked over the 3 taps and block-diag over batch:
    shape (B_TILE*H_out, 3*B_TILE*H_in), f32 — the decoder routing matmul is
    kept in f32 so decoder partial sums are never truncated.
    """
    h_out = 2 * h_in
    r = np.zeros((3, h_out, h_in), np.float32)
    for kh in range(3):
        for p in range(h_out):
            num = p + 1 - kh
            if num % 2 == 0 and 0 <= num // 2 < h_in:
                r[kh, p, num // 2] = 1.0
    eye = np.eye(b_tile, dtype=np.float32)
    rb = np.concatenate([np.kron(eye, r[kh]) for kh in range(3)], axis=1)
    return jnp.asarray(rb, jnp.float32)


def _conv_col_weights(w_oihw, b, w_in):
    """Fold Conv2d(k3,s2,p1) horizontal taps into banded matrices.

    Returns W vstacked over the 3 vertical taps: (3*W_in*C_in, W_out*C_out)
    bf16, plus the bias row (1, W_out*C_out) f32.
    """
    c_out, c_in, _, _ = w_oihw.shape
    w_out = w_in // 2
    m = np.zeros((3, w_in, w_out), np.float32)
    for kw in range(3):
        for j in range(w_out):
            src = 2 * j + kw - 1
            if 0 <= src < w_in:
                m[kw, src, j] = 1.0
    w_hwio = jnp.transpose(w_oihw, (2, 3, 1, 0))                    # (kh,kw,Ci,Co)
    w_fold = jnp.einsum("kij,hkcd->hicjd", jnp.asarray(m), w_hwio)  # (3,Wi,Ci,Wo,Co)
    w_fold = w_fold.reshape(3 * w_in * c_in, w_out * c_out)
    b_row = jnp.tile(b.astype(jnp.float32), w_out).reshape(1, w_out * c_out)
    return w_fold.astype(jnp.bfloat16), b_row


def _convT_col_weights(w_iohw, b, w_in):
    """Fold ConvTranspose2d(k3,s2,p1,op1) horizontal taps.

    Returns per-tap W: (3, W_in*C_in, W_out*C_out) bf16 (applied BEFORE row
    upsampling), plus the bias row (1, W_out*C_out) f32.
    """
    c_in, c_out, _, _ = w_iohw.shape
    w_out = 2 * w_in
    m = np.zeros((3, w_in, w_out), np.float32)
    for kw in range(3):
        for wi in range(w_in):
            q = 2 * wi + kw - 1
            if 0 <= q < w_out:
                m[kw, wi, q] = 1.0
    w_hwio = jnp.transpose(w_iohw, (2, 3, 0, 1))                    # (kh,kw,Ci,Co)
    w_fold = jnp.einsum("kij,hkcd->hicjd", jnp.asarray(m), w_hwio)
    w_fold = w_fold.reshape(3, w_in * c_in, w_out * c_out)
    b_row = jnp.tile(b.astype(jnp.float32), w_out).reshape(1, w_out * c_out)
    return w_fold.astype(jnp.bfloat16), b_row


def _pick_b_tile(n, h, max_tile=8):
    """Largest batch tile (<= max_tile) dividing n whose merged-row blocks keep
    the (8,128) sublane constraint (or that covers the whole batch)."""
    for bt in range(min(n, max_tile), 0, -1):
        if n % bt:
            continue
        if n // bt == 1 or ((bt * h) % 8 == 0 and (bt * (h // 4)) % 8 == 0):
            return bt
    return n   # single block over the whole batch: block dims == full dims


# ----------------------------------------------------------------------------
# Single fused Pallas kernel: one grid program per B_TILE batch slab
# ----------------------------------------------------------------------------
def _autoencoder_kernel(x_ref,
                        r1_ref, w1_ref, b1_ref,
                        r2_ref, w2_ref, b2_ref,
                        r3_ref, w3_ref, b3_ref,
                        r4_ref, w4_ref, b4_ref,
                        emb_ref, rec_ref):
    relu = lambda v: jnp.maximum(v, 0.0)
    sigmoid = lambda v: 1.0 / (1.0 + jnp.exp(-v))

    def enc_layer(x, r_ref, w_ref, b_ref, act):
        # Conv2d(k3,s2,p1): route rows FIRST (downsample halves M of the big
        # matmul), then contract the 3 vertical taps against the folded W.
        k = w_ref.shape[0] // 3
        # Routing output is an exact row copy of bf16 x -> the bf16 cast is lossless.
        taps = [jnp.dot(r_ref[t], x,
                        preferred_element_type=jnp.float32).astype(jnp.bfloat16)
                for t in range(3)]
        if k % 128 == 0:
            # Lane-aligned: accumulate taps inside the MXU with one
            # (M, 3K) x (3K, N) matmul.
            lhs = jnp.concatenate(taps, axis=-1)
            y = jnp.dot(lhs, w_ref[...], preferred_element_type=jnp.float32)
        else:
            # Unaligned tap width: 3 matmuls + f32 accumulation (tiny adds).
            y = None
            for t in range(3):
                part = jnp.dot(taps[t], w_ref[pl.ds(t * k, k), :],
                               preferred_element_type=jnp.float32)
                y = part if y is None else y + part
        return act(y + b_ref[...])

    def dec_layer(x, r_ref, w_ref, b_ref, act):
        # ConvTranspose2d(k3,s2,p1,op1): apply the tap weights on the SMALL
        # pre-upsampled activation first (halves decoder MACs), then one f32
        # routing matmul that upsamples rows AND accumulates the taps.
        m_in = x.shape[0]
        zs = [jnp.dot(x, w_ref[t], preferred_element_type=jnp.float32)
              for t in range(3)]
        if m_in % 8 == 0:
            rhs = jnp.concatenate(zs, axis=0)          # (3*M_in, N), f32
            y = jnp.dot(r_ref[...], rhs, preferred_element_type=jnp.float32)
        else:
            y = None
            for t in range(3):
                part = jnp.dot(r_ref[:, pl.ds(t * m_in, m_in)], zs[t],
                               preferred_element_type=jnp.float32)
                y = part if y is None else y + part
        return act(y + b_ref[...])

    x = x_ref[...]                                               # (B*H, W*Cin) bf16
    h1 = enc_layer(x, r1_ref, w1_ref, b1_ref, relu).astype(jnp.bfloat16)
    emb = enc_layer(h1, r2_ref, w2_ref, b2_ref, relu)            # f32
    emb_ref[...] = emb.astype(emb_ref.dtype)
    d1 = dec_layer(emb.astype(jnp.bfloat16), r3_ref, w3_ref, b3_ref, relu)
    rec = dec_layer(d1.astype(jnp.bfloat16), r4_ref, w4_ref, b4_ref, sigmoid)
    rec_ref[...] = rec.astype(rec_ref.dtype)


# ----------------------------------------------------------------------------
# Autoencoder forward
# ----------------------------------------------------------------------------
def init_params(key, input_channels, embedding_dim):
    ks = jax.random.split(key, 8)
    scale = 0.1
    return {
        # encoder (Conv2d weights: (C_out, C_in, kH, kW))
        "enc1_w": scale * jax.random.normal(ks[0], (64, input_channels, 3, 3), jnp.float32),
        "enc1_b": scale * jax.random.normal(ks[1], (64,), jnp.float32),
        "enc2_w": scale * jax.random.normal(ks[2], (embedding_dim, 64, 3, 3), jnp.float32),
        "enc2_b": scale * jax.random.normal(ks[3], (embedding_dim,), jnp.float32),
        # decoder (ConvTranspose2d weights: (C_in, C_out, kH, kW))
        "dec1_w": scale * jax.random.normal(ks[4], (embedding_dim, 64, 3, 3), jnp.float32),
        "dec1_b": scale * jax.random.normal(ks[5], (64,), jnp.float32),
        "dec2_w": scale * jax.random.normal(ks[6], (64, input_channels, 3, 3), jnp.float32),
        "dec2_b": scale * jax.random.normal(ks[7], (input_channels,), jnp.float32),
    }


def autoencoder_forward(params, x_nchw, rescale_factor=1.0):
    """Returns (embedding, reconstruction), both NCHW, matching the PyTorch module."""
    # TODO(synk): rescale_factor != 1.0 / size != None (F.interpolate
    # resampling) is not lowered to Pallas; only the identity config is handled.
    assert rescale_factor == 1.0

    n, cin, h, w = x_nchw.shape
    assert h % 4 == 0 and w % 4 == 0, "H and W must be divisible by 4"
    e = params["enc2_w"].shape[0]
    h1h, h1w = h // 2, w // 2
    eh, ew = h // 4, w // 4

    bt = _pick_b_tile(n, h)
    n_blocks = n // bt

    # One-time folding into (routing, tap-folded matmul, bias-row) form.
    r1 = _conv_row_routing(h, bt)
    w1, b1 = _conv_col_weights(params["enc1_w"], params["enc1_b"], w)
    r2 = _conv_row_routing(h1h, bt)
    w2, b2 = _conv_col_weights(params["enc2_w"], params["enc2_b"], h1w)
    r3 = _convT_row_routing(eh, bt)
    w3, b3 = _convT_col_weights(params["dec1_w"], params["dec1_b"], ew)
    r4 = _convT_row_routing(h1h, bt)
    w4, b4 = _convT_col_weights(params["dec2_w"], params["dec2_b"], h1w)

    # NCHW -> channels-last 2D activations: rows = (batch, height), lanes = W*C.
    # TODO(synk): if the caller can supply/consume NHWC, these HBM transposes
    # around the kernel disappear entirely.
    x2d = (jnp.transpose(x_nchw, (0, 2, 3, 1))
           .reshape(n * h, w * cin)
           .astype(jnp.bfloat16))

    bx = pl.BlockSpec((bt * h, w * cin), lambda i: (i, 0))
    bemb = pl.BlockSpec((bt * eh, ew * e), lambda i: (i, 0))
    brec = pl.BlockSpec((bt * h, w * cin), lambda i: (i, 0))
    const2 = lambda i: (0, 0)
    const3 = lambda i: (0, 0, 0)

    def wspec(a):
        # Broadcast weights/routing/bias: same (full) block for every program.
        # TODO(synk): for large images add pipeline_mode=pl.Buffered(1) here to
        # single-buffer these constant blocks and halve their VMEM footprint.
        return pl.BlockSpec(a.shape, const3 if a.ndim == 3 else const2)

    in_specs = [bx] + [wspec(a) for a in (r1, w1, b1, r2, w2, b2,
                                          r3, w3, b3, r4, w4, b4)]

    emb2d, rec2d = pl.pallas_call(
        _autoencoder_kernel,
        grid=(n_blocks,),
        in_specs=in_specs,
        out_specs=(bemb, brec),
        out_shape=(
            jax.ShapeDtypeStruct((n * eh, ew * e), jnp.float32),
            jax.ShapeDtypeStruct((n * h, w * cin), jnp.float32),
        ),
        compiler_params=pltpu.CompilerParams(
            dimension_semantics=("parallel",),
            vmem_limit_bytes=32 * 1024 * 1024,
        ),
    )(x2d, r1, w1, b1, r2, w2, b2, r3, w3, b3, r4, w4, b4)

    embedding = jnp.transpose(emb2d.reshape(n, eh, ew, e), (0, 3, 1, 2))        # NCHW
    reconstruction = jnp.transpose(rec2d.reshape(n, h, w, cin), (0, 3, 1, 2))   # NCHW
    return embedding, reconstruction


# ----------------------------------------------------------------------------
# Pure-XLA reference (correctness check only)
# ----------------------------------------------------------------------------
def _reference_forward(params, x_nchw):
    dn = ("NHWC", "HWIO", "NHWC")
    x = jnp.transpose(x_nchw, (0, 2, 3, 1))

    def conv(x, w_oihw, b, act):
        w = jnp.transpose(w_oihw, (2, 3, 1, 0))
        y = jax.lax.conv_general_dilated(x, w, window_strides=(2, 2),
                                         padding=((1, 1), (1, 1)),
                                         dimension_numbers=dn)
        return act(y + b)

    def conv_t(x, w_iohw, b, act):
        w = jnp.transpose(w_iohw[:, :, ::-1, ::-1], (2, 3, 0, 1))
        y = jax.lax.conv_general_dilated(x, w, window_strides=(1, 1),
                                         padding=((1, 2), (1, 2)),
                                         lhs_dilation=(2, 2),
                                         dimension_numbers=dn)
        return act(y + b)

    relu = jax.nn.relu
    h1 = conv(x, params["enc1_w"], params["enc1_b"], relu)
    emb = conv(h1, params["enc2_w"], params["enc2_b"], relu)
    d1 = conv_t(emb, params["dec1_w"], params["dec1_b"], relu)
    rec = conv_t(d1, params["dec2_w"], params["dec2_b"], jax.nn.sigmoid)
    return jnp.transpose(emb, (0, 3, 1, 2)), jnp.transpose(rec, (0, 3, 1, 2))


if __name__ == "__main__":
    batch, input_channels, spatial, embedding_dim = 2, 4, 16, 32

    key = jax.random.PRNGKey(0)
    k_params, k_x = jax.random.split(key)
    params = init_params(k_params, input_channels, embedding_dim)
    x = jax.random.uniform(k_x, (batch, input_channels, spatial, spatial), jnp.float32)

    fwd = jax.jit(autoencoder_forward)
    embedding, reconstruction = fwd(params, x)
    jax.block_until_ready((embedding, reconstruction))

    assert embedding.shape == (batch, embedding_dim, spatial // 4, spatial // 4)
    assert reconstruction.shape == (batch, input_channels, spatial, spatial)
    assert bool(jnp.all(jnp.isfinite(embedding)))
    assert bool(jnp.all((reconstruction >= 0.0) & (reconstruction <= 1.0)))

    # Numerical check against an XLA convolution reference (bf16 MXU inputs ->
    # loose-ish tolerance).
    emb_ref, rec_ref = _reference_forward(params, x)
    assert bool(jnp.allclose(embedding, emb_ref, atol=3e-2, rtol=3e-2)), \
        "embedding mismatch vs reference"
    assert bool(jnp.allclose(reconstruction, rec_ref, atol=3e-2, rtol=3e-2)), \
        "reconstruction mismatch vs reference"

    print("KERNEL_OK")
</pallas_src>

<mosaic_0001>
module attributes {stable_mosaic.version = 11 : i64} {
  func.func @_autoencoder_kernel(%arg0: i32, %arg1: memref<32x64xbf16, #tpu.memory_space<vmem>>, %arg2: memref<3x16x32xbf16, #tpu.memory_space<vmem>>, %arg3: memref<192x512xbf16, #tpu.memory_space<vmem>>, %arg4: memref<1x512xf32, #tpu.memory_space<vmem>>, %arg5: memref<3x8x16xbf16, #tpu.memory_space<vmem>>, %arg6: memref<1536x128xbf16, #tpu.memory_space<vmem>>, %arg7: memref<1x128xf32, #tpu.memory_space<vmem>>, %arg8: memref<16x24xf32, #tpu.memory_space<vmem>>, %arg9: memref<3x128x512xbf16, #tpu.memory_space<vmem>>, %arg10: memref<1x512xf32, #tpu.memory_space<vmem>>, %arg11: memref<32x48xf32, #tpu.memory_space<vmem>>, %arg12: memref<3x512x64xbf16, #tpu.memory_space<vmem>>, %arg13: memref<1x64xf32, #tpu.memory_space<vmem>>, %arg14: memref<8x128xf32, #tpu.memory_space<vmem>>, %arg15: memref<32x64xf32, #tpu.memory_space<vmem>>) attributes {dimension_semantics = [#tpu.dimension_semantics<parallel>], iteration_bounds = array<i64: 1>, scalar_prefetch = 0 : i64, scratch_operands = 0 : i64, tpu.core_type = #tpu.core_type<tc>, window_params = [{transform_indices = @transform_0, window_bounds = array<i64: 32, 64>}, {pipeline_mode = #tpu.pipeline_mode<synchronous>, transform_indices = @transform_1, window_bounds = array<i64: 3, 16, 32>}, {pipeline_mode = #tpu.pipeline_mode<synchronous>, transform_indices = @transform_2, window_bounds = array<i64: 192, 512>}, {pipeline_mode = #tpu.pipeline_mode<synchronous>, transform_indices = @transform_3, window_bounds = array<i64: 1, 512>}, {pipeline_mode = #tpu.pipeline_mode<synchronous>, transform_indices = @transform_4, window_bounds = array<i64: 3, 8, 16>}, {pipeline_mode = #tpu.pipeline_mode<synchronous>, transform_indices = @transform_5, window_bounds = array<i64: 1536, 128>}, {pipeline_mode = #tpu.pipeline_mode<synchronous>, transform_indices = @transform_6, window_bounds = array<i64: 1, 128>}, {pipeline_mode = #tpu.pipeline_mode<synchronous>, transform_indices = @transform_7, window_bounds = array<i64: 16, 24>}, {pipeline_mode = #tpu.pipeline_mode<synchronous>, transform_indices = @transform_8, window_bounds = array<i64: 3, 128, 512>}, {pipeline_mode = #tpu.pipeline_mode<synchronous>, transform_indices = @transform_9, window_bounds = array<i64: 1, 512>}, {pipeline_mode = #tpu.pipeline_mode<synchronous>, transform_indices = @transform_10, window_bounds = array<i64: 32, 48>}, {pipeline_mode = #tpu.pipeline_mode<synchronous>, transform_indices = @transform_11, window_bounds = array<i64: 3, 512, 64>}, {pipeline_mode = #tpu.pipeline_mode<synchronous>, transform_indices = @transform_12, window_bounds = array<i64: 1, 64>}, {transform_indices = @transform_13, window_bounds = array<i64: 8, 128>}, {transform_indices = @transform_14, window_bounds = array<i64: 32, 64>}]} {
    %c0 = arith.constant 0 : index
    %c0_0 = arith.constant 0 : index
    %0 = vector.load %arg1[%c0, %c0_0] : memref<32x64xbf16, #tpu.memory_space<vmem>>, vector<32x64xbf16>
    %c0_1 = arith.constant 0 : index
    %c0_2 = arith.constant 0 : index
    %c0_3 = arith.constant 0 : index
    %1 = vector.load %arg2[%c0_1, %c0_2, %c0_3] : memref<3x16x32xbf16, #tpu.memory_space<vmem>>, vector<1x16x32xbf16>
    %2 = vector.shape_cast %1 : vector<1x16x32xbf16> to vector<16x32xbf16>
    %cst = arith.constant dense<0.000000e+00> : vector<16x64xf32>
    %3 = tpu.matmul %2, %0, %cst {dimension_numbers = #tpu.dot_dimension_numbers<[1], [0], [0], [1], [0, 0, 1, 1], [], []>} : vector<16x32xbf16>, vector<32x64xbf16>, vector<16x64xf32> -> vector<16x64xf32>
    %4 = arith.truncf %3 : vector<16x64xf32> to vector<16x64xbf16>
    %c1 = arith.constant 1 : index
    %c0_4 = arith.constant 0 : index
    %c0_5 = arith.constant 0 : index
    %5 = vector.load %arg2[%c1, %c0_4, %c0_5] : memref<3x16x32xbf16, #tpu.memory_space<vmem>>, vector<1x16x32xbf16>
    %6 = vector.shape_cast %5 : vector<1x16x32xbf16> to vector<16x32xbf16>
    %cst_6 = arith.constant dense<0.000000e+00> : vector<16x64xf32>
    %7 = tpu.matmul %6, %0, %cst_6 {dimension_numbers = #tpu.dot_dimension_numbers<[1], [0], [0], [1], [0, 0, 1, 1], [], []>} : vector<16x32xbf16>, vector<32x64xbf16>, vector<16x64xf32> -> vector<16x64xf32>
    %8 = arith.truncf %7 : vector<16x64xf32> to vector<16x64xbf16>
    %c2 = arith.constant 2 : index
    %c0_7 = arith.constant 0 : index
    %c0_8 = arith.constant 0 : index
    %9 = vector.load %arg2[%c2, %c0_7, %c0_8] : memref<3x16x32xbf16, #tpu.memory_space<vmem>>, vector<1x16x32xbf16>
    %10 = vector.shape_cast %9 : vector<1x16x32xbf16> to vector<16x32xbf16>
    %cst_9 = arith.constant dense<0.000000e+00> : vector<16x64xf32>
    %11 = tpu.matmul %10, %0, %cst_9 {dimension_numbers = #tpu.dot_dimension_numbers<[1], [0], [0], [1], [0, 0, 1, 1], [], []>} : vector<16x32xbf16>, vector<32x64xbf16>, vector<16x64xf32> -> vector<16x64xf32>
    %12 = arith.truncf %11 : vector<16x64xf32> to vector<16x64xbf16>
    %c0_10 = arith.constant 0 : index
    %c0_11 = arith.constant 0 : index
    %13 = vector.load %arg3[%c0_10, %c0_11] : memref<192x512xbf16, #tpu.memory_space<vmem>>, vector<64x512xbf16>
    %cst_12 = arith.constant dense<0.000000e+00> : vector<16x512xf32>
    %14 = tpu.matmul %4, %13, %cst_12 {dimension_numbers = #tpu.dot_dimension_numbers<[1], [0], [0], [1], [0, 0, 1, 1], [], []>} : vector<16x64xbf16>, vector<64x512xbf16>, vector<16x512xf32> -> vector<16x512xf32>
    %c64 = arith.constant 64 : index
    %c0_13 = arith.constant 0 : index
    %15 = vector.load %arg3[%c64, %c0_13] : memref<192x512xbf16, #tpu.memory_space<vmem>>, vector<64x512xbf16>
    %cst_14 = arith.constant dense<0.000000e+00> : vector<16x512xf32>
    %16 = tpu.matmul %8, %15, %cst_14 {dimension_numbers = #tpu.dot_dimension_numbers<[1], [0], [0], [1], [0, 0, 1, 1], [], []>} : vector<16x64xbf16>, vector<64x512xbf16>, vector<16x512xf32> -> vector<16x512xf32>
    %17 = arith.addf %14, %16 : vector<16x512xf32>
    %c128 = arith.constant 128 : index
    %c0_15 = arith.constant 0 : index
    %18 = vector.load %arg3[%c128, %c0_15] : memref<192x512xbf16, #tpu.memory_space<vmem>>, vector<64x512xbf16>
    %cst_16 = arith.constant dense<0.000000e+00> : vector<16x512xf32>
    %19 = tpu.matmul %12, %18, %cst_16 {dimension_numbers = #tpu.dot_dimension_numbers<[1], [0], [0], [1], [0, 0, 1, 1], [], []>} : vector<16x64xbf16>, vector<64x512xbf16>, vector<16x512xf32> -> vector<16x512xf32>
    %20 = arith.addf %17, %19 : vector<16x512xf32>
    %c0_17 = arith.constant 0 : index
    %c0_18 = arith.constant 0 : index
    %21 = vector.load %arg4[%c0_17, %c0_18] : memref<1x512xf32, #tpu.memory_space<vmem>>, vector<1x512xf32>
    %22 = vector.broadcast %21 : vector<1x512xf32> to vector<16x512xf32>
    %23 = arith.addf %20, %22 : vector<16x512xf32>
    %cst_19 = arith.constant 0.000000e+00 : f32
    %24 = vector.broadcast %cst_19 : f32 to vector<16x512xf32>
    %25 = arith.maximumf %23, %24 : vector<16x512xf32>
    %26 = arith.truncf %25 : vector<16x512xf32> to vector<16x512xbf16>
    %c0_20 = arith.constant 0 : index
    %c0_21 = arith.constant 0 : index
    %c0_22 = arith.constant 0 : index
    %27 = vector.load %arg5[%c0_20, %c0_21, %c0_22] : memref<3x8x16xbf16, #tpu.memory_space<vmem>>, vector<1x8x16xbf16>
    %28 = vector.shape_cast %27 : vector<1x8x16xbf16> to vector<8x16xbf16>
    %cst_23 = arith.constant dense<0.000000e+00> : vector<8x512xf32>
    %29 = tpu.matmul %28, %26, %cst_23 {dimension_numbers = #tpu.dot_dimension_numbers<[1], [0], [0], [1], [0, 0, 1, 1], [], []>} : vector<8x16xbf16>, vector<16x512xbf16>, vector<8x512xf32> -> vector<8x512xf32>
    %30 = arith.truncf %29 : vector<8x512xf32> to vector<8x512xbf16>
    %c1_24 = arith.constant 1 : index
    %c0_25 = arith.constant 0 : index
    %c0_26 = arith.constant 0 : index
    %31 = vector.load %arg5[%c1_24, %c0_25, %c0_26] : memref<3x8x16xbf16, #tpu.memory_space<vmem>>, vector<1x8x16xbf16>
    %32 = vector.shape_cast %31 : vector<1x8x16xbf16> to vector<8x16xbf16>
    %cst_27 = arith.constant dense<0.000000e+00> : vector<8x512xf32>
    %33 = tpu.matmul %32, %26, %cst_27 {dimension_numbers = #tpu.dot_dimension_numbers<[1], [0], [0], [1], [0, 0, 1, 1], [], []>} : vector<8x16xbf16>, vector<16x512xbf16>, vector<8x512xf32> -> vector<8x512xf32>
    %34 = arith.truncf %33 : vector<8x512xf32> to vector<8x512xbf16>
    %c2_28 = arith.constant 2 : index
    %c0_29 = arith.constant 0 : index
    %c0_30 = arith.constant 0 : index
    %35 = vector.load %arg5[%c2_28, %c0_29, %c0_30] : memref<3x8x16xbf16, #tpu.memory_space<vmem>>, vector<1x8x16xbf16>
    %36 = vector.shape_cast %35 : vector<1x8x16xbf16> to vector<8x16xbf16>
    %cst_31 = arith.constant dense<0.000000e+00> : vector<8x512xf32>
    %37 = tpu.matmul %36, %26, %cst_31 {dimension_numbers = #tpu.dot_dimension_numbers<[1], [0], [0], [1], [0, 0, 1, 1], [], []>} : vector<8x16xbf16>, vector<16x512xbf16>, vector<8x512xf32> -> vector<8x512xf32>
    %38 = arith.truncf %37 : vector<8x512xf32> to vector<8x512xbf16>
    %39 = tpu.concatenate %30, %34, %38 in 1 : vector<8x512xbf16>, vector<8x512xbf16>, vector<8x512xbf16> -> vector<8x1536xbf16>
    %c0_32 = arith.constant 0 : index
    %c0_33 = arith.constant 0 : index
    %40 = vector.load %arg6[%c0_32, %c0_33] : memref<1536x128xbf16, #tpu.memory_space<vmem>>, vector<1536x128xbf16>
    %cst_34 = arith.constant dense<0.000000e+00> : vector<8x128xf32>
    %41 = tpu.matmul %39, %40, %cst_34 {dimension_numbers = #tpu.dot_dimension_numbers<[1], [0], [0], [1], [0, 0, 1, 1], [], []>} : vector<8x1536xbf16>, vector<1536x128xbf16>, vector<8x128xf32> -> vector<8x128xf32>
    %c0_35 = arith.constant 0 : index
    %c0_36 = arith.constant 0 : index
    %42 = vector.load %arg7[%c0_35, %c0_36] : memref<1x128xf32, #tpu.memory_space<vmem>>, vector<1x128xf32>
    %43 = vector.broadcast %42 : vector<1x128xf32> to vector<8x128xf32>
    %44 = arith.addf %41, %43 : vector<8x128xf32>
    %cst_37 = arith.constant 0.000000e+00 : f32
    %45 = vector.broadcast %cst_37 : f32 to vector<8x128xf32>
    %46 = arith.maximumf %44, %45 : vector<8x128xf32>
    %c0_38 = arith.constant 0 : index
    %c0_39 = arith.constant 0 : index
    %47 = vector.load %arg14[%c0_38, %c0_39] : memref<8x128xf32, #tpu.memory_space<vmem>>, vector<8x128xf32>
    tpu.vector_store %arg14[%c0_38, %c0_39], %46 {strides = array<i32>} : memref<8x128xf32, #tpu.memory_space<vmem>>, vector<8x128xf32>,
    %48 = arith.truncf %46 : vector<8x128xf32> to vector<8x128xbf16>
    %c0_40 = arith.constant 0 : index
    %c0_41 = arith.constant 0 : index
    %c0_42 = arith.constant 0 : index
    %49 = vector.load %arg9[%c0_40, %c0_41, %c0_42] : memref<3x128x512xbf16, #tpu.memory_space<vmem>>, vector<1x128x512xbf16>
    %50 = vector.shape_cast %49 : vector<1x128x512xbf16> to vector<128x512xbf16>
    %cst_43 = arith.constant dense<0.000000e+00> : vector<8x512xf32>
    %51 = tpu.matmul %48, %50, %cst_43 {dimension_numbers = #tpu.dot_dimension_numbers<[1], [0], [0], [1], [0, 0, 1, 1], [], []>} : vector<8x128xbf16>, vector<128x512xbf16>, vector<8x512xf32> -> vector<8x512xf32>
    %c1_44 = arith.constant 1 : index
    %c0_45 = arith.constant 0 : index
    %c0_46 = arith.constant 0 : index
    %52 = vector.load %arg9[%c1_44, %c0_45, %c0_46] : memref<3x128x512xbf16, #tpu.memory_space<vmem>>, vector<1x128x512xbf16>
    %53 = vector.shape_cast %52 : vector<1x128x512xbf16> to vector<128x512xbf16>
    %cst_47 = arith.constant dense<0.000000e+00> : vector<8x512xf32>
    %54 = tpu.matmul %48, %53, %cst_47 {dimension_numbers = #tpu.dot_dimension_numbers<[1], [0], [0], [1], [0, 0, 1, 1], [], []>} : vector<8x128xbf16>, vector<128x512xbf16>, vector<8x512xf32> -> vector<8x512xf32>
    %c2_48 = arith.constant 2 : index
    %c0_49 = arith.constant 0 : index
    %c0_50 = arith.constant 0 : index
    %55 = vector.load %arg9[%c2_48, %c0_49, %c0_50] : memref<3x128x512xbf16, #tpu.memory_space<vmem>>, vector<1x128x512xbf16>
    %56 = vector.shape_cast %55 : vector<1x128x512xbf16> to vector<128x512xbf16>
    %cst_51 = arith.constant dense<0.000000e+00> : vector<8x512xf32>
    %57 = tpu.matmul %48, %56, %cst_51 {dimension_numbers = #tpu.dot_dimension_numbers<[1], [0], [0], [1], [0, 0, 1, 1], [], []>} : vector<8x128xbf16>, vector<128x512xbf16>, vector<8x512xf32> -> vector<8x512xf32>
    %58 = tpu.concatenate %51, %54, %57 in 0 : vector<8x512xf32>, vector<8x512xf32>, vector<8x512xf32> -> vector<24x512xf32>
    %c0_52 = arith.constant 0 : index
    %c0_53 = arith.constant 0 : index
    %59 = vector.load %arg8[%c0_52, %c0_53] : memref<16x24xf32, #tpu.memory_space<vmem>>, vector<16x24xf32>
    %cst_54 = arith.constant dense<0.000000e+00> : vector<16x512xf32>
    %60 = tpu.matmul %59, %58, %cst_54 {dimension_numbers = #tpu.dot_dimension_numbers<[1], [0], [0], [1], [0, 0, 1, 1], [], []>} : vector<16x24xf32>, vector<24x512xf32>, vector<16x512xf32> -> vector<16x512xf32>
    %c0_55 = arith.constant 0 : index
    %c0_56 = arith.constant 0 : index
    %61 = vector.load %arg10[%c0_55, %c0_56] : memref<1x512xf32, #tpu.memory_space<vmem>>, vector<1x512xf32>
    %62 = vector.broadcast %61 : vector<1x512xf32> to vector<16x512xf32>
    %63 = arith.addf %60, %62 : vector<16x512xf32>
    %cst_57 = arith.constant 0.000000e+00 : f32
    %64 = vector.broadcast %cst_57 : f32 to vector<16x512xf32>
    %65 = arith.maximumf %63, %64 : vector<16x512xf32>
    %66 = arith.truncf %65 : vector<16x512xf32> to vector<16x512xbf16>
    %c0_58 = arith.constant 0 : index
    %c0_59 = arith.constant 0 : index
    %c0_60 = arith.constant 0 : index
    %67 = vector.load %arg12[%c0_58, %c0_59, %c0_60] : memref<3x512x64xbf16, #tpu.memory_space<vmem>>, vector<1x512x64xbf16>
    %68 = vector.shape_cast %67 : vector<1x512x64xbf16> to vector<512x64xbf16>
    %cst_61 = arith.constant dense<0.000000e+00> : vector<16x64xf32>
    %69 = tpu.matmul %66, %68, %cst_61 {dimension_numbers = #tpu.dot_dimension_numbers<[1], [0], [0], [1], [0, 0, 1, 1], [], []>} : vector<16x512xbf16>, vector<512x64xbf16>, vector<16x64xf32> -> vector<16x64xf32>
    %c1_62 = arith.constant 1 : index
    %c0_63 = arith.constant 0 : index
    %c0_64 = arith.constant 0 : index
    %70 = vector.load %arg12[%c1_62, %c0_63, %c0_64] : memref<3x512x64xbf16, #tpu.memory_space<vmem>>, vector<1x512x64xbf16>
    %71 = vector.shape_cast %70 : vector<1x512x64xbf16> to vector<512x64xbf16>
    %cst_65 = arith.constant dense<0.000000e+00> : vector<16x64xf32>
    %72 = tpu.matmul %66, %71, %cst_65 {dimension_numbers = #tpu.dot_dimension_numbers<[1], [0], [0], [1], [0, 0, 1, 1], [], []>} : vector<16x512xbf16>, vector<512x64xbf16>, vector<16x64xf32> -> vector<16x64xf32>
    %c2_66 = arith.constant 2 : index
    %c0_67 = arith.constant 0 : index
    %c0_68 = arith.constant 0 : index
    %73 = vector.load %arg12[%c2_66, %c0_67, %c0_68] : memref<3x512x64xbf16, #tpu.memory_space<vmem>>, vector<1x512x64xbf16>
    %74 = vector.shape_cast %73 : vector<1x512x64xbf16> to vector<512x64xbf16>
    %cst_69 = arith.constant dense<0.000000e+00> : vector<16x64xf32>
    %75 = tpu.matmul %66, %74, %cst_69 {dimension_numbers = #tpu.dot_dimension_numbers<[1], [0], [0], [1], [0, 0, 1, 1], [], []>} : vector<16x512xbf16>, vector<512x64xbf16>, vector<16x64xf32> -> vector<16x64xf32>
    %76 = tpu.concatenate %69, %72, %75 in 0 : vector<16x64xf32>, vector<16x64xf32>, vector<16x64xf32> -> vector<48x64xf32>
    %c0_70 = arith.constant 0 : index
    %c0_71 = arith.constant 0 : index
    %77 = vector.load %arg11[%c0_70, %c0_71] : memref<32x48xf32, #tpu.memory_space<vmem>>, vector<32x48xf32>
    %cst_72 = arith.constant dense<0.000000e+00> : vector<32x64xf32>
    %78 = tpu.matmul %77, %76, %cst_72 {dimension_numbers = #tpu.dot_dimension_numbers<[1], [0], [0], [1], [0, 0, 1, 1], [], []>} : vector<32x48xf32>, vector<48x64xf32>, vector<32x64xf32> -> vector<32x64xf32>
    %c0_73 = arith.constant 0 : index
    %c0_74 = arith.constant 0 : index
    %79 = vector.load %arg13[%c0_73, %c0_74] : memref<1x64xf32, #tpu.memory_space<vmem>>, vector<1x64xf32>
    %80 = vector.broadcast %79 : vector<1x64xf32> to vector<32x64xf32>
    %81 = arith.addf %78, %80 : vector<32x64xf32>
    %cst_75 = arith.constant 0.000000e+00 : f32
    %82 = vector.broadcast %cst_75 : f32 to vector<32x64xf32>
    %83 = arith.subf %82, %81 : vector<32x64xf32>
    %84 = math.exp %83 : vector<32x64xf32>
    %cst_76 = arith.constant 1.000000e+00 : f32
    %85 = vector.broadcast %cst_76 : f32 to vector<32x64xf32>
    %86 = arith.addf %85, %84 : vector<32x64xf32>
    %cst_77 = arith.constant 1.000000e+00 : f32
    %87 = vector.broadcast %cst_77 : f32 to vector<32x64xf32>
    %88 = arith.divf %87, %86 : vector<32x64xf32>
    %c0_78 = arith.constant 0 : index
    %c0_79 = arith.constant 0 : index
    %89 = vector.load %arg15[%c0_78, %c0_79] : memref<32x64xf32, #tpu.memory_space<vmem>>, vector<32x64xf32>
    tpu.vector_store %arg15[%c0_78, %c0_79], %88 {strides = array<i32>} : memref<32x64xf32, #tpu.memory_space<vmem>>, vector<32x64xf32>,
    return
  }
  func.func @transform_0(%arg0: i32) -> (i32, i32) {
    %c0_i32 = arith.constant 0 : i32
    %c0_i32_0 = arith.constant 0 : i32
    return %arg0, %c0_i32 : i32, i32
  }
  func.func @transform_1(%arg0: i32) -> (i32, i32, i32) {
    %c0_i32 = arith.constant 0 : i32
    %c0_i32_0 = arith.constant 0 : i32
    %c0_i32_1 = arith.constant 0 : i32
    %c0_i32_2 = arith.constant 0 : i32
    return %c0_i32, %c0_i32_0, %c0_i32_1 : i32, i32, i32
  }
  func.func @transform_2(%arg0: i32) -> (i32, i32) {
    %c0_i32 = arith.constant 0 : i32
    %c0_i32_0 = arith.constant 0 : i32
    %c0_i32_1 = arith.constant 0 : i32
    return %c0_i32, %c0_i32_0 : i32, i32
  }
  func.func @transform_3(%arg0: i32) -> (i32, i32) {
    %c0_i32 = arith.constant 0 : i32
    %c0_i32_0 = arith.constant 0 : i32
    %c0_i32_1 = arith.constant 0 : i32
    return %c0_i32, %c0_i32_0 : i32, i32
  }
  func.func @transform_4(%arg0: i32) -> (i32, i32, i32) {
    %c0_i32 = arith.constant 0 : i32
    %c0_i32_0 = arith.constant 0 : i32
    %c0_i32_1 = arith.constant 0 : i32
    %c0_i32_2 = arith.constant 0 : i32
    return %c0_i32, %c0_i32_0, %c0_i32_1 : i32, i32, i32
  }
  func.func @transform_5(%arg0: i32) -> (i32, i32) {
    %c0_i32 = arith.constant 0 : i32
    %c0_i32_0 = arith.constant 0 : i32
    %c0_i32_1 = arith.constant 0 : i32
    return %c0_i32, %c0_i32_0 : i32, i32
  }
  func.func @transform_6(%arg0: i32) -> (i32, i32) {
    %c0_i32 = arith.constant 0 : i32
    %c0_i32_0 = arith.constant 0 : i32
    %c0_i32_1 = arith.constant 0 : i32
    return %c0_i32, %c0_i32_0 : i32, i32
  }
  func.func @transform_7(%arg0: i32) -> (i32, i32) {
    %c0_i32 = arith.constant 0 : i32
    %c0_i32_0 = arith.constant 0 : i32
    %c0_i32_1 = arith.constant 0 : i32
    return %c0_i32, %c0_i32_0 : i32, i32
  }
  func.func @transform_8(%arg0: i32) -> (i32, i32, i32) {
    %c0_i32 = arith.constant 0 : i32
    %c0_i32_0 = arith.constant 0 : i32
    %c0_i32_1 = arith.constant 0 : i32
    %c0_i32_2 = arith.constant 0 : i32
    return %c0_i32, %c0_i32_0, %c0_i32_1 : i32, i32, i32
  }
  func.func @transform_9(%arg0: i32) -> (i32, i32) {
    %c0_i32 = arith.constant 0 : i32
    %c0_i32_0 = arith.constant 0 : i32
    %c0_i32_1 = arith.constant 0 : i32
    return %c0_i32, %c0_i32_0 : i32, i32
  }
  func.func @transform_10(%arg0: i32) -> (i32, i32) {
    %c0_i32 = arith.constant 0 : i32
    %c0_i32_0 = arith.constant 0 : i32
    %c0_i32_1 = arith.constant 0 : i32
    return %c0_i32, %c0_i32_0 : i32, i32
  }
  func.func @transform_11(%arg0: i32) -> (i32, i32, i32) {
    %c0_i32 = arith.constant 0 : i32
    %c0_i32_0 = arith.constant 0 : i32
    %c0_i32_1 = arith.constant 0 : i32
    %c0_i32_2 = arith.constant 0 : i32
    return %c0_i32, %c0_i32_0, %c0_i32_1 : i32, i32, i32
  }
  func.func @transform_12(%arg0: i32) -> (i32, i32) {
    %c0_i32 = arith.constant 0 : i32
    %c0_i32_0 = arith.constant 0 : i32
    %c0_i32_1 = arith.constant 0 : i32
    return %c0_i32, %c0_i32_0 : i32, i32
  }
  func.func @transform_13(%arg0: i32) -> (i32, i32) {
    %c0_i32 = arith.constant 0 : i32
    %c0_i32_0 = arith.constant 0 : i32
    return %arg0, %c0_i32 : i32, i32
  }
  func.func @transform_14(%arg0: i32) -> (i32, i32) {
    %c0_i32 = arith.constant 0 : i32
    %c0_i32_0 = arith.constant 0 : i32
    return %arg0, %c0_i32 : i32, i32
  }
}

</mosaic_0001>

<llo_original>
// kernel: tile.38
$region0: #{tile.38}
  #allocation0 [shape = 's32[1]{0}', space=sflag, size = 0x4, scoped, tag = 'scoped memory for tile.38']
  %s0 = inlined_call_operand.vmem [shape: f32[4], index: 0, kind: input, shape index: {}]
  %s1 = inlined_call_operand.vmem [shape: f32[16,4], index: 1, kind: output, shape index: {}]
  // Predicated region
  $region2: #{tile.38} parent=0 // pred_check
    _
  $region3: #{tile.38} parent=0 // pred_check_branch
    %3 = sbr.rel (0) target = $region5
  $region4: #{tile.38} parent=0 // pred_region
    _
  $region5: #{tile.38} parent=0 // pred_fallthru
    _
  %v4 = vld [vmem:[%s0] ss:$0 sm:$0xff]
  %5 = vst [vmem:[%s1] sm:$0xff] %v4
  %s6 = scalar_lea.vmem %s1, 8
  %7 = vst [vmem:[%s6] sm:$0xff] %v4

// kernel: tile.39
$region0: #{tile.39}
  %s0 = inlined_call_operand.vmem [shape: f32[16,4], index: 0, kind: input, shape index: {}]
  %s1 = inlined_call_operand.vmem [shape: f32[1,64], index: 1, kind: output, shape index: {}]
  $region1: #{tile.39} parent=0
    #allocation0 [shape = 'u8[4096]{0}', space=vmem, size = 0x1000, scoped, tag = 'scoped mem for output reshape']
    %v2 = vld [vmem:[%s0] sm:$0x1]
    %vm3 = vcmask 31744
    %4 = vst.msk [vmem:[#allocation0] sm:$0x1] %vm3, %v2
    %s5 = scalar_lea.vmem %s0, 15
    %v6 = vld [vmem:[%s5] sm:$0x1]
    %7 = vrot.lane.b32.xlu0 %v6, 60
    %v8 = vpop.permute.xlu0 %7
    %vm9 = vcmask 523744
    %10 = vst.msk [vmem:[#allocation0] sm:$0x1] %vm9, %v8
    %s11 = scalar_lea.vmem %s0, 14
    %v12 = vld [vmem:[%s11] sm:$0x1]
    %13 = vrot.lane.b32.xlu0 %v12, 56
    %v14 = vpop.permute.xlu0 %13
    %vm15 = vcmask 490944
    %16 = vst.msk [vmem:[#allocation0] sm:$0x1] %vm15, %v14
    %s17 = scalar_lea.vmem %s0, 13
    %v18 = vld [vmem:[%s17] sm:$0x1]
    %19 = vrot.lane.b32.xlu0 %v18, 52
    %v20 = vpop.permute.xlu0 %19
    %vm21 = vcmask 458144
    %22 = vst.msk [vmem:[#allocation0] sm:$0x1] %vm21, %v20
    %s23 = scalar_lea.vmem %s0, 12
    %v24 = vld [vmem:[%s23] sm:$0x1]
    %25 = vrot.lane.b32.xlu0 %v24, 48
    %v26 = vpop.permute.xlu0 %25
    %vm27 = vcmask 425344
    %28 = vst.msk [vmem:[#allocation0] sm:$0x1] %vm27, %v26
    %s29 = scalar_lea.vmem %s0, 11
    %v30 = vld [vmem:[%s29] sm:$0x1]
    %31 = vrot.lane.b32.xlu0 %v30, 44
    %v32 = vpop.permute.xlu0 %31
    %vm33 = vcmask 392544
    %34 = vst.msk [vmem:[#allocation0] sm:$0x1] %vm33, %v32
    %s35 = scalar_lea.vmem %s0, 10
    %v36 = vld [vmem:[%s35] sm:$0x1]
    %37 = vrot.lane.b32.xlu0 %v36, 40
    %v38 = vpop.permute.xlu0 %37
    %vm39 = vcmask 359744
    %40 = vst.msk [vmem:[#allocation0] sm:$0x1] %vm39, %v38
    %s41 = scalar_lea.vmem %s0, 9
    %v42 = vld [vmem:[%s41] sm:$0x1]
    %43 = vrot.lane.b32.xlu0 %v42, 36
    %v44 = vpop.permute.xlu0 %43
    %vm45 = vcmask 326944
    %46 = vst.msk [vmem:[#allocation0] sm:$0x1] %vm45, %v44
    %s47 = scalar_lea.vmem %s0, 8
    %v48 = vld [vmem:[%s47] sm:$0x1]
    %49 = vrot.lane.b32.xlu0 %v48, 32
    %v50 = vpop.permute.xlu0 %49
    %vm51 = vcmask 294144
    %52 = vst.msk [vmem:[#allocation0] sm:$0x1] %vm51, %v50
    %s53 = scalar_lea.vmem %s0, 7
    %v54 = vld [vmem:[%s53] sm:$0x1]
    %55 = vrot.lane.b32.xlu0 %v54, 28
    %v56 = vpop.permute.xlu0 %55
    %vm57 = vcmask 261344
    %58 = vst.msk [vmem:[#allocation0] sm:$0x1] %vm57, %v56
    %s59 = scalar_lea.vmem %s0, 6
    %v60 = vld [vmem:[%s59] sm:$0x1]
    %61 = vrot.lane.b32.xlu0 %v60, 24
    %v62 = vpop.permute.xlu0 %61
    %vm63 = vcmask 228544
    %64 = vst.msk [vmem:[#allocation0] sm:$0x1] %vm63, %v62
    %s65 = scalar_lea.vmem %s0, 5
    %v66 = vld [vmem:[%s65] sm:$0x1]
    %67 = vrot.lane.b32.xlu0 %v66, 20
    %v68 = vpop.permute.xlu0 %67
    %vm69 = vcmask 195744
    %70 = vst.msk [vmem:[#allocation0] sm:$0x1] %vm69, %v68
    %s71 = scalar_lea.vmem %s0, 4
    %v72 = vld [vmem:[%s71] sm:$0x1]
    %73 = vrot.lane.b32.xlu0 %v72, 16
    %v74 = vpop.permute.xlu0 %73
    %vm75 = vcmask 162944
    %76 = vst.msk [vmem:[#allocation0] sm:$0x1] %vm75, %v74
    %s77 = scalar_lea.vmem %s0, 3
    %v78 = vld [vmem:[%s77] sm:$0x1]
    %79 = vrot.lane.b32.xlu0 %v78, 12
    %v80 = vpop.permute.xlu0 %79
    %vm81 = vcmask 130144
    %82 = vst.msk [vmem:[#allocation0] sm:$0x1] %vm81, %v80
    %s83 = scalar_lea.vmem %s0, 2
    %v84 = vld [vmem:[%s83] sm:$0x1]
    %85 = vrot.lane.b32.xlu0 %v84, 8
    %v86 = vpop.permute.xlu0 %85
    %vm87 = vcmask 97344
    %88 = vst.msk [vmem:[#allocation0] sm:$0x1] %vm87, %v86
    %s89 = scalar_lea.vmem %s0, 1
    %v90 = vld [vmem:[%s89] sm:$0x1]
    %91 = vrot.lane.b32.xlu0 %v90, 4
    %v92 = vpop.permute.xlu0 %91
    %vm93 = vcmask 64544
    %94 = vst.msk [vmem:[#allocation0] sm:$0x1] %vm93, %v92
    %s96 = ssub.s32 2, 1
    %v97 = vld [vmem:[#allocation0] sm:%s96]
    %s99 = ssub.s32 2, 1
    %100 = vst [vmem:[%s1] sm:%s99] %v97

// kernel: tile.23
$region0: #{tile.23}
  #allocation0 [shape = 's32[1]{0}', space=sflag, size = 0x4, scoped, tag = 'scoped memory for tile.23']
  %s0 = inlined_call_operand.vmem [shape: f32[64], index: 0, kind: input, shape index: {}]
  %s1 = inlined_call_operand.vmem [shape: f32[8,64], index: 1, kind: output, shape index: {}]
  // Predicated region
  $region2: #{tile.23} parent=0 // pred_check
    _
  $region3: #{tile.23} parent=0 // pred_check_branch
    %3 = sbr.rel (0) target = $region5
  $region4: #{tile.23} parent=0 // pred_region
    _
  $region5: #{tile.23} parent=0 // pred_fallthru
    _
  %v4 = vld [vmem:[%s0] ss:$0 sm:$0xff]
  %5 = vst [vmem:[%s1] sm:$0xff] %v4

// kernel: tile.24
$region0: #{tile.24}
  %s0 = inlined_call_operand.vmem [shape: f32[8,64], index: 0, kind: input, shape index: {}]
  %s1 = inlined_call_operand.vmem [shape: f32[1,512], index: 1, kind: output, shape index: {}]
  $region1: #{tile.24} parent=0
    #allocation0 [shape = 'u8[16384]{0}', space=vmem, size = 0x4000, scoped, tag = 'scoped mem for output reshape']
    %v2 = vld [vmem:[%s0] ss:$2 sm:$0xf]
    %vm3 = vcmask 523264
    %4 = vst.msk [vmem:[#allocation0] ss:$8 sm:$0xf] %vm3, %v2
    %s5 = scalar_lea.vmem %s0, 1
    %v6 = vld [vmem:[%s5] ss:$2 sm:$0xf]
    %7 = vrot.lane.b32.xlu0 %v6, 64
    %v8 = vpop.permute.xlu0 %7
    %vm9 = vcmask 1048064
    %10 = vst.msk [vmem:[#allocation0] ss:$8 sm:$0xf] %vm9, %v8
    %s12 = ssub.s32 2, 1
    %v13 = vld [vmem:[#allocation0] sm:%s12]
    %s15 = ssub.s32 2, 1
    %16 = vst [vmem:[%s1] sm:%s15] %v13
    %s17 = scalar_lea.vmem [#allocation0], 8
    %v18 = vld [vmem:[%s17] sm:%s12]
    %s20 = ssub.s32 2, 1
    %s21 = scalar_lea.vmem %s1, 1
    %22 = vst [vmem:[%s21] sm:%s20] %v18
    %s23 = scalar_lea.vmem [#allocation0], 16
    %v24 = vld [vmem:[%s23] sm:%s12]
    %s26 = ssub.s32 2, 1
    %s27 = scalar_lea.vmem %s1, 2
    %28 = vst [vmem:[%s27] sm:%s26] %v24
    %s29 = scalar_lea.vmem [#allocation0], 24
    %v30 = vld [vmem:[%s29] sm:%s12]
    %s32 = ssub.s32 2, 1
    %s33 = scalar_lea.vmem %s1, 3
    %34 = vst [vmem:[%s33] sm:%s32] %v30

// kernel: tile.28
$region0: #{tile.28}
  #allocation0 [shape = 's32[1]{0}', space=sflag, size = 0x4, scoped, tag = 'scoped memory for tile.28']
  %s0 = inlined_call_operand.vmem [shape: f32[32], index: 0, kind: input, shape index: {}]
  %s1 = inlined_call_operand.vmem [shape: f32[4,32], index: 1, kind: output, shape index: {}]
  // Predicated region
  $region2: #{tile.28} parent=0 // pred_check
    _
  $region3: #{tile.28} parent=0 // pred_check_branch
    %3 = sbr.rel (0) target = $region5
  $region4: #{tile.28} parent=0 // pred_region
    _
  $region5: #{tile.28} parent=0 // pred_fallthru
    _
  %v4 = vld [vmem:[%s0] ss:$0 sm:$0xff]
  %5 = vst [vmem:[%s1] sm:$0xf] %v4

// kernel: tile.29
$region0: #{tile.29}
  %s0 = inlined_call_operand.vmem [shape: f32[4,32], index: 0, kind: input, shape index: {}]
  %s1 = inlined_call_operand.vmem [shape: f32[1,128], index: 1, kind: output, shape index: {}]
  $region1: #{tile.29} parent=0
    #allocation0 [shape = 'u8[4096]{0}', space=vmem, size = 0x1000, scoped, tag = 'scoped mem for output reshape']
    #allocation1 [shape = 'u8[4096]{0}', space=vmem, size = 0x1000, scoped, tag = 'scoped mem for input reshape']
    %s3 = ssub.s32 16, 1
    %v4 = vld [vmem:[%s0] sm:%s3]
    %5 = vst [vmem:[#allocation1] sm:%s3] %v4
    %v6 = vld [vmem:[#allocation1] sm:$0x1]
    %vm7 = vcmask 261120
    %8 = vst.msk [vmem:[#allocation0] sm:$0x1] %vm7, %v6
    %s9 = scalar_lea.vmem [#allocation1], 3
    %v10 = vld [vmem:[%s9] sm:$0x1]
    %11 = vrot.lane.b32.xlu0 %v10, 96
    %v12 = vpop.permute.xlu0 %11
    %vm13 = vcmask 1048320
    %14 = vst.msk [vmem:[#allocation0] sm:$0x1] %vm13, %v12
    %s15 = scalar_lea.vmem [#allocation1], 2
    %v16 = vld [vmem:[%s15] sm:$0x1]
    %17 = vrot.lane.b32.xlu0 %v16, 64
    %v18 = vpop.permute.xlu0 %17
    %vm19 = vcmask 785920
    %20 = vst.msk [vmem:[#allocation0] sm:$0x1] %vm19, %v18
    %s21 = scalar_lea.vmem [#allocation1], 1
    %v22 = vld [vmem:[%s21] sm:$0x1]
    %23 = vrot.lane.b32.xlu0 %v22, 32
    %v24 = vpop.permute.xlu0 %23
    %vm25 = vcmask 523520
    %26 = vst.msk [vmem:[#allocation0] sm:$0x1] %vm25, %v24
    %s28 = ssub.s32 2, 1
    %v29 = vld [vmem:[#allocation0] sm:%s28]
    %s31 = ssub.s32 2, 1
    %32 = vst [vmem:[%s1] sm:%s31] %v29

// kernel: autoencoder_forward.1
$region0: #{autoencoder_forward.1}
  #allocation0 [shape = 'u32[]', space=smem, size = 0x4, offset = 0x4, fixed_abs, tag = 'smem constant byte address 0x4 - core index']
  #allocation1 [shape = 'u32[72,128]{1,0:T(1,128)}', space=vmem, size = 0x9000, scoped, tag = 'internal scratch']
  %s0 = inlined_call_operand.vmem [shape: bf16[32,64], index: 0, kind: input, shape index: {}]
  %s1 = inlined_call_operand.vmem [shape: bf16[3,16,32], index: 1, kind: input, shape index: {}]
  %s2 = inlined_call_operand.vmem [shape: bf16[192,512], index: 2, kind: input, shape index: {}]
  %s3 = inlined_call_operand.vmem [shape: f32[1,512], index: 3, kind: input, shape index: {}]
  %s4 = inlined_call_operand.vmem [shape: bf16[3,8,16], index: 4, kind: input, shape index: {}]
  %s5 = inlined_call_operand.vmem [shape: bf16[1536,128], index: 5, kind: input, shape index: {}]
  %s6 = inlined_call_operand.vmem [shape: f32[1,128], index: 6, kind: input, shape index: {}]
  %s7 = inlined_call_operand.vmem [shape: f32[16,24], index: 7, kind: input, shape index: {}]
  %s8 = inlined_call_operand.vmem [shape: bf16[3,128,512], index: 8, kind: input, shape index: {}]
  %s9 = inlined_call_operand.vmem [shape: f32[1,512], index: 9, kind: input, shape index: {}]
  %s10 = inlined_call_operand.vmem [shape: f32[32,48], index: 10, kind: input, shape index: {}]
  %s11 = inlined_call_operand.vmem [shape: bf16[3,512,64], index: 11, kind: input, shape index: {}]
  %s12 = inlined_call_operand.vmem [shape: f32[1,64], index: 12, kind: input, shape index: {}]
  %s13 = inlined_call_operand.vmem [shape: f32[8,128], index: 13, kind: output, shape index: {0}]
  %s14 = inlined_call_operand.vmem [shape: f32[32,64], index: 14, kind: output, shape index: {1}]
  %15 = xla_tuple %s13, %s14
  %s16 = sld [smem:[#allocation0]]
  $region70: #{autoencoder_forward.1} parent=0
    _
  %s18 = ssub.s32 1, %s16
  %s19 = scalar_select 0, %s18, %s16
  // Predicated region
  $region2: #{autoencoder_forward.1} parent=0 // pred_check
    _
  $region3: #{autoencoder_forward.1} parent=0 // pred_check_branch
    %21 = sbr.rel (0) target = $region5
  $region4: #{autoencoder_forward.1} parent=0 // pred_region
    _
  $region5: #{autoencoder_forward.1} parent=0 // pred_fallthru
    _
  // Predicated region
  $region6: #{autoencoder_forward.1} parent=0 // pred_check
    _
  $region7: #{autoencoder_forward.1} parent=0 // pred_check_branch
    %23 = sbr.rel (0) target = $region9
  $region8: #{autoencoder_forward.1} parent=0 // pred_region
    _
  $region9: #{autoencoder_forward.1} parent=0 // pred_fallthru
    _
  // Predicated region
  $region10: #{autoencoder_forward.1} parent=0 // pred_check
    _
  $region11: #{autoencoder_forward.1} parent=0 // pred_check_branch
    %25 = sbr.rel (0) target = $region13
  $region12: #{autoencoder_forward.1} parent=0 // pred_region
    _
  $region13: #{autoencoder_forward.1} parent=0 // pred_fallthru
    _
  // Predicated region
  $region14: #{autoencoder_forward.1} parent=0 // pred_check
    _
  $region15: #{autoencoder_forward.1} parent=0 // pred_check_branch
    %27 = sbr.rel (0) target = $region17
  $region16: #{autoencoder_forward.1} parent=0 // pred_region
    _
  $region17: #{autoencoder_forward.1} parent=0 // pred_fallthru
    _
  // Predicated region
  $region18: #{autoencoder_forward.1} parent=0 // pred_check
    _
  $region19: #{autoencoder_forward.1} parent=0 // pred_check_branch
    %29 = sbr.rel (0) target = $region21
  $region20: #{autoencoder_forward.1} parent=0 // pred_region
    _
  $region21: #{autoencoder_forward.1} parent=0 // pred_fallthru
    _
  // Predicated region
  $region22: #{autoencoder_forward.1} parent=0 // pred_check
    _
  $region23: #{autoencoder_forward.1} parent=0 // pred_check_branch
    %31 = sbr.rel (0) target = $region25
  $region24: #{autoencoder_forward.1} parent=0 // pred_region
    _
  $region25: #{autoencoder_forward.1} parent=0 // pred_fallthru
    _
  // Predicated region
  $region26: #{autoencoder_forward.1} parent=0 // pred_check
    _
  $region27: #{autoencoder_forward.1} parent=0 // pred_check_branch
    %33 = sbr.rel (0) target = $region29
  $region28: #{autoencoder_forward.1} parent=0 // pred_region
    _
  $region29: #{autoencoder_forward.1} parent=0 // pred_fallthru
    _
  // Predicated region
  $region30: #{autoencoder_forward.1} parent=0 // pred_check
    _
  $region31: #{autoencoder_forward.1} parent=0 // pred_check_branch
    %35 = sbr.rel (0) target = $region33
  $region32: #{autoencoder_forward.1} parent=0 // pred_region
    _
  $region33: #{autoencoder_forward.1} parent=0 // pred_fallthru
    _
  // Predicated region
  $region34: #{autoencoder_forward.1} parent=0 // pred_check
    _
  $region35: #{autoencoder_forward.1} parent=0 // pred_check_branch
    %37 = sbr.rel (0) target = $region37
  $region36: #{autoencoder_forward.1} parent=0 // pred_region
    _
  $region37: #{autoencoder_forward.1} parent=0 // pred_fallthru
    _
  // Predicated region
  $region38: #{autoencoder_forward.1} parent=0 // pred_check
    _
  $region39: #{autoencoder_forward.1} parent=0 // pred_check_branch
    %39 = sbr.rel (0) target = $region41
  $region40: #{autoencoder_forward.1} parent=0 // pred_region
    _
  $region41: #{autoencoder_forward.1} parent=0 // pred_fallthru
    _
  // Predicated region
  $region42: #{autoencoder_forward.1} parent=0 // pred_check
    _
  $region43: #{autoencoder_forward.1} parent=0 // pred_check_branch
    %41 = sbr.rel (0) target = $region45
  $region44: #{autoencoder_forward.1} parent=0 // pred_region
    _
  $region45: #{autoencoder_forward.1} parent=0 // pred_fallthru
    _
  // Predicated region
  $region46: #{autoencoder_forward.1} parent=0 // pred_check
    _
  $region47: #{autoencoder_forward.1} parent=0 // pred_check_branch
    %43 = sbr.rel (0) target = $region49
  $region48: #{autoencoder_forward.1} parent=0 // pred_region
    _
  $region49: #{autoencoder_forward.1} parent=0 // pred_fallthru
    _
  // Predicated region
  $region50: #{autoencoder_forward.1} parent=0 // pred_check
    _
  $region51: #{autoencoder_forward.1} parent=0 // pred_check_branch
    %45 = sbr.rel (0) target = $region53
  $region52: #{autoencoder_forward.1} parent=0 // pred_region
    _
  $region53: #{autoencoder_forward.1} parent=0 // pred_fallthru
    _
  %v47 = vld [vmem:[%s0] sm:$0xf]
  %v48 = vld [vmem:[%s0 + $0x4] sm:$0xf]
  %v49 = vld [vmem:[%s0 + $0x8] sm:$0xf]
  %v50 = vld [vmem:[%s0 + $0xc] sm:$0xf]
  %v51 = vld [vmem:[%s1] sm:$0xf]
  %v52 = vld [vmem:[%s1 + $0x4] sm:$0xf]
  %v55 = vunpack.c.l.b16 %v51
  %v56 = vunpack.c.l.b16 %v52
  %v57 = vpack.c.b16 %v56, %v55
  %v62 = vunpack.c.l.b16 %v47
  %v63 = vunpack.c.l.b16 %v48
  %v64 = vunpack.c.l.b16 %v49
  %v65 = vunpack.c.l.b16 %v50
  %v66 = vpack.c.b16 %v63, %v62
  %v67 = vpack.c.b16 %v65, %v64
  %vm70 = vcmask 261120
  %v72 = vsel %vm70, %v57, 0
  %74 = vmatpush.bf16.msra.mxu0 0
  %75 = vmatpush.bf16.msra.mxu0 0
  %76 = vmatpush.bf16.msra.mxu0 0
  %77 = vmatpush.bf16.msra.mxu0 0
  %78 = vmatpush.bf16.msra.mxu0 0
  %79 = vmatpush.bf16.msra.mxu0 0
  %80 = vmatpush.bf16.msra.mxu0 %v67
  %81 = vmatpush.bf16.msra.mxu0 %v66
  %82 = vmatmul.bf16.gmra.mxu0 %v72
  %v83 = vpop.f32.mrf.mxu0
  %v84 = vadd.f32 0.0, %v83
  %v85 = vpop.f32.mrf.mxu0
  %v86 = vadd.f32 0.0, %v85
  %87 = vdwg.mxu0
  %v88 = vpack.c.bf16 %v86, %v84
  %s89 = scalar_lea.vmem %s1, 8
  %v90 = vld [vmem:[%s89] sm:$0xf]
  %v91 = vld [vmem:[%s89 + $0x4] sm:$0xf]
  %v94 = vunpack.c.l.b16 %v90
  %v95 = vunpack.c.l.b16 %v91
  %v96 = vpack.c.b16 %v95, %v94
  %v98 = vsel %vm70, %v96, 0
  %100 = vmatpush.bf16.msra.mxu0 0
  %101 = vmatpush.bf16.msra.mxu0 0
  %102 = vmatpush.bf16.msra.mxu0 0
  %103 = vmatpush.bf16.msra.mxu0 0
  %104 = vmatpush.bf16.msra.mxu0 0
  %105 = vmatpush.bf16.msra.mxu0 0
  %106 = vmatpush.bf16.msra.mxu0 %v67
  %107 = vmatpush.bf16.msra.mxu0 %v66
  %108 = vmatmul.bf16.gmra.mxu0 %v98
  %v109 = vpop.f32.mrf.mxu0
  %v110 = vadd.f32 0.0, %v109
  %v111 = vpop.f32.mrf.mxu0
  %v112 = vadd.f32 0.0, %v111
  %113 = vdwg.mxu0
  %v114 = vpack.c.bf16 %v112, %v110
  %s115 = scalar_lea.vmem %s1, 16
  %v116 = vld [vmem:[%s115] sm:$0xf]
  %v117 = vld [vmem:[%s115 + $0x4] sm:$0xf]
  %v120 = vunpack.c.l.b16 %v116
  %v121 = vunpack.c.l.b16 %v117
  %v122 = vpack.c.b16 %v121, %v120
  %v124 = vsel %vm70, %v122, 0
  %126 = vmatpush.bf16.msra.mxu0 0
  %127 = vmatpush.bf16.msra.mxu0 0
  %128 = vmatpush.bf16.msra.mxu0 0
  %129 = vmatpush.bf16.msra.mxu0 0
  %130 = vmatpush.bf16.msra.mxu0 0
  %131 = vmatpush.bf16.msra.mxu0 0
  %132 = vmatpush.bf16.msra.mxu0 %v67
  %133 = vmatpush.bf16.msra.mxu0 %v66
  %134 = vmatmul.bf16.gmra.mxu0 %v124
  %v135 = vpop.f32.mrf.mxu0
  %v136 = vadd.f32 0.0, %v135
  %v137 = vpop.f32.mrf.mxu0
  %v138 = vadd.f32 0.0, %v137
  %139 = vdwg.mxu0
  %v140 = vpack.c.bf16 %v138, %v136
  %v141 = vld [vmem:[%s2] sm:$0xff]
  %v142 = vld [vmem:[%s2 + $0x8] sm:$0xff]
  %v143 = vld [vmem:[%s2 + $0x10] sm:$0xff]
  %v144 = vld [vmem:[%s2 + $0x18] sm:$0xff]
  %v145 = vld [vmem:[%s2 + $0x20] sm:$0xff]
  %v146 = vld [vmem:[%s2 + $0x28] sm:$0xff]
  %v147 = vld [vmem:[%s2 + $0x30] sm:$0xff]
  %v148 = vld [vmem:[%s2 + $0x38] sm:$0xff]
  %v149 = vld [vmem:[%s2 + $0x40] sm:$0xff]
  %v150 = vld [vmem:[%s2 + $0x48] sm:$0xff]
  %v151 = vld [vmem:[%s2 + $0x50] sm:$0xff]
  %v152 = vld [vmem:[%s2 + $0x58] sm:$0xff]
  %v153 = vld [vmem:[%s2 + $0x60] sm:$0xff]
  %v154 = vld [vmem:[%s2 + $0x68] sm:$0xff]
  %v155 = vld [vmem:[%s2 + $0x70] sm:$0xff]
  %v156 = vld [vmem:[%s2 + $0x78] sm:$0xff]
  %v157 = vld [vmem:[%s2 + $0x80] sm:$0xff]
  %v158 = vld [vmem:[%s2 + $0x88] sm:$0xff]
  %v159 = vld [vmem:[%s2 + $0x90] sm:$0xff]
  %v160 = vld [vmem:[%s2 + $0x98] sm:$0xff]
  %v161 = vld [vmem:[%s2 + $0xa0] sm:$0xff]
  %v162 = vld [vmem:[%s2 + $0xa8] sm:$0xff]
  %v163 = vld [vmem:[%s2 + $0xb0] sm:$0xff]
  %v164 = vld [vmem:[%s2 + $0xb8] sm:$0xff]
  %v165 = vld [vmem:[%s2 + $0xc0] sm:$0xff]
  %v166 = vld [vmem:[%s2 + $0xc8] sm:$0xff]
  %v167 = vld [vmem:[%s2 + $0xd0] sm:$0xff]
  %v168 = vld [vmem:[%s2 + $0xd8] sm:$0xff]
  %v169 = vld [vmem:[%s2 + $0xe0] sm:$0xff]
  %v170 = vld [vmem:[%s2 + $0xe8] sm:$0xff]
  %v171 = vld [vmem:[%s2 + $0xf0] sm:$0xff]
  %v172 = vld [vmem:[%s2 + $0xf8] sm:$0xff]
  %v189 = vunpack.c.l.b16 %v157
  %v190 = vunpack.c.h.b16 %v157
  %v191 = vunpack.c.l.b16 %v158
  %v192 = vunpack.c.h.b16 %v158
  %v193 = vunpack.c.l.b16 %v159
  %v194 = vunpack.c.h.b16 %v159
  %v195 = vunpack.c.l.b16 %v160
  %v196 = vunpack.c.h.b16 %v160
  %v197 = vunpack.c.l.b16 %v161
  %v198 = vunpack.c.h.b16 %v161
  %v199 = vunpack.c.l.b16 %v162
  %v200 = vunpack.c.h.b16 %v162
  %v201 = vunpack.c.l.b16 %v163
  %v202 = vunpack.c.h.b16 %v163
  %v203 = vunpack.c.l.b16 %v164
  %v204 = vunpack.c.h.b16 %v164
  %v205 = vunpack.c.l.b16 %v165
  %v206 = vunpack.c.h.b16 %v165
  %v207 = vunpack.c.l.b16 %v166
  %v208 = vunpack.c.h.b16 %v166
  %v209 = vunpack.c.l.b16 %v167
  %v210 = vunpack.c.h.b16 %v167
  %v211 = vunpack.c.l.b16 %v168
  %v212 = vunpack.c.h.b16 %v168
  %v213 = vunpack.c.l.b16 %v169
  %v214 = vunpack.c.h.b16 %v169
  %v215 = vunpack.c.l.b16 %v170
  %v216 = vunpack.c.h.b16 %v170
  %v217 = vunpack.c.l.b16 %v171
  %v218 = vunpack.c.h.b16 %v171
  %v219 = vunpack.c.l.b16 %v172
  %v220 = vunpack.c.h.b16 %v172
  %v221 = vpack.c.b16 %v193, %v189
  %v222 = vpack.c.b16 %v194, %v190
  %v223 = vpack.c.b16 %v195, %v191
  %v224 = vpack.c.b16 %v196, %v192
  %v225 = vpack.c.b16 %v201, %v197
  %v226 = vpack.c.b16 %v202, %v198
  %v227 = vpack.c.b16 %v203, %v199
  %v228 = vpack.c.b16 %v204, %v200
  %v229 = vpack.c.b16 %v209, %v205
  %v230 = vpack.c.b16 %v210, %v206
  %v231 = vpack.c.b16 %v211, %v207
  %v232 = vpack.c.b16 %v212, %v208
  %v233 = vpack.c.b16 %v217, %v213
  %v234 = vpack.c.b16 %v218, %v214
  %v235 = vpack.c.b16 %v219, %v215
  %v236 = vpack.c.b16 %v220, %v216
  %vm253 = vcmask 523264
  %v255 = vsel %vm253, %v114, 0
  %257 = vmatpush.bf16.msra.mxu0 0
  %258 = vmatpush.bf16.msra.mxu0 0
  %259 = vmatpush.bf16.msra.mxu0 0
  %260 = vmatpush.bf16.msra.mxu0 0
  %261 = vmatpush.bf16.msra.mxu0 %v233
  %262 = vmatpush.bf16.msra.mxu0 %v229
  %263 = vmatpush.bf16.msra.mxu0 %v225
  %264 = vmatpush.bf16.msra.mxu0 %v221
  %265 = vmatmul.bf16.gmra.mxu0 %v255
  %v266 = vpop.f32.mrf.mxu0
  %v267 = vadd.f32 0.0, %v266
  %v268 = vpop.f32.mrf.mxu0
  %v269 = vadd.f32 0.0, %v268
  %270 = vdwg.mxu0
  %271 = vmatpush.bf16.msra.mxu0 0
  %272 = vmatpush.bf16.msra.mxu0 0
  %273 = vmatpush.bf16.msra.mxu0 0
  %274 = vmatpush.bf16.msra.mxu0 0
  %275 = vmatpush.bf16.msra.mxu0 %v234
  %276 = vmatpush.bf16.msra.mxu0 %v230
  %277 = vmatpush.bf16.msra.mxu0 %v226
  %278 = vmatpush.bf16.msra.mxu0 %v222
  %279 = vmatmul.bf16.gmra.mxu0 %v255
  %v280 = vpop.f32.mrf.mxu0
  %v281 = vadd.f32 0.0, %v280
  %v282 = vpop.f32.mrf.mxu0
  %v283 = vadd.f32 0.0, %v282
  %284 = vdwg.mxu0
  %285 = vmatpush.bf16.msra.mxu0 0
  %286 = vmatpush.bf16.msra.mxu0 0
  %287 = vmatpush.bf16.msra.mxu0 0
  %288 = vmatpush.bf16.msra.mxu0 0
  %289 = vmatpush.bf16.msra.mxu0 %v235
  %290 = vmatpush.bf16.msra.mxu0 %v231
  %291 = vmatpush.bf16.msra.mxu0 %v227
  %292 = vmatpush.bf16.msra.mxu0 %v223
  %293 = vmatmul.bf16.gmra.mxu0 %v255
  %v294 = vpop.f32.mrf.mxu0
  %v295 = vadd.f32 0.0, %v294
  %v296 = vpop.f32.mrf.mxu0
  %v297 = vadd.f32 0.0, %v296
  %298 = vdwg.mxu0
  %299 = vmatpush.bf16.msra.mxu0 0
  %300 = vmatpush.bf16.msra.mxu0 0
  %301 = vmatpush.bf16.msra.mxu0 0
  %302 = vmatpush.bf16.msra.mxu0 0
  %303 = vmatpush.bf16.msra.mxu0 %v236
  %304 = vmatpush.bf16.msra.mxu0 %v232
  %305 = vmatpush.bf16.msra.mxu0 %v228
  %306 = vmatpush.bf16.msra.mxu0 %v224
  %307 = vmatmul.bf16.gmra.mxu0 %v255
  %v308 = vpop.f32.mrf.mxu0
  %v309 = vadd.f32 0.0, %v308
  %v310 = vpop.f32.mrf.mxu0
  %v311 = vadd.f32 0.0, %v310
  %312 = vdwg.mxu0
  %v329 = vunpack.c.l.b16 %v141
  %v330 = vunpack.c.h.b16 %v141
  %v331 = vunpack.c.l.b16 %v142
  %v332 = vunpack.c.h.b16 %v142
  %v333 = vunpack.c.l.b16 %v143
  %v334 = vunpack.c.h.b16 %v143
  %v335 = vunpack.c.l.b16 %v144
  %v336 = vunpack.c.h.b16 %v144
  %v337 = vunpack.c.l.b16 %v145
  %v338 = vunpack.c.h.b16 %v145
  %v339 = vunpack.c.l.b16 %v146
  %v340 = vunpack.c.h.b16 %v146
  %v341 = vunpack.c.l.b16 %v147
  %v342 = vunpack.c.h.b16 %v147
  %v343 = vunpack.c.l.b16 %v148
  %v344 = vunpack.c.h.b16 %v148
  %v345 = vunpack.c.l.b16 %v149
  %v346 = vunpack.c.h.b16 %v149
  %v347 = vunpack.c.l.b16 %v150
  %v348 = vunpack.c.h.b16 %v150
  %v349 = vunpack.c.l.b16 %v151
  %v350 = vunpack.c.h.b16 %v151
  %v351 = vunpack.c.l.b16 %v152
  %v352 = vunpack.c.h.b16 %v152
  %v353 = vunpack.c.l.b16 %v153
  %v354 = vunpack.c.h.b16 %v153
  %v355 = vunpack.c.l.b16 %v154
  %v356 = vunpack.c.h.b16 %v154
  %v357 = vunpack.c.l.b16 %v155
  %v358 = vunpack.c.h.b16 %v155
  %v359 = vunpack.c.l.b16 %v156
  %v360 = vunpack.c.h.b16 %v156
  %v361 = vpack.c.b16 %v333, %v329
  %v362 = vpack.c.b16 %v334, %v330
  %v363 = vpack.c.b16 %v335, %v331
  %v364 = vpack.c.b16 %v336, %v332
  %v365 = vpack.c.b16 %v341, %v337
  %v366 = vpack.c.b16 %v342, %v338
  %v367 = vpack.c.b16 %v343, %v339
  %v368 = vpack.c.b16 %v344, %v340
  %v369 = vpack.c.b16 %v349, %v345
  %v370 = vpack.c.b16 %v350, %v346
  %v371 = vpack.c.b16 %v351, %v347
  %v372 = vpack.c.b16 %v352, %v348
  %v373 = vpack.c.b16 %v357, %v353
  %v374 = vpack.c.b16 %v358, %v354
  %v375 = vpack.c.b16 %v359, %v355
  %v376 = vpack.c.b16 %v360, %v356
  %v394 = vsel %vm253, %v88, 0
  %396 = vmatpush.bf16.msra.mxu0 0
  %397 = vmatpush.bf16.msra.mxu0 0
  %398 = vmatpush.bf16.msra.mxu0 0
  %399 = vmatpush.bf16.msra.mxu0 0
  %400 = vmatpush.bf16.msra.mxu0 %v373
  %401 = vmatpush.bf16.msra.mxu0 %v369
  %402 = vmatpush.bf16.msra.mxu0 %v365
  %403 = vmatpush.bf16.msra.mxu0 %v361
  %404 = vmatmul.bf16.gmra.mxu0 %v394
  %v405 = vpop.f32.mrf.mxu0
  %v406 = vadd.f32 %v267, %v405
  %v407 = vpop.f32.mrf.mxu0
  %v408 = vadd.f32 %v269, %v407
  %409 = vdwg.mxu0
  %410 = vmatpush.bf16.msra.mxu0 0
  %411 = vmatpush.bf16.msra.mxu0 0
  %412 = vmatpush.bf16.msra.mxu0 0
  %413 = vmatpush.bf16.msra.mxu0 0
  %414 = vmatpush.bf16.msra.mxu0 %v374
  %415 = vmatpush.bf16.msra.mxu0 %v370
  %416 = vmatpush.bf16.msra.mxu0 %v366
  %417 = vmatpush.bf16.msra.mxu0 %v362
  %418 = vmatmul.bf16.gmra.mxu0 %v394
  %v419 = vpop.f32.mrf.mxu0
  %v420 = vadd.f32 %v281, %v419
  %v421 = vpop.f32.mrf.mxu0
  %v422 = vadd.f32 %v283, %v421
  %423 = vdwg.mxu0
  %424 = vmatpush.bf16.msra.mxu0 0
  %425 = vmatpush.bf16.msra.mxu0 0
  %426 = vmatpush.bf16.msra.mxu0 0
  %427 = vmatpush.bf16.msra.mxu0 0
  %428 = vmatpush.bf16.msra.mxu0 %v375
  %429 = vmatpush.bf16.msra.mxu0 %v371
  %430 = vmatpush.bf16.msra.mxu0 %v367
  %431 = vmatpush.bf16.msra.mxu0 %v363
  %432 = vmatmul.bf16.gmra.mxu0 %v394
  %v433 = vpop.f32.mrf.mxu0
  %v434 = vadd.f32 %v295, %v433
  %v435 = vpop.f32.mrf.mxu0
  %v436 = vadd.f32 %v297, %v435
  %437 = vdwg.mxu0
  %438 = vmatpush.bf16.msra.mxu0 0
  %439 = vmatpush.bf16.msra.mxu0 0
  %440 = vmatpush.bf16.msra.mxu0 0
  %441 = vmatpush.bf16.msra.mxu0 0
  %442 = vmatpush.bf16.msra.mxu0 %v376
  %443 = vmatpush.bf16.msra.mxu0 %v372
  %444 = vmatpush.bf16.msra.mxu0 %v368
  %445 = vmatpush.bf16.msra.mxu0 %v364
  %446 = vmatmul.bf16.gmra.mxu0 %v394
  %v447 = vpop.f32.mrf.mxu0
  %v448 = vadd.f32 %v309, %v447
  %v449 = vpop.f32.mrf.mxu0
  %v450 = vadd.f32 %v311, %v449
  %451 = vdwg.mxu0
  %v452 = vld [vmem:[%s2 + $0x100] sm:$0xff]
  %v453 = vld [vmem:[%s2 + $0x108] sm:$0xff]
  %v454 = vld [vmem:[%s2 + $0x110] sm:$0xff]
  %v455 = vld [vmem:[%s2 + $0x118] sm:$0xff]
  %v456 = vld [vmem:[%s2 + $0x120] sm:$0xff]
  %v457 = vld [vmem:[%s2 + $0x128] sm:$0xff]
  %v458 = vld [vmem:[%s2 + $0x130] sm:$0xff]
  %v459 = vld [vmem:[%s2 + $0x138] sm:$0xff]
  %v460 = vld [vmem:[%s2 + $0x140] sm:$0xff]
  %v461 = vld [vmem:[%s2 + $0x148] sm:$0xff]
  %v462 = vld [vmem:[%s2 + $0x150] sm:$0xff]
  %v463 = vld [vmem:[%s2 + $0x158] sm:$0xff]
  %v464 = vld [vmem:[%s2 + $0x160] sm:$0xff]
  %v465 = vld [vmem:[%s2 + $0x168] sm:$0xff]
  %v466 = vld [vmem:[%s2 + $0x170] sm:$0xff]
  %v467 = vld [vmem:[%s2 + $0x178] sm:$0xff]
  %v484 = vunpack.c.l.b16 %v452
  %v485 = vunpack.c.h.b16 %v452
  %v486 = vunpack.c.l.b16 %v453
  %v487 = vunpack.c.h.b16 %v453
  %v488 = vunpack.c.l.b16 %v454
  %v489 = vunpack.c.h.b16 %v454
  %v490 = vunpack.c.l.b16 %v455
  %v491 = vunpack.c.h.b16 %v455
  %v492 = vunpack.c.l.b16 %v456
  %v493 = vunpack.c.h.b16 %v456
  %v494 = vunpack.c.l.b16 %v457
  %v495 = vunpack.c.h.b16 %v457
  %v496 = vunpack.c.l.b16 %v458
  %v497 = vunpack.c.h.b16 %v458
  %v498 = vunpack.c.l.b16 %v459
  %v499 = vunpack.c.h.b16 %v459
  %v500 = vunpack.c.l.b16 %v460
  %v501 = vunpack.c.h.b16 %v460
  %v502 = vunpack.c.l.b16 %v461
  %v503 = vunpack.c.h.b16 %v461
  %v504 = vunpack.c.l.b16 %v462
  %v505 = vunpack.c.h.b16 %v462
  %v506 = vunpack.c.l.b16 %v463
  %v507 = vunpack.c.h.b16 %v463
  %v508 = vunpack.c.l.b16 %v464
  %v509 = vunpack.c.h.b16 %v464
  %v510 = vunpack.c.l.b16 %v465
  %v511 = vunpack.c.h.b16 %v465
  %v512 = vunpack.c.l.b16 %v466
  %v513 = vunpack.c.h.b16 %v466
  %v514 = vunpack.c.l.b16 %v467
  %v515 = vunpack.c.h.b16 %v467
  %v516 = vpack.c.b16 %v488, %v484
  %v517 = vpack.c.b16 %v489, %v485
  %v518 = vpack.c.b16 %v490, %v486
  %v519 = vpack.c.b16 %v491, %v487
  %v520 = vpack.c.b16 %v496, %v492
  %v521 = vpack.c.b16 %v497, %v493
  %v522 = vpack.c.b16 %v498, %v494
  %v523 = vpack.c.b16 %v499, %v495
  %v524 = vpack.c.b16 %v504, %v500
  %v525 = vpack.c.b16 %v505, %v501
  %v526 = vpack.c.b16 %v506, %v502
  %v527 = vpack.c.b16 %v507, %v503
  %v528 = vpack.c.b16 %v512, %v508
  %v529 = vpack.c.b16 %v513, %v509
  %v530 = vpack.c.b16 %v514, %v510
  %v531 = vpack.c.b16 %v515, %v511
  %v549 = vsel %vm253, %v140, 0
  %551 = vmatpush.bf16.msra.mxu0 0
  %552 = vmatpush.bf16.msra.mxu0 0
  %553 = vmatpush.bf16.msra.mxu0 0
  %554 = vmatpush.bf16.msra.mxu0 0
  %555 = vmatpush.bf16.msra.mxu0 %v528
  %556 = vmatpush.bf16.msra.mxu0 %v524
  %557 = vmatpush.bf16.msra.mxu0 %v520
  %558 = vmatpush.bf16.msra.mxu0 %v516
  %559 = vmatmul.bf16.gmra.mxu0 %v549
  %v560 = vpop.f32.mrf.mxu0
  %v561 = vadd.f32 0.0, %v560
  %v562 = vpop.f32.mrf.mxu0
  %v563 = vadd.f32 0.0, %v562
  %564 = vdwg.mxu0
  %565 = vmatpush.bf16.msra.mxu0 0
  %566 = vmatpush.bf16.msra.mxu0 0
  %567 = vmatpush.bf16.msra.mxu0 0
  %568 = vmatpush.bf16.msra.mxu0 0
  %569 = vmatpush.bf16.msra.mxu0 %v529
  %570 = vmatpush.bf16.msra.mxu0 %v525
  %571 = vmatpush.bf16.msra.mxu0 %v521
  %572 = vmatpush.bf16.msra.mxu0 %v517
  %573 = vmatmul.bf16.gmra.mxu0 %v549
  %v574 = vpop.f32.mrf.mxu0
  %v575 = vadd.f32 0.0, %v574
  %v576 = vpop.f32.mrf.mxu0
  %v577 = vadd.f32 0.0, %v576
  %578 = vdwg.mxu0
  %579 = vmatpush.bf16.msra.mxu0 0
  %580 = vmatpush.bf16.msra.mxu0 0
  %581 = vmatpush.bf16.msra.mxu0 0
  %582 = vmatpush.bf16.msra.mxu0 0
  %583 = vmatpush.bf16.msra.mxu0 %v530
  %584 = vmatpush.bf16.msra.mxu0 %v526
  %585 = vmatpush.bf16.msra.mxu0 %v522
  %586 = vmatpush.bf16.msra.mxu0 %v518
  %587 = vmatmul.bf16.gmra.mxu0 %v549
  %v588 = vpop.f32.mrf.mxu0
  %v589 = vadd.f32 0.0, %v588
  %v590 = vpop.f32.mrf.mxu0
  %v591 = vadd.f32 0.0, %v590
  %592 = vdwg.mxu0
  %593 = vmatpush.bf16.msra.mxu0 0
  %594 = vmatpush.bf16.msra.mxu0 0
  %595 = vmatpush.bf16.msra.mxu0 0
  %596 = vmatpush.bf16.msra.mxu0 0
  %597 = vmatpush.bf16.msra.mxu0 %v531
  %598 = vmatpush.bf16.msra.mxu0 %v527
  %599 = vmatpush.bf16.msra.mxu0 %v523
  %600 = vmatpush.bf16.msra.mxu0 %v519
  %601 = vmatmul.bf16.gmra.mxu0 %v549
  %v602 = vpop.f32.mrf.mxu0
  %v603 = vadd.f32 0.0, %v602
  %v604 = vpop.f32.mrf.mxu0
  %v605 = vadd.f32 0.0, %v604
  %606 = vdwg.mxu0
  %v607 = vadd.f32 %v406, %v561
  %v608 = vadd.f32 %v420, %v575
  %v609 = vadd.f32 %v434, %v589
  %v610 = vadd.f32 %v448, %v603
  %v611 = vadd.f32 %v408, %v563
  %v612 = vadd.f32 %v422, %v577
  %v613 = vadd.f32 %v436, %v591
  %v614 = vadd.f32 %v450, %v605
  %v615 = vld [vmem:[%s3] sm:$0xf]
  %v617 = vperm.slane %v615, 0
  %v618 = vperm.slane %v615, 1
  %v619 = vperm.slane %v615, 2
  %v620 = vperm.slane %v615, 3
  %v625 = vadd.f32 %v607, %v617
  %v626 = vadd.f32 %v608, %v618
  %v627 = vadd.f32 %v609, %v619
  %v628 = vadd.f32 %v610, %v620
  %v629 = vadd.f32 %v611, %v617
  %v630 = vadd.f32 %v612, %v618
  %v631 = vadd.f32 %v613, %v619
  %v632 = vadd.f32 %v614, %v620
  %v633 = vmax.f32 %v625, 0.0
  %v634 = vmax.f32 %v626, 0.0
  %v635 = vmax.f32 %v627, 0.0
  %v636 = vmax.f32 %v628, 0.0
  %v637 = vmax.f32 %v629, 0.0
  %v638 = vmax.f32 %v630, 0.0
  %v639 = vmax.f32 %v631, 0.0
  %v640 = vmax.f32 %v632, 0.0
  %v641 = vpack.c.bf16 %v637, %v633
  %v642 = vpack.c.bf16 %v638, %v634
  %v643 = vpack.c.bf16 %v639, %v635
  %v644 = vpack.c.bf16 %v640, %v636
  %v645 = vld [vmem:[%s4] sm:$0xf]
  %vm646 = vcmask 130048
  %v648 = vsel %vm646, %v645, 0
  %650 = vmatpush.bf16.msra.mxu0 0
  %651 = vmatpush.bf16.msra.mxu0 0
  %652 = vmatpush.bf16.msra.mxu0 0
  %653 = vmatpush.bf16.msra.mxu0 0
  %654 = vmatpush.bf16.msra.mxu0 0
  %655 = vmatpush.bf16.msra.mxu0 0
  %656 = vmatpush.bf16.msra.mxu0 0
  %657 = vmatpush.bf16.msra.mxu0 %v641
  %658 = vmatmul.bf16.gmra.mxu0 %v648
  %v659 = vpop.f32.mrf.mxu0
  %v660 = vadd.f32 0.0, %v659
  %v661 = vpop.f32.mrf.mxu0
  %662 = vdwg.mxu0
  %663 = vmatpush.bf16.msra.mxu0 0
  %664 = vmatpush.bf16.msra.mxu0 0
  %665 = vmatpush.bf16.msra.mxu0 0
  %666 = vmatpush.bf16.msra.mxu0 0
  %667 = vmatpush.bf16.msra.mxu0 0
  %668 = vmatpush.bf16.msra.mxu0 0
  %669 = vmatpush.bf16.msra.mxu0 0
  %670 = vmatpush.bf16.msra.mxu0 %v642
  %671 = vmatmul.bf16.gmra.mxu0 %v648
  %v672 = vpop.f32.mrf.mxu0
  %v673 = vadd.f32 0.0, %v672
  %v674 = vpop.f32.mrf.mxu0
  %675 = vdwg.mxu0
  %676 = vmatpush.bf16.msra.mxu0 0
  %677 = vmatpush.bf16.msra.mxu0 0
  %678 = vmatpush.bf16.msra.mxu0 0
  %679 = vmatpush.bf16.msra.mxu0 0
  %680 = vmatpush.bf16.msra.mxu0 0
  %681 = vmatpush.bf16.msra.mxu0 0
  %682 = vmatpush.bf16.msra.mxu0 0
  %683 = vmatpush.bf16.msra.mxu0 %v643
  %684 = vmatmul.bf16.gmra.mxu0 %v648
  %v685 = vpop.f32.mrf.mxu0
  %v686 = vadd.f32 0.0, %v685
  %v687 = vpop.f32.mrf.mxu0
  %688 = vdwg.mxu0
  %689 = vmatpush.bf16.msra.mxu0 0
  %690 = vmatpush.bf16.msra.mxu0 0
  %691 = vmatpush.bf16.msra.mxu0 0
  %692 = vmatpush.bf16.msra.mxu0 0
  %693 = vmatpush.bf16.msra.mxu0 0
  %694 = vmatpush.bf16.msra.mxu0 0
  %695 = vmatpush.bf16.msra.mxu0 0
  %696 = vmatpush.bf16.msra.mxu0 %v644
  %697 = vmatmul.bf16.gmra.mxu0 %v648
  %v698 = vpop.f32.mrf.mxu0
  %v699 = vadd.f32 0.0, %v698
  %v700 = vpop.f32.mrf.mxu0
  %701 = vdwg.mxu0
  %v702 = vpack.c.bf16 %v673, %v660
  %v703 = vpack.c.bf16 %v699, %v686
  %s704 = scalar_lea.vmem %s4, 4
  %v705 = vld [vmem:[%s704] sm:$0xf]
  %v707 = vsel %vm646, %v705, 0
  %709 = vmatpush.bf16.msra.mxu0 0
  %710 = vmatpush.bf16.msra.mxu0 0
  %711 = vmatpush.bf16.msra.mxu0 0
  %712 = vmatpush.bf16.msra.mxu0 0
  %713 = vmatpush.bf16.msra.mxu0 0
  %714 = vmatpush.bf16.msra.mxu0 0
  %715 = vmatpush.bf16.msra.mxu0 0
  %716 = vmatpush.bf16.msra.mxu0 %v641
  %717 = vmatmul.bf16.gmra.mxu0 %v707
  %v718 = vpop.f32.mrf.mxu0
  %v719 = vadd.f32 0.0, %v718
  %v720 = vpop.f32.mrf.mxu0
  %721 = vdwg.mxu0
  %722 = vmatpush.bf16.msra.mxu0 0
  %723 = vmatpush.bf16.msra.mxu0 0
  %724 = vmatpush.bf16.msra.mxu0 0
  %725 = vmatpush.bf16.msra.mxu0 0
  %726 = vmatpush.bf16.msra.mxu0 0
  %727 = vmatpush.bf16.msra.mxu0 0
  %728 = vmatpush.bf16.msra.mxu0 0
  %729 = vmatpush.bf16.msra.mxu0 %v642
  %730 = vmatmul.bf16.gmra.mxu0 %v707
  %v731 = vpop.f32.mrf.mxu0
  %v732 = vadd.f32 0.0, %v731
  %v733 = vpop.f32.mrf.mxu0
  %734 = vdwg.mxu0
  %735 = vmatpush.bf16.msra.mxu0 0
  %736 = vmatpush.bf16.msra.mxu0 0
  %737 = vmatpush.bf16.msra.mxu0 0
  %738 = vmatpush.bf16.msra.mxu0 0
  %739 = vmatpush.bf16.msra.mxu0 0
  %740 = vmatpush.bf16.msra.mxu0 0
  %741 = vmatpush.bf16.msra.mxu0 0
  %742 = vmatpush.bf16.msra.mxu0 %v643
  %743 = vmatmul.bf16.gmra.mxu0 %v707
  %v744 = vpop.f32.mrf.mxu0
  %v745 = vadd.f32 0.0, %v744
  %v746 = vpop.f32.mrf.mxu0
  %747 = vdwg.mxu0
  %748 = vmatpush.bf16.msra.mxu0 0
  %749 = vmatpush.bf16.msra.mxu0 0
  %750 = vmatpush.bf16.msra.mxu0 0
  %751 = vmatpush.bf16.msra.mxu0 0
  %752 = vmatpush.bf16.msra.mxu0 0
  %753 = vmatpush.bf16.msra.mxu0 0
  %754 = vmatpush.bf16.msra.mxu0 0
  %755 = vmatpush.bf16.msra.mxu0 %v644
  %756 = vmatmul.bf16.gmra.mxu0 %v707
  %v757 = vpop.f32.mrf.mxu0
  %v758 = vadd.f32 0.0, %v757
  %v759 = vpop.f32.mrf.mxu0
  %760 = vdwg.mxu0
  %v761 = vpack.c.bf16 %v732, %v719
  %v762 = vpack.c.bf16 %v758, %v745
  %s763 = scalar_lea.vmem %s4, 8
  %v764 = vld [vmem:[%s763] sm:$0xf]
  %v766 = vsel %vm646, %v764, 0
  %768 = vmatpush.bf16.msra.mxu0 0
  %769 = vmatpush.bf16.msra.mxu0 0
  %770 = vmatpush.bf16.msra.mxu0 0
  %771 = vmatpush.bf16.msra.mxu0 0
  %772 = vmatpush.bf16.msra.mxu0 0
  %773 = vmatpush.bf16.msra.mxu0 0
  %774 = vmatpush.bf16.msra.mxu0 0
  %775 = vmatpush.bf16.msra.mxu0 %v641
  %776 = vmatmul.bf16.gmra.mxu0 %v766
  %v777 = vpop.f32.mrf.mxu0
  %v778 = vadd.f32 0.0, %v777
  %v779 = vpop.f32.mrf.mxu0
  %780 = vdwg.mxu0
  %781 = vmatpush.bf16.msra.mxu0 0
  %782 = vmatpush.bf16.msra.mxu0 0
  %783 = vmatpush.bf16.msra.mxu0 0
  %784 = vmatpush.bf16.msra.mxu0 0
  %785 = vmatpush.bf16.msra.mxu0 0
  %786 = vmatpush.bf16.msra.mxu0 0
  %787 = vmatpush.bf16.msra.mxu0 0
  %788 = vmatpush.bf16.msra.mxu0 %v642
  %789 = vmatmul.bf16.gmra.mxu0 %v766
  %v790 = vpop.f32.mrf.mxu0
  %v791 = vadd.f32 0.0, %v790
  %v792 = vpop.f32.mrf.mxu0
  %793 = vdwg.mxu0
  %794 = vmatpush.bf16.msra.mxu0 0
  %795 = vmatpush.bf16.msra.mxu0 0
  %796 = vmatpush.bf16.msra.mxu0 0
  %797 = vmatpush.bf16.msra.mxu0 0
  %798 = vmatpush.bf16.msra.mxu0 0
  %799 = vmatpush.bf16.msra.mxu0 0
  %800 = vmatpush.bf16.msra.mxu0 0
  %801 = vmatpush.bf16.msra.mxu0 %v643
  %802 = vmatmul.bf16.gmra.mxu0 %v766
  %v803 = vpop.f32.mrf.mxu0
  %v804 = vadd.f32 0.0, %v803
  %v805 = vpop.f32.mrf.mxu0
  %806 = vdwg.mxu0
  %807 = vmatpush.bf16.msra.mxu0 0
  %808 = vmatpush.bf16.msra.mxu0 0
  %809 = vmatpush.bf16.msra.mxu0 0
  %810 = vmatpush.bf16.msra.mxu0 0
  %811 = vmatpush.bf16.msra.mxu0 0
  %812 = vmatpush.bf16.msra.mxu0 0
  %813 = vmatpush.bf16.msra.mxu0 0
  %814 = vmatpush.bf16.msra.mxu0 %v644
  %815 = vmatmul.bf16.gmra.mxu0 %v766
  %v816 = vpop.f32.mrf.mxu0
  %v817 = vadd.f32 0.0, %v816
  %v818 = vpop.f32.mrf.mxu0
  %819 = vdwg.mxu0
  %v820 = vpack.c.bf16 %v791, %v778
  %v821 = vpack.c.bf16 %v817, %v804
  %v824 = vunpack.c.l.b16 %v702
  %v825 = vunpack.c.h.b16 %v702
  %v826 = vunpack.c.l.b16 %v703
  %v827 = vunpack.c.h.b16 %v703
  %v828 = vpack.c.b16 %v824, %v824
  %v829 = vpack.c.b16 %v825, %v825
  %v830 = vpack.c.b16 %v826, %v826
  %v831 = vpack.c.b16 %v827, %v827
  %v838 = vunpack.c.l.b16 %v761
  %v839 = vunpack.c.h.b16 %v761
  %v840 = vunpack.c.l.b16 %v762
  %v841 = vunpack.c.h.b16 %v762
  %v842 = vpack.c.b16 %v838, %v838
  %v843 = vpack.c.b16 %v839, %v839
  %v844 = vpack.c.b16 %v840, %v840
  %v845 = vpack.c.b16 %v841, %v841
  %v852 = vunpack.c.l.b16 %v820
  %v853 = vunpack.c.h.b16 %v820
  %v854 = vunpack.c.l.b16 %v821
  %v855 = vunpack.c.h.b16 %v821
  %v856 = vpack.c.b16 %v852, %v852
  %v857 = vpack.c.b16 %v853, %v853
  %v858 = vpack.c.b16 %v854, %v854
  %v859 = vpack.c.b16 %v855, %v855
  %v864 = vld [vmem:[%s5] sm:$0xf]
  %v865 = vld [vmem:[%s5 + $0x4] sm:$0xf]
  %v866 = vld [vmem:[%s5 + $0x8] sm:$0xf]
  %v867 = vld [vmem:[%s5 + $0xc] sm:$0xf]
  %v868 = vld [vmem:[%s5 + $0x10] sm:$0xf]
  %v869 = vld [vmem:[%s5 + $0x14] sm:$0xf]
  %v870 = vld [vmem:[%s5 + $0x18] sm:$0xf]
  %v871 = vld [vmem:[%s5 + $0x1c] sm:$0xf]
  %v872 = vld [vmem:[%s5 + $0x20] sm:$0xf]
  %v873 = vld [vmem:[%s5 + $0x24] sm:$0xf]
  %v874 = vld [vmem:[%s5 + $0x28] sm:$0xf]
  %v875 = vld [vmem:[%s5 + $0x2c] sm:$0xf]
  %v876 = vld [vmem:[%s5 + $0x30] sm:$0xf]
  %v877 = vld [vmem:[%s5 + $0x34] sm:$0xf]
  %v878 = vld [vmem:[%s5 + $0x38] sm:$0xf]
  %v879 = vld [vmem:[%s5 + $0x3c] sm:$0xf]
  %v880 = vld [vmem:[%s5 + $0x40] sm:$0xf]
  %v881 = vld [vmem:[%s5 + $0x44] sm:$0xf]
  %v882 = vld [vmem:[%s5 + $0x48] sm:$0xf]
  %v883 = vld [vmem:[%s5 + $0x4c] sm:$0xf]
  %v884 = vld [vmem:[%s5 + $0x50] sm:$0xf]
  %v885 = vld [vmem:[%s5 + $0x54] sm:$0xf]
  %v886 = vld [vmem:[%s5 + $0x58] sm:$0xf]
  %v887 = vld [vmem:[%s5 + $0x5c] sm:$0xf]
  %v888 = vld [vmem:[%s5 + $0x60] sm:$0xf]
  %v889 = vld [vmem:[%s5 + $0x64] sm:$0xf]
  %v890 = vld [vmem:[%s5 + $0x68] sm:$0xf]
  %v891 = vld [vmem:[%s5 + $0x6c] sm:$0xf]
  %v892 = vld [vmem:[%s5 + $0x70] sm:$0xf]
  %v893 = vld [vmem:[%s5 + $0x74] sm:$0xf]
  %v894 = vld [vmem:[%s5 + $0x78] sm:$0xf]
  %v895 = vld [vmem:[%s5 + $0x7c] sm:$0xf]
  %v896 = vld [vmem:[%s5 + $0x80] sm:$0xf]
  %v897 = vld [vmem:[%s5 + $0x84] sm:$0xf]
  %v898 = vld [vmem:[%s5 + $0x88] sm:$0xf]
  %v899 = vld [vmem:[%s5 + $0x8c] sm:$0xf]
  %v900 = vld [vmem:[%s5 + $0x90] sm:$0xf]
  %v901 = vld [vmem:[%s5 + $0x94] sm:$0xf]
  %v902 = vld [vmem:[%s5 + $0x98] sm:$0xf]
  %v903 = vld [vmem:[%s5 + $0x9c] sm:$0xf]
  %v904 = vld [vmem:[%s5 + $0xa0] sm:$0xf]
  %v905 = vld [vmem:[%s5 + $0xa4] sm:$0xf]
  %v906 = vld [vmem:[%s5 + $0xa8] sm:$0xf]
  %v907 = vld [vmem:[%s5 + $0xac] sm:$0xf]
  %v908 = vld [vmem:[%s5 + $0xb0] sm:$0xf]
  %v909 = vld [vmem:[%s5 + $0xb4] sm:$0xf]
  %v910 = vld [vmem:[%s5 + $0xb8] sm:$0xf]
  %v911 = vld [vmem:[%s5 + $0xbc] sm:$0xf]
  %v912 = vld [vmem:[%s5 + $0xc0] sm:$0xf]
  %v913 = vld [vmem:[%s5 + $0xc4] sm:$0xf]
  %v914 = vld [vmem:[%s5 + $0xc8] sm:$0xf]
  %v915 = vld [vmem:[%s5 + $0xcc] sm:$0xf]
  %v916 = vld [vmem:[%s5 + $0xd0] sm:$0xf]
  %v917 = vld [vmem:[%s5 + $0xd4] sm:$0xf]
  %v918 = vld [vmem:[%s5 + $0xd8] sm:$0xf]
  %v919 = vld [vmem:[%s5 + $0xdc] sm:$0xf]
  %v920 = vld [vmem:[%s5 + $0xe0] sm:$0xf]
  %v921 = vld [vmem:[%s5 + $0xe4] sm:$0xf]
  %v922 = vld [vmem:[%s5 + $0xe8] sm:$0xf]
  %v923 = vld [vmem:[%s5 + $0xec] sm:$0xf]
  %v924 = vld [vmem:[%s5 + $0xf0] sm:$0xf]
  %v925 = vld [vmem:[%s5 + $0xf4] sm:$0xf]
  %v926 = vld [vmem:[%s5 + $0xf8] sm:$0xf]
  %v927 = vld [vmem:[%s5 + $0xfc] sm:$0xf]
  %v928 = vld [vmem:[%s5 + $0x100] sm:$0xf]
  %v929 = vld [vmem:[%s5 + $0x104] sm:$0xf]
  %v930 = vld [vmem:[%s5 + $0x108] sm:$0xf]
  %v931 = vld [vmem:[%s5 + $0x10c] sm:$0xf]
  %v932 = vld [vmem:[%s5 + $0x110] sm:$0xf]
  %v933 = vld [vmem:[%s5 + $0x114] sm:$0xf]
  %v934 = vld [vmem:[%s5 + $0x118] sm:$0xf]
  %v935 = vld [vmem:[%s5 + $0x11c] sm:$0xf]
  %v936 = vld [vmem:[%s5 + $0x120] sm:$0xf]
  %v937 = vld [vmem:[%s5 + $0x124] sm:$0xf]
  %v938 = vld [vmem:[%s5 + $0x128] sm:$0xf]
  %v939 = vld [vmem:[%s5 + $0x12c] sm:$0xf]
  %v940 = vld [vmem:[%s5 + $0x130] sm:$0xf]
  %v941 = vld [vmem:[%s5 + $0x134] sm:$0xf]
  %v942 = vld [vmem:[%s5 + $0x138] sm:$0xf]
  %v943 = vld [vmem:[%s5 + $0x13c] sm:$0xf]
  %v944 = vld [vmem:[%s5 + $0x140] sm:$0xf]
  %v945 = vld [vmem:[%s5 + $0x144] sm:$0xf]
  %v946 = vld [vmem:[%s5 + $0x148] sm:$0xf]
  %v947 = vld [vmem:[%s5 + $0x14c] sm:$0xf]
  %v948 = vld [vmem:[%s5 + $0x150] sm:$0xf]
  %v949 = vld [vmem:[%s5 + $0x154] sm:$0xf]
  %v950 = vld [vmem:[%s5 + $0x158] sm:$0xf]
  %v951 = vld [vmem:[%s5 + $0x15c] sm:$0xf]
  %v952 = vld [vmem:[%s5 + $0x160] sm:$0xf]
  %v953 = vld [vmem:[%s5 + $0x164] sm:$0xf]
  %v954 = vld [vmem:[%s5 + $0x168] sm:$0xf]
  %v955 = vld [vmem:[%s5 + $0x16c] sm:$0xf]
  %v956 = vld [vmem:[%s5 + $0x170] sm:$0xf]
  %v957 = vld [vmem:[%s5 + $0x174] sm:$0xf]
  %v958 = vld [vmem:[%s5 + $0x178] sm:$0xf]
  %v959 = vld [vmem:[%s5 + $0x17c] sm:$0xf]
  %v960 = vld [vmem:[%s5 + $0x180] sm:$0xf]
  %v961 = vld [vmem:[%s5 + $0x184] sm:$0xf]
  %v962 = vld [vmem:[%s5 + $0x188] sm:$0xf]
  %v963 = vld [vmem:[%s5 + $0x18c] sm:$0xf]
  %v964 = vld [vmem:[%s5 + $0x190] sm:$0xf]
  %v965 = vld [vmem:[%s5 + $0x194] sm:$0xf]
  %v966 = vld [vmem:[%s5 + $0x198] sm:$0xf]
  %v967 = vld [vmem:[%s5 + $0x19c] sm:$0xf]
  %v968 = vld [vmem:[%s5 + $0x1a0] sm:$0xf]
  %v969 = vld [vmem:[%s5 + $0x1a4] sm:$0xf]
  %v970 = vld [vmem:[%s5 + $0x1a8] sm:$0xf]
  %v971 = vld [vmem:[%s5 + $0x1ac] sm:$0xf]
  %v972 = vld [vmem:[%s5 + $0x1b0] sm:$0xf]
  %v973 = vld [vmem:[%s5 + $0x1b4] sm:$0xf]
  %v974 = vld [vmem:[%s5 + $0x1b8] sm:$0xf]
  %v975 = vld [vmem:[%s5 + $0x1bc] sm:$0xf]
  %v976 = vld [vmem:[%s5 + $0x1c0] sm:$0xf]
  %v977 = vld [vmem:[%s5 + $0x1c4] sm:$0xf]
  %v978 = vld [vmem:[%s5 + $0x1c8] sm:$0xf]
  %v979 = vld [vmem:[%s5 + $0x1cc] sm:$0xf]
  %v980 = vld [vmem:[%s5 + $0x1d0] sm:$0xf]
  %v981 = vld [vmem:[%s5 + $0x1d4] sm:$0xf]
  %v982 = vld [vmem:[%s5 + $0x1d8] sm:$0xf]
  %v983 = vld [vmem:[%s5 + $0x1dc] sm:$0xf]
  %v984 = vld [vmem:[%s5 + $0x1e0] sm:$0xf]
  %v985 = vld [vmem:[%s5 + $0x1e4] sm:$0xf]
  %v986 = vld [vmem:[%s5 + $0x1e8] sm:$0xf]
  %v987 = vld [vmem:[%s5 + $0x1ec] sm:$0xf]
  %v988 = vld [vmem:[%s5 + $0x1f0] sm:$0xf]
  %v989 = vld [vmem:[%s5 + $0x1f4] sm:$0xf]
  %v990 = vld [vmem:[%s5 + $0x1f8] sm:$0xf]
  %v991 = vld [vmem:[%s5 + $0x1fc] sm:$0xf]
  %v992 = vld [vmem:[%s5 + $0x200] sm:$0xf]
  %v993 = vld [vmem:[%s5 + $0x204] sm:$0xf]
  %v994 = vld [vmem:[%s5 + $0x208] sm:$0xf]
  %v995 = vld [vmem:[%s5 + $0x20c] sm:$0xf]
  %v996 = vld [vmem:[%s5 + $0x210] sm:$0xf]
  %v997 = vld [vmem:[%s5 + $0x214] sm:$0xf]
  %v998 = vld [vmem:[%s5 + $0x218] sm:$0xf]
  %v999 = vld [vmem:[%s5 + $0x21c] sm:$0xf]
  %v1000 = vld [vmem:[%s5 + $0x220] sm:$0xf]
  %v1001 = vld [vmem:[%s5 + $0x224] sm:$0xf]
  %v1002 = vld [vmem:[%s5 + $0x228] sm:$0xf]
  %v1003 = vld [vmem:[%s5 + $0x22c] sm:$0xf]
  %v1004 = vld [vmem:[%s5 + $0x230] sm:$0xf]
  %v1005 = vld [vmem:[%s5 + $0x234] sm:$0xf]
  %v1006 = vld [vmem:[%s5 + $0x238] sm:$0xf]
  %v1007 = vld [vmem:[%s5 + $0x23c] sm:$0xf]
  %v1008 = vld [vmem:[%s5 + $0x240] sm:$0xf]
  %v1009 = vld [vmem:[%s5 + $0x244] sm:$0xf]
  %v1010 = vld [vmem:[%s5 + $0x248] sm:$0xf]
  %v1011 = vld [vmem:[%s5 + $0x24c] sm:$0xf]
  %v1012 = vld [vmem:[%s5 + $0x250] sm:$0xf]
  %v1013 = vld [vmem:[%s5 + $0x254] sm:$0xf]
  %v1014 = vld [vmem:[%s5 + $0x258] sm:$0xf]
  %v1015 = vld [vmem:[%s5 + $0x25c] sm:$0xf]
  %v1016 = vld [vmem:[%s5 + $0x260] sm:$0xf]
  %v1017 = vld [vmem:[%s5 + $0x264] sm:$0xf]
  %v1018 = vld [vmem:[%s5 + $0x268] sm:$0xf]
  %v1019 = vld [vmem:[%s5 + $0x26c] sm:$0xf]
  %v1020 = vld [vmem:[%s5 + $0x270] sm:$0xf]
  %v1021 = vld [vmem:[%s5 + $0x274] sm:$0xf]
  %v1022 = vld [vmem:[%s5 + $0x278] sm:$0xf]
  %v1023 = vld [vmem:[%s5 + $0x27c] sm:$0xf]
  %v1024 = vld [vmem:[%s5 + $0x280] sm:$0xf]
  %v1025 = vld [vmem:[%s5 + $0x284] sm:$0xf]
  %v1026 = vld [vmem:[%s5 + $0x288] sm:$0xf]
  %v1027 = vld [vmem:[%s5 + $0x28c] sm:$0xf]
  %v1028 = vld [vmem:[%s5 + $0x290] sm:$0xf]
  %v1029 = vld [vmem:[%s5 + $0x294] sm:$0xf]
  %v1030 = vld [vmem:[%s5 + $0x298] sm:$0xf]
  %v1031 = vld [vmem:[%s5 + $0x29c] sm:$0xf]
  %v1032 = vld [vmem:[%s5 + $0x2a0] sm:$0xf]
  %v1033 = vld [vmem:[%s5 + $0x2a4] sm:$0xf]
  %v1034 = vld [vmem:[%s5 + $0x2a8] sm:$0xf]
  %v1035 = vld [vmem:[%s5 + $0x2ac] sm:$0xf]
  %v1036 = vld [vmem:[%s5 + $0x2b0] sm:$0xf]
  %v1037 = vld [vmem:[%s5 + $0x2b4] sm:$0xf]
  %v1038 = vld [vmem:[%s5 + $0x2b8] sm:$0xf]
  %v1039 = vld [vmem:[%s5 + $0x2bc] sm:$0xf]
  %v1040 = vld [vmem:[%s5 + $0x2c0] sm:$0xf]
  %v1041 = vld [vmem:[%s5 + $0x2c4] sm:$0xf]
  %v1042 = vld [vmem:[%s5 + $0x2c8] sm:$0xf]
  %v1043 = vld [vmem:[%s5 + $0x2cc] sm:$0xf]
  %v1044 = vld [vmem:[%s5 + $0x2d0] sm:$0xf]
  %v1045 = vld [vmem:[%s5 + $0x2d4] sm:$0xf]
  %v1046 = vld [vmem:[%s5 + $0x2d8] sm:$0xf]
  %v1047 = vld [vmem:[%s5 + $0x2dc] sm:$0xf]
  %v1048 = vld [vmem:[%s5 + $0x2e0] sm:$0xf]
  %v1049 = vld [vmem:[%s5 + $0x2e4] sm:$0xf]
  %v1050 = vld [vmem:[%s5 + $0x2e8] sm:$0xf]
  %v1051 = vld [vmem:[%s5 + $0x2ec] sm:$0xf]
  %v1052 = vld [vmem:[%s5 + $0x2f0] sm:$0xf]
  %v1053 = vld [vmem:[%s5 + $0x2f4] sm:$0xf]
  %v1054 = vld [vmem:[%s5 + $0x2f8] sm:$0xf]
  %v1055 = vld [vmem:[%s5 + $0x2fc] sm:$0xf]
  %v1056 = vld [vmem:[%s6] sm:$0x1]
  %v1058 = vperm.slane %v1056, 0
  %v1252 = vunpack.c.l.b16 %v864
  %v1253 = vunpack.c.l.b16 %v865
  %v1254 = vunpack.c.l.b16 %v866
  %v1255 = vunpack.c.l.b16 %v867
  %v1256 = vunpack.c.l.b16 %v868
  %v1257 = vunpack.c.l.b16 %v869
  %v1258 = vunpack.c.l.b16 %v870
  %v1259 = vunpack.c.l.b16 %v871
  %v1260 = vunpack.c.l.b16 %v872
  %v1261 = vunpack.c.l.b16 %v873
  %v1262 = vunpack.c.l.b16 %v874
  %v1263 = vunpack.c.l.b16 %v875
  %v1264 = vunpack.c.l.b16 %v876
  %v1265 = vunpack.c.l.b16 %v877
  %v1266 = vunpack.c.l.b16 %v878
  %v1267 = vunpack.c.l.b16 %v879
  %v1268 = vunpack.c.l.b16 %v880
  %v1269 = vunpack.c.l.b16 %v881
  %v1270 = vunpack.c.l.b16 %v882
  %v1271 = vunpack.c.l.b16 %v883
  %v1272 = vunpack.c.l.b16 %v884
  %v1273 = vunpack.c.l.b16 %v885
  %v1274 = vunpack.c.l.b16 %v886
  %v1275 = vunpack.c.l.b16 %v887
  %v1276 = vunpack.c.l.b16 %v888
  %v1277 = vunpack.c.l.b16 %v889
  %v1278 = vunpack.c.l.b16 %v890
  %v1279 = vunpack.c.l.b16 %v891
  %v1280 = vunpack.c.l.b16 %v892
  %v1281 = vunpack.c.l.b16 %v893
  %v1282 = vunpack.c.l.b16 %v894
  %v1283 = vunpack.c.l.b16 %v895
  %v1284 = vunpack.c.l.b16 %v896
  %v1285 = vunpack.c.l.b16 %v897
  %v1286 = vunpack.c.l.b16 %v898
  %v1287 = vunpack.c.l.b16 %v899
  %v1288 = vunpack.c.l.b16 %v900
  %v1289 = vunpack.c.l.b16 %v901
  %v1290 = vunpack.c.l.b16 %v902
  %v1291 = vunpack.c.l.b16 %v903
  %v1292 = vunpack.c.l.b16 %v904
  %v1293 = vunpack.c.l.b16 %v905
  %v1294 = vunpack.c.l.b16 %v906
  %v1295 = vunpack.c.l.b16 %v907
  %v1296 = vunpack.c.l.b16 %v908
  %v1297 = vunpack.c.l.b16 %v909
  %v1298 = vunpack.c.l.b16 %v910
  %v1299 = vunpack.c.l.b16 %v911
  %v1300 = vunpack.c.l.b16 %v912
  %v1301 = vunpack.c.l.b16 %v913
  %v1302 = vunpack.c.l.b16 %v914
  %v1303 = vunpack.c.l.b16 %v915
  %v1304 = vunpack.c.l.b16 %v916
  %v1305 = vunpack.c.l.b16 %v917
  %v1306 = vunpack.c.l.b16 %v918
  %v1307 = vunpack.c.l.b16 %v919
  %v1308 = vunpack.c.l.b16 %v920
  %v1309 = vunpack.c.l.b16 %v921
  %v1310 = vunpack.c.l.b16 %v922
  %v1311 = vunpack.c.l.b16 %v923
  %v1312 = vunpack.c.l.b16 %v924
  %v1313 = vunpack.c.l.b16 %v925
  %v1314 = vunpack.c.l.b16 %v926
  %v1315 = vunpack.c.l.b16 %v927
  %v1316 = vunpack.c.l.b16 %v928
  %v1317 = vunpack.c.l.b16 %v929
  %v1318 = vunpack.c.l.b16 %v930
  %v1319 = vunpack.c.l.b16 %v931
  %v1320 = vunpack.c.l.b16 %v932
  %v1321 = vunpack.c.l.b16 %v933
  %v1322 = vunpack.c.l.b16 %v934
  %v1323 = vunpack.c.l.b16 %v935
  %v1324 = vunpack.c.l.b16 %v936
  %v1325 = vunpack.c.l.b16 %v937
  %v1326 = vunpack.c.l.b16 %v938
  %v1327 = vunpack.c.l.b16 %v939
  %v1328 = vunpack.c.l.b16 %v940
  %v1329 = vunpack.c.l.b16 %v941
  %v1330 = vunpack.c.l.b16 %v942
  %v1331 = vunpack.c.l.b16 %v943
  %v1332 = vunpack.c.l.b16 %v944
  %v1333 = vunpack.c.l.b16 %v945
  %v1334 = vunpack.c.l.b16 %v946
  %v1335 = vunpack.c.l.b16 %v947
  %v1336 = vunpack.c.l.b16 %v948
  %v1337 = vunpack.c.l.b16 %v949
  %v1338 = vunpack.c.l.b16 %v950
  %v1339 = vunpack.c.l.b16 %v951
  %v1340 = vunpack.c.l.b16 %v952
  %v1341 = vunpack.c.l.b16 %v953
  %v1342 = vunpack.c.l.b16 %v954
  %v1343 = vunpack.c.l.b16 %v955
  %v1344 = vunpack.c.l.b16 %v956
  %v1345 = vunpack.c.l.b16 %v957
  %v1346 = vunpack.c.l.b16 %v958
  %v1347 = vunpack.c.l.b16 %v959
  %v1348 = vunpack.c.l.b16 %v960
  %v1349 = vunpack.c.l.b16 %v961
  %v1350 = vunpack.c.l.b16 %v962
  %v1351 = vunpack.c.l.b16 %v963
  %v1352 = vunpack.c.l.b16 %v964
  %v1353 = vunpack.c.l.b16 %v965
  %v1354 = vunpack.c.l.b16 %v966
  %v1355 = vunpack.c.l.b16 %v967
  %v1356 = vunpack.c.l.b16 %v968
  %v1357 = vunpack.c.l.b16 %v969
  %v1358 = vunpack.c.l.b16 %v970
  %v1359 = vunpack.c.l.b16 %v971
  %v1360 = vunpack.c.l.b16 %v972
  %v1361 = vunpack.c.l.b16 %v973
  %v1362 = vunpack.c.l.b16 %v974
  %v1363 = vunpack.c.l.b16 %v975
  %v1364 = vunpack.c.l.b16 %v976
  %v1365 = vunpack.c.l.b16 %v977
  %v1366 = vunpack.c.l.b16 %v978
  %v1367 = vunpack.c.l.b16 %v979
  %v1368 = vunpack.c.l.b16 %v980
  %v1369 = vunpack.c.l.b16 %v981
  %v1370 = vunpack.c.l.b16 %v982
  %v1371 = vunpack.c.l.b16 %v983
  %v1372 = vunpack.c.l.b16 %v984
  %v1373 = vunpack.c.l.b16 %v985
  %v1374 = vunpack.c.l.b16 %v986
  %v1375 = vunpack.c.l.b16 %v987
  %v1376 = vunpack.c.l.b16 %v988
  %v1377 = vunpack.c.l.b16 %v989
  %v1378 = vunpack.c.l.b16 %v990
  %v1379 = vunpack.c.l.b16 %v991
  %v1380 = vunpack.c.l.b16 %v992
  %v1381 = vunpack.c.l.b16 %v993
  %v1382 = vunpack.c.l.b16 %v994
  %v1383 = vunpack.c.l.b16 %v995
  %v1384 = vunpack.c.l.b16 %v996
  %v1385 = vunpack.c.l.b16 %v997
  %v1386 = vunpack.c.l.b16 %v998
  %v1387 = vunpack.c.l.b16 %v999
  %v1388 = vunpack.c.l.b16 %v1000
  %v1389 = vunpack.c.l.b16 %v1001
  %v1390 = vunpack.c.l.b16 %v1002
  %v1391 = vunpack.c.l.b16 %v1003
  %v1392 = vunpack.c.l.b16 %v1004
  %v1393 = vunpack.c.l.b16 %v1005
  %v1394 = vunpack.c.l.b16 %v1006
  %v1395 = vunpack.c.l.b16 %v1007
  %v1396 = vunpack.c.l.b16 %v1008
  %v1397 = vunpack.c.l.b16 %v1009
  %v1398 = vunpack.c.l.b16 %v1010
  %v1399 = vunpack.c.l.b16 %v1011
  %v1400 = vunpack.c.l.b16 %v1012
  %v1401 = vunpack.c.l.b16 %v1013
  %v1402 = vunpack.c.l.b16 %v1014
  %v1403 = vunpack.c.l.b16 %v1015
  %v1404 = vunpack.c.l.b16 %v1016
  %v1405 = vunpack.c.l.b16 %v1017
  %v1406 = vunpack.c.l.b16 %v1018
  %v1407 = vunpack.c.l.b16 %v1019
  %v1408 = vunpack.c.l.b16 %v1020
  %v1409 = vunpack.c.l.b16 %v1021
  %v1410 = vunpack.c.l.b16 %v1022
  %v1411 = vunpack.c.l.b16 %v1023
  %v1412 = vunpack.c.l.b16 %v1024
  %v1413 = vunpack.c.l.b16 %v1025
  %v1414 = vunpack.c.l.b16 %v1026
  %v1415 = vunpack.c.l.b16 %v1027
  %v1416 = vunpack.c.l.b16 %v1028
  %v1417 = vunpack.c.l.b16 %v1029
  %v1418 = vunpack.c.l.b16 %v1030
  %v1419 = vunpack.c.l.b16 %v1031
  %v1420 = vunpack.c.l.b16 %v1032
  %v1421 = vunpack.c.l.b16 %v1033
  %v1422 = vunpack.c.l.b16 %v1034
  %v1423 = vunpack.c.l.b16 %v1035
  %v1424 = vunpack.c.l.b16 %v1036
  %v1425 = vunpack.c.l.b16 %v1037
  %v1426 = vunpack.c.l.b16 %v1038
  %v1427 = vunpack.c.l.b16 %v1039
  %v1428 = vunpack.c.l.b16 %v1040
  %v1429 = vunpack.c.l.b16 %v1041
  %v1430 = vunpack.c.l.b16 %v1042
  %v1431 = vunpack.c.l.b16 %v1043
  %v1432 = vunpack.c.l.b16 %v1044
  %v1433 = vunpack.c.l.b16 %v1045
  %v1434 = vunpack.c.l.b16 %v1046
  %v1435 = vunpack.c.l.b16 %v1047
  %v1436 = vunpack.c.l.b16 %v1048
  %v1437 = vunpack.c.l.b16 %v1049
  %v1438 = vunpack.c.l.b16 %v1050
  %v1439 = vunpack.c.l.b16 %v1051
  %v1440 = vunpack.c.l.b16 %v1052
  %v1441 = vunpack.c.l.b16 %v1053
  %v1442 = vunpack.c.l.b16 %v1054
  %v1443 = vunpack.c.l.b16 %v1055
  %v1444 = vpack.c.b16 %v1253, %v1252
  %v1445 = vpack.c.b16 %v1255, %v1254
  %v1446 = vpack.c.b16 %v1257, %v1256
  %v1447 = vpack.c.b16 %v1259, %v1258
  %v1448 = vpack.c.b16 %v1261, %v1260
  %v1449 = vpack.c.b16 %v1263, %v1262
  %v1450 = vpack.c.b16 %v1265, %v1264
  %v1451 = vpack.c.b16 %v1267, %v1266
  %v1452 = vpack.c.b16 %v1269, %v1268
  %v1453 = vpack.c.b16 %v1271, %v1270
  %v1454 = vpack.c.b16 %v1273, %v1272
  %v1455 = vpack.c.b16 %v1275, %v1274
  %v1456 = vpack.c.b16 %v1277, %v1276
  %v1457 = vpack.c.b16 %v1279, %v1278
  %v1458 = vpack.c.b16 %v1281, %v1280
  %v1459 = vpack.c.b16 %v1283, %v1282
  %v1460 = vpack.c.b16 %v1285, %v1284
  %v1461 = vpack.c.b16 %v1287, %v1286
  %v1462 = vpack.c.b16 %v1289, %v1288
  %v1463 = vpack.c.b16 %v1291, %v1290
  %v1464 = vpack.c.b16 %v1293, %v1292
  %v1465 = vpack.c.b16 %v1295, %v1294
  %v1466 = vpack.c.b16 %v1297, %v1296
  %v1467 = vpack.c.b16 %v1299, %v1298
  %v1468 = vpack.c.b16 %v1301, %v1300
  %v1469 = vpack.c.b16 %v1303, %v1302
  %v1470 = vpack.c.b16 %v1305, %v1304
  %v1471 = vpack.c.b16 %v1307, %v1306
  %v1472 = vpack.c.b16 %v1309, %v1308
  %v1473 = vpack.c.b16 %v1311, %v1310
  %v1474 = vpack.c.b16 %v1313, %v1312
  %v1475 = vpack.c.b16 %v1315, %v1314
  %v1476 = vpack.c.b16 %v1317, %v1316
  %v1477 = vpack.c.b16 %v1319, %v1318
  %v1478 = vpack.c.b16 %v1321, %v1320
  %v1479 = vpack.c.b16 %v1323, %v1322
  %v1480 = vpack.c.b16 %v1325, %v1324
  %v1481 = vpack.c.b16 %v1327, %v1326
  %v1482 = vpack.c.b16 %v1329, %v1328
  %v1483 = vpack.c.b16 %v1331, %v1330
  %v1484 = vpack.c.b16 %v1333, %v1332
  %v1485 = vpack.c.b16 %v1335, %v1334
  %v1486 = vpack.c.b16 %v1337, %v1336
  %v1487 = vpack.c.b16 %v1339, %v1338
  %v1488 = vpack.c.b16 %v1341, %v1340
  %v1489 = vpack.c.b16 %v1343, %v1342
  %v1490 = vpack.c.b16 %v1345, %v1344
  %v1491 = vpack.c.b16 %v1347, %v1346
  %v1492 = vpack.c.b16 %v1349, %v1348
  %v1493 = vpack.c.b16 %v1351, %v1350
  %v1494 = vpack.c.b16 %v1353, %v1352
  %v1495 = vpack.c.b16 %v1355, %v1354
  %v1496 = vpack.c.b16 %v1357, %v1356
  %v1497 = vpack.c.b16 %v1359, %v1358
  %v1498 = vpack.c.b16 %v1361, %v1360
  %v1499 = vpack.c.b16 %v1363, %v1362
  %v1500 = vpack.c.b16 %v1365, %v1364
  %v1501 = vpack.c.b16 %v1367, %v1366
  %v1502 = vpack.c.b16 %v1369, %v1368
  %v1503 = vpack.c.b16 %v1371, %v1370
  %v1504 = vpack.c.b16 %v1373, %v1372
  %v1505 = vpack.c.b16 %v1375, %v1374
  %v1506 = vpack.c.b16 %v1377, %v1376
  %v1507 = vpack.c.b16 %v1379, %v1378
  %v1508 = vpack.c.b16 %v1381, %v1380
  %v1509 = vpack.c.b16 %v1383, %v1382
  %v1510 = vpack.c.b16 %v1385, %v1384
  %v1511 = vpack.c.b16 %v1387, %v1386
  %v1512 = vpack.c.b16 %v1389, %v1388
  %v1513 = vpack.c.b16 %v1391, %v1390
  %v1514 = vpack.c.b16 %v1393, %v1392
  %v1515 = vpack.c.b16 %v1395, %v1394
  %v1516 = vpack.c.b16 %v1397, %v1396
  %v1517 = vpack.c.b16 %v1399, %v1398
  %v1518 = vpack.c.b16 %v1401, %v1400
  %v1519 = vpack.c.b16 %v1403, %v1402
  %v1520 = vpack.c.b16 %v1405, %v1404
  %v1521 = vpack.c.b16 %v1407, %v1406
  %v1522 = vpack.c.b16 %v1409, %v1408
  %v1523 = vpack.c.b16 %v1411, %v1410
  %v1524 = vpack.c.b16 %v1413, %v1412
  %v1525 = vpack.c.b16 %v1415, %v1414
  %v1526 = vpack.c.b16 %v1417, %v1416
  %v1527 = vpack.c.b16 %v1419, %v1418
  %v1528 = vpack.c.b16 %v1421, %v1420
  %v1529 = vpack.c.b16 %v1423, %v1422
  %v1530 = vpack.c.b16 %v1425, %v1424
  %v1531 = vpack.c.b16 %v1427, %v1426
  %v1532 = vpack.c.b16 %v1429, %v1428
  %v1533 = vpack.c.b16 %v1431, %v1430
  %v1534 = vpack.c.b16 %v1433, %v1432
  %v1535 = vpack.c.b16 %v1435, %v1434
  %v1536 = vpack.c.b16 %v1437, %v1436
  %v1537 = vpack.c.b16 %v1439, %v1438
  %v1538 = vpack.c.b16 %v1441, %v1440
  %v1539 = vpack.c.b16 %v1443, %v1442
  %1636 = vmatpush.bf16.msra.mxu0 %v1451
  %1637 = vmatpush.bf16.msra.mxu0 %v1450
  %1638 = vmatpush.bf16.msra.mxu0 %v1449
  %1639 = vmatpush.bf16.msra.mxu0 %v1448
  %1640 = vmatpush.bf16.msra.mxu0 %v1447
  %1641 = vmatpush.bf16.msra.mxu0 %v1446
  %1642 = vmatpush.bf16.msra.mxu0 %v1445
  %1643 = vmatpush.bf16.msra.mxu0 %v1444
  %1644 = vmatmul.bf16.gmra.mxu0 %v828
  %v1645 = vpop.f32.mrf.mxu0
  %v1646 = vadd.f32 %v1058, %v1645
  %v1647 = vpop.f32.mrf.mxu0
  %1648 = vdwg.mxu0
  %1649 = vmatpush.bf16.msra.mxu0 %v1459
  %1650 = vmatpush.bf16.msra.mxu0 %v1458
  %1651 = vmatpush.bf16.msra.mxu0 %v1457
  %1652 = vmatpush.bf16.msra.mxu0 %v1456
  %1653 = vmatpush.bf16.msra.mxu0 %v1455
  %1654 = vmatpush.bf16.msra.mxu0 %v1454
  %1655 = vmatpush.bf16.msra.mxu0 %v1453
  %1656 = vmatpush.bf16.msra.mxu0 %v1452
  %1657 = vmatmul.bf16.gmra.mxu0 %v829
  %v1658 = vpop.f32.mrf.mxu0
  %v1659 = vadd.f32 %v1646, %v1658
  %v1660 = vpop.f32.mrf.mxu0
  %1661 = vdwg.mxu0
  %1662 = vmatpush.bf16.msra.mxu0 %v1467
  %1663 = vmatpush.bf16.msra.mxu0 %v1466
  %1664 = vmatpush.bf16.msra.mxu0 %v1465
  %1665 = vmatpush.bf16.msra.mxu0 %v1464
  %1666 = vmatpush.bf16.msra.mxu0 %v1463
  %1667 = vmatpush.bf16.msra.mxu0 %v1462
  %1668 = vmatpush.bf16.msra.mxu0 %v1461
  %1669 = vmatpush.bf16.msra.mxu0 %v1460
  %1670 = vmatmul.bf16.gmra.mxu0 %v830
  %v1671 = vpop.f32.mrf.mxu0
  %v1672 = vadd.f32 %v1659, %v1671
  %v1673 = vpop.f32.mrf.mxu0
  %1674 = vdwg.mxu0
  %1675 = vmatpush.bf16.msra.mxu0 %v1475
  %1676 = vmatpush.bf16.msra.mxu0 %v1474
  %1677 = vmatpush.bf16.msra.mxu0 %v1473
  %1678 = vmatpush.bf16.msra.mxu0 %v1472
  %1679 = vmatpush.bf16.msra.mxu0 %v1471
  %1680 = vmatpush.bf16.msra.mxu0 %v1470
  %1681 = vmatpush.bf16.msra.mxu0 %v1469
  %1682 = vmatpush.bf16.msra.mxu0 %v1468
  %1683 = vmatmul.bf16.gmra.mxu0 %v831
  %v1684 = vpop.f32.mrf.mxu0
  %v1685 = vadd.f32 %v1672, %v1684
  %v1686 = vpop.f32.mrf.mxu0
  %1687 = vdwg.mxu0
  %1688 = vmatpush.bf16.msra.mxu0 %v1483
  %1689 = vmatpush.bf16.msra.mxu0 %v1482
  %1690 = vmatpush.bf16.msra.mxu0 %v1481
  %1691 = vmatpush.bf16.msra.mxu0 %v1480
  %1692 = vmatpush.bf16.msra.mxu0 %v1479
  %1693 = vmatpush.bf16.msra.mxu0 %v1478
  %1694 = vmatpush.bf16.msra.mxu0 %v1477
  %1695 = vmatpush.bf16.msra.mxu0 %v1476
  %1696 = vmatmul.bf16.gmra.mxu0 %v842
  %v1697 = vpop.f32.mrf.mxu0
  %v1698 = vadd.f32 %v1685, %v1697
  %v1699 = vpop.f32.mrf.mxu0
  %1700 = vdwg.mxu0
  %1701 = vmatpush.bf16.msra.mxu0 %v1491
  %1702 = vmatpush.bf16.msra.mxu0 %v1490
  %1703 = vmatpush.bf16.msra.mxu0 %v1489
  %1704 = vmatpush.bf16.msra.mxu0 %v1488
  %1705 = vmatpush.bf16.msra.mxu0 %v1487
  %1706 = vmatpush.bf16.msra.mxu0 %v1486
  %1707 = vmatpush.bf16.msra.mxu0 %v1485
  %1708 = vmatpush.bf16.msra.mxu0 %v1484
  %1709 = vmatmul.bf16.gmra.mxu0 %v843
  %v1710 = vpop.f32.mrf.mxu0
  %v1711 = vadd.f32 %v1698, %v1710
  %v1712 = vpop.f32.mrf.mxu0
  %1713 = vdwg.mxu0
  %1714 = vmatpush.bf16.msra.mxu0 %v1499
  %1715 = vmatpush.bf16.msra.mxu0 %v1498
  %1716 = vmatpush.bf16.msra.mxu0 %v1497
  %1717 = vmatpush.bf16.msra.mxu0 %v1496
  %1718 = vmatpush.bf16.msra.mxu0 %v1495
  %1719 = vmatpush.bf16.msra.mxu0 %v1494
  %1720 = vmatpush.bf16.msra.mxu0 %v1493
  %1721 = vmatpush.bf16.msra.mxu0 %v1492
  %1722 = vmatmul.bf16.gmra.mxu0 %v844
  %v1723 = vpop.f32.mrf.mxu0
  %v1724 = vadd.f32 %v1711, %v1723
  %v1725 = vpop.f32.mrf.mxu0
  %1726 = vdwg.mxu0
  %1727 = vmatpush.bf16.msra.mxu0 %v1507
  %1728 = vmatpush.bf16.msra.mxu0 %v1506
  %1729 = vmatpush.bf16.msra.mxu0 %v1505
  %1730 = vmatpush.bf16.msra.mxu0 %v1504
  %1731 = vmatpush.bf16.msra.mxu0 %v1503
  %1732 = vmatpush.bf16.msra.mxu0 %v1502
  %1733 = vmatpush.bf16.msra.mxu0 %v1501
  %1734 = vmatpush.bf16.msra.mxu0 %v1500
  %1735 = vmatmul.bf16.gmra.mxu0 %v845
  %v1736 = vpop.f32.mrf.mxu0
  %v1737 = vadd.f32 %v1724, %v1736
  %v1738 = vpop.f32.mrf.mxu0
  %1739 = vdwg.mxu0
  %1740 = vmatpush.bf16.msra.mxu0 %v1515
  %1741 = vmatpush.bf16.msra.mxu0 %v1514
  %1742 = vmatpush.bf16.msra.mxu0 %v1513
  %1743 = vmatpush.bf16.msra.mxu0 %v1512
  %1744 = vmatpush.bf16.msra.mxu0 %v1511
  %1745 = vmatpush.bf16.msra.mxu0 %v1510
  %1746 = vmatpush.bf16.msra.mxu0 %v1509
  %1747 = vmatpush.bf16.msra.mxu0 %v1508
  %1748 = vmatmul.bf16.gmra.mxu0 %v856
  %v1749 = vpop.f32.mrf.mxu0
  %v1750 = vadd.f32 %v1737, %v1749
  %v1751 = vpop.f32.mrf.mxu0
  %1752 = vdwg.mxu0
  %1753 = vmatpush.bf16.msra.mxu0 %v1523
  %1754 = vmatpush.bf16.msra.mxu0 %v1522
  %1755 = vmatpush.bf16.msra.mxu0 %v1521
  %1756 = vmatpush.bf16.msra.mxu0 %v1520
  %1757 = vmatpush.bf16.msra.mxu0 %v1519
  %1758 = vmatpush.bf16.msra.mxu0 %v1518
  %1759 = vmatpush.bf16.msra.mxu0 %v1517
  %1760 = vmatpush.bf16.msra.mxu0 %v1516
  %1761 = vmatmul.bf16.gmra.mxu0 %v857
  %v1762 = vpop.f32.mrf.mxu0
  %v1763 = vadd.f32 %v1750, %v1762
  %v1764 = vpop.f32.mrf.mxu0
  %1765 = vdwg.mxu0
  %1766 = vmatpush.bf16.msra.mxu0 %v1531
  %1767 = vmatpush.bf16.msra.mxu0 %v1530
  %1768 = vmatpush.bf16.msra.mxu0 %v1529
  %1769 = vmatpush.bf16.msra.mxu0 %v1528
  %1770 = vmatpush.bf16.msra.mxu0 %v1527
  %1771 = vmatpush.bf16.msra.mxu0 %v1526
  %1772 = vmatpush.bf16.msra.mxu0 %v1525
  %1773 = vmatpush.bf16.msra.mxu0 %v1524
  %1774 = vmatmul.bf16.gmra.mxu0 %v858
  %v1775 = vpop.f32.mrf.mxu0
  %v1776 = vadd.f32 %v1763, %v1775
  %v1777 = vpop.f32.mrf.mxu0
  %1778 = vdwg.mxu0
  %1779 = vmatpush.bf16.msra.mxu0 %v1539
  %1780 = vmatpush.bf16.msra.mxu0 %v1538
  %1781 = vmatpush.bf16.msra.mxu0 %v1537
  %1782 = vmatpush.bf16.msra.mxu0 %v1536
  %1783 = vmatpush.bf16.msra.mxu0 %v1535
  %1784 = vmatpush.bf16.msra.mxu0 %v1534
  %1785 = vmatpush.bf16.msra.mxu0 %v1533
  %1786 = vmatpush.bf16.msra.mxu0 %v1532
  %1787 = vmatmul.bf16.gmra.mxu0 %v859
  %v1788 = vpop.f32.mrf.mxu0
  %v1789 = vadd.f32 %v1776, %v1788
  %v1790 = vpop.f32.mrf.mxu0
  %1791 = vdwg.mxu0
  %v1792 = vmax.f32 %v1789, 0.0
  %1793 = vst [vmem:[%s13] sm:$0xff] %v1792
  %v1794 = vpack.c.bf16 %v1792, %v1792
  %v1795 = vld [vmem:[%s8] sm:$0xff]
  %v1796 = vld [vmem:[%s8 + $0x8] sm:$0xff]
  %v1797 = vld [vmem:[%s8 + $0x10] sm:$0xff]
  %v1798 = vld [vmem:[%s8 + $0x18] sm:$0xff]
  %v1799 = vld [vmem:[%s8 + $0x20] sm:$0xff]
  %v1800 = vld [vmem:[%s8 + $0x28] sm:$0xff]
  %v1801 = vld [vmem:[%s8 + $0x30] sm:$0xff]
  %v1802 = vld [vmem:[%s8 + $0x38] sm:$0xff]
  %v1803 = vld [vmem:[%s8 + $0x40] sm:$0xff]
  %v1804 = vld [vmem:[%s8 + $0x48] sm:$0xff]
  %v1805 = vld [vmem:[%s8 + $0x50] sm:$0xff]
  %v1806 = vld [vmem:[%s8 + $0x58] sm:$0xff]
  %v1807 = vld [vmem:[%s8 + $0x60] sm:$0xff]
  %v1808 = vld [vmem:[%s8 + $0x68] sm:$0xff]
  %v1809 = vld [vmem:[%s8 + $0x70] sm:$0xff]
  %v1810 = vld [vmem:[%s8 + $0x78] sm:$0xff]
  %v1811 = vld [vmem:[%s8 + $0x80] sm:$0xff]
  %v1812 = vld [vmem:[%s8 + $0x88] sm:$0xff]
  %v1813 = vld [vmem:[%s8 + $0x90] sm:$0xff]
  %v1814 = vld [vmem:[%s8 + $0x98] sm:$0xff]
  %v1815 = vld [vmem:[%s8 + $0xa0] sm:$0xff]
  %v1816 = vld [vmem:[%s8 + $0xa8] sm:$0xff]
  %v1817 = vld [vmem:[%s8 + $0xb0] sm:$0xff]
  %v1818 = vld [vmem:[%s8 + $0xb8] sm:$0xff]
  %v1819 = vld [vmem:[%s8 + $0xc0] sm:$0xff]
  %v1820 = vld [vmem:[%s8 + $0xc8] sm:$0xff]
  %v1821 = vld [vmem:[%s8 + $0xd0] sm:$0xff]
  %v1822 = vld [vmem:[%s8 + $0xd8] sm:$0xff]
  %v1823 = vld [vmem:[%s8 + $0xe0] sm:$0xff]
  %v1824 = vld [vmem:[%s8 + $0xe8] sm:$0xff]
  %v1825 = vld [vmem:[%s8 + $0xf0] sm:$0xff]
  %v1826 = vld [vmem:[%s8 + $0xf8] sm:$0xff]
  %v1859 = vunpack.c.l.b16 %v1795
  %v1860 = vunpack.c.h.b16 %v1795
  %v1861 = vunpack.c.l.b16 %v1796
  %v1862 = vunpack.c.h.b16 %v1796
  %v1863 = vunpack.c.l.b16 %v1797
  %v1864 = vunpack.c.h.b16 %v1797
  %v1865 = vunpack.c.l.b16 %v1798
  %v1866 = vunpack.c.h.b16 %v1798
  %v1867 = vunpack.c.l.b16 %v1799
  %v1868 = vunpack.c.h.b16 %v1799
  %v1869 = vunpack.c.l.b16 %v1800
  %v1870 = vunpack.c.h.b16 %v1800
  %v1871 = vunpack.c.l.b16 %v1801
  %v1872 = vunpack.c.h.b16 %v1801
  %v1873 = vunpack.c.l.b16 %v1802
  %v1874 = vunpack.c.h.b16 %v1802
  %v1875 = vunpack.c.l.b16 %v1803
  %v1876 = vunpack.c.h.b16 %v1803
  %v1877 = vunpack.c.l.b16 %v1804
  %v1878 = vunpack.c.h.b16 %v1804
  %v1879 = vunpack.c.l.b16 %v1805
  %v1880 = vunpack.c.h.b16 %v1805
  %v1881 = vunpack.c.l.b16 %v1806
  %v1882 = vunpack.c.h.b16 %v1806
  %v1883 = vunpack.c.l.b16 %v1807
  %v1884 = vunpack.c.h.b16 %v1807
  %v1885 = vunpack.c.l.b16 %v1808
  %v1886 = vunpack.c.h.b16 %v1808
  %v1887 = vunpack.c.l.b16 %v1809
  %v1888 = vunpack.c.h.b16 %v1809
  %v1889 = vunpack.c.l.b16 %v1810
  %v1890 = vunpack.c.h.b16 %v1810
  %v1891 = vunpack.c.l.b16 %v1811
  %v1892 = vunpack.c.h.b16 %v1811
  %v1893 = vunpack.c.l.b16 %v1812
  %v1894 = vunpack.c.h.b16 %v1812
  %v1895 = vunpack.c.l.b16 %v1813
  %v1896 = vunpack.c.h.b16 %v1813
  %v1897 = vunpack.c.l.b16 %v1814
  %v1898 = vunpack.c.h.b16 %v1814
  %v1899 = vunpack.c.l.b16 %v1815
  %v1900 = vunpack.c.h.b16 %v1815
  %v1901 = vunpack.c.l.b16 %v1816
  %v1902 = vunpack.c.h.b16 %v1816
  %v1903 = vunpack.c.l.b16 %v1817
  %v1904 = vunpack.c.h.b16 %v1817
  %v1905 = vunpack.c.l.b16 %v1818
  %v1906 = vunpack.c.h.b16 %v1818
  %v1907 = vunpack.c.l.b16 %v1819
  %v1908 = vunpack.c.h.b16 %v1819
  %v1909 = vunpack.c.l.b16 %v1820
  %v1910 = vunpack.c.h.b16 %v1820
  %v1911 = vunpack.c.l.b16 %v1821
  %v1912 = vunpack.c.h.b16 %v1821
  %v1913 = vunpack.c.l.b16 %v1822
  %v1914 = vunpack.c.h.b16 %v1822
  %v1915 = vunpack.c.l.b16 %v1823
  %v1916 = vunpack.c.h.b16 %v1823
  %v1917 = vunpack.c.l.b16 %v1824
  %v1918 = vunpack.c.h.b16 %v1824
  %v1919 = vunpack.c.l.b16 %v1825
  %v1920 = vunpack.c.h.b16 %v1825
  %v1921 = vunpack.c.l.b16 %v1826
  %v1922 = vunpack.c.h.b16 %v1826
  %v1923 = vpack.c.b16 %v1863, %v1859
  %v1924 = vpack.c.b16 %v1864, %v1860
  %v1925 = vpack.c.b16 %v1865, %v1861
  %v1926 = vpack.c.b16 %v1866, %v1862
  %v1927 = vpack.c.b16 %v1871, %v1867
  %v1928 = vpack.c.b16 %v1872, %v1868
  %v1929 = vpack.c.b16 %v1873, %v1869
  %v1930 = vpack.c.b16 %v1874, %v1870
  %v1931 = vpack.c.b16 %v1879, %v1875
  %v1932 = vpack.c.b16 %v1880, %v1876
  %v1933 = vpack.c.b16 %v1881, %v1877
  %v1934 = vpack.c.b16 %v1882, %v1878
  %v1935 = vpack.c.b16 %v1887, %v1883
  %v1936 = vpack.c.b16 %v1888, %v1884
  %v1937 = vpack.c.b16 %v1889, %v1885
  %v1938 = vpack.c.b16 %v1890, %v1886
  %v1939 = vpack.c.b16 %v1895, %v1891
  %v1940 = vpack.c.b16 %v1896, %v1892
  %v1941 = vpack.c.b16 %v1897, %v1893
  %v1942 = vpack.c.b16 %v1898, %v1894
  %v1943 = vpack.c.b16 %v1903, %v1899
  %v1944 = vpack.c.b16 %v1904, %v1900
  %v1945 = vpack.c.b16 %v1905, %v1901
  %v1946 = vpack.c.b16 %v1906, %v1902
  %v1947 = vpack.c.b16 %v1911, %v1907
  %v1948 = vpack.c.b16 %v1912, %v1908
  %v1949 = vpack.c.b16 %v1913, %v1909
  %v1950 = vpack.c.b16 %v1914, %v1910
  %v1951 = vpack.c.b16 %v1919, %v1915
  %v1952 = vpack.c.b16 %v1920, %v1916
  %v1953 = vpack.c.b16 %v1921, %v1917
  %v1954 = vpack.c.b16 %v1922, %v1918
  %1987 = vmatpush.bf16.msra.mxu0 %v1951
  %1988 = vmatpush.bf16.msra.mxu0 %v1947
  %1989 = vmatpush.bf16.msra.mxu0 %v1943
  %1990 = vmatpush.bf16.msra.mxu0 %v1939
  %1991 = vmatpush.bf16.msra.mxu0 %v1935
  %1992 = vmatpush.bf16.msra.mxu0 %v1931
  %1993 = vmatpush.bf16.msra.mxu0 %v1927
  %1994 = vmatpush.bf16.msra.mxu0 %v1923
  %1995 = vmatmul.bf16.gmra.mxu0 %v1794
  %v1996 = vpop.f32.mrf.mxu0
  %v1997 = vadd.f32 0.0, %v1996
  %v1998 = vpop.f32.mrf.mxu0
  %1999 = vdwg.mxu0
  %2000 = vmatpush.bf16.msra.mxu0 %v1952
  %2001 = vmatpush.bf16.msra.mxu0 %v1948
  %2002 = vmatpush.bf16.msra.mxu0 %v1944
  %2003 = vmatpush.bf16.msra.mxu0 %v1940
  %2004 = vmatpush.bf16.msra.mxu0 %v1936
  %2005 = vmatpush.bf16.msra.mxu0 %v1932
  %2006 = vmatpush.bf16.msra.mxu0 %v1928
  %2007 = vmatpush.bf16.msra.mxu0 %v1924
  %2008 = vmatmul.bf16.gmra.mxu0 %v1794
  %v2009 = vpop.f32.mrf.mxu0
  %v2010 = vadd.f32 0.0, %v2009
  %v2011 = vpop.f32.mrf.mxu0
  %2012 = vdwg.mxu0
  %2013 = vmatpush.bf16.msra.mxu0 %v1953
  %2014 = vmatpush.bf16.msra.mxu0 %v1949
  %2015 = vmatpush.bf16.msra.mxu0 %v1945
  %2016 = vmatpush.bf16.msra.mxu0 %v1941
  %2017 = vmatpush.bf16.msra.mxu0 %v1937
  %2018 = vmatpush.bf16.msra.mxu0 %v1933
  %2019 = vmatpush.bf16.msra.mxu0 %v1929
  %2020 = vmatpush.bf16.msra.mxu0 %v1925
  %2021 = vmatmul.bf16.gmra.mxu0 %v1794
  %v2022 = vpop.f32.mrf.mxu0
  %v2023 = vadd.f32 0.0, %v2022
  %v2024 = vpop.f32.mrf.mxu0
  %2025 = vdwg.mxu0
  %2026 = vmatpush.bf16.msra.mxu0 %v1954
  %2027 = vmatpush.bf16.msra.mxu0 %v1950
  %2028 = vmatpush.bf16.msra.mxu0 %v1946
  %2029 = vmatpush.bf16.msra.mxu0 %v1942
  %2030 = vmatpush.bf16.msra.mxu0 %v1938
  %2031 = vmatpush.bf16.msra.mxu0 %v1934
  %2032 = vmatpush.bf16.msra.mxu0 %v1930
  %2033 = vmatpush.bf16.msra.mxu0 %v1926
  %2034 = vmatmul.bf16.gmra.mxu0 %v1794
  %v2035 = vpop.f32.mrf.mxu0
  %v2036 = vadd.f32 0.0, %v2035
  %v2037 = vpop.f32.mrf.mxu0
  %2038 = vdwg.mxu0
  %s2039 = scalar_lea.vmem %s8, 256
  %v2040 = vld [vmem:[%s2039] sm:$0xff]
  %v2041 = vld [vmem:[%s2039 + $0x8] sm:$0xff]
  %v2042 = vld [vmem:[%s2039 + $0x10] sm:$0xff]
  %v2043 = vld [vmem:[%s2039 + $0x18] sm:$0xff]
  %v2044 = vld [vmem:[%s2039 + $0x20] sm:$0xff]
  %v2045 = vld [vmem:[%s2039 + $0x28] sm:$0xff]
  %v2046 = vld [vmem:[%s2039 + $0x30] sm:$0xff]
  %v2047 = vld [vmem:[%s2039 + $0x38] sm:$0xff]
  %v2048 = vld [vmem:[%s2039 + $0x40] sm:$0xff]
  %v2049 = vld [vmem:[%s2039 + $0x48] sm:$0xff]
  %v2050 = vld [vmem:[%s2039 + $0x50] sm:$0xff]
  %v2051 = vld [vmem:[%s2039 + $0x58] sm:$0xff]
  %v2052 = vld [vmem:[%s2039 + $0x60] sm:$0xff]
  %v2053 = vld [vmem:[%s2039 + $0x68] sm:$0xff]
  %v2054 = vld [vmem:[%s2039 + $0x70] sm:$0xff]
  %v2055 = vld [vmem:[%s2039 + $0x78] sm:$0xff]
  %v2056 = vld [vmem:[%s2039 + $0x80] sm:$0xff]
  %v2057 = vld [vmem:[%s2039 + $0x88] sm:$0xff]
  %v2058 = vld [vmem:[%s2039 + $0x90] sm:$0xff]
  %v2059 = vld [vmem:[%s2039 + $0x98] sm:$0xff]
  %v2060 = vld [vmem:[%s2039 + $0xa0] sm:$0xff]
  %v2061 = vld [vmem:[%s2039 + $0xa8] sm:$0xff]
  %v2062 = vld [vmem:[%s2039 + $0xb0] sm:$0xff]
  %v2063 = vld [vmem:[%s2039 + $0xb8] sm:$0xff]
  %v2064 = vld [vmem:[%s2039 + $0xc0] sm:$0xff]
  %v2065 = vld [vmem:[%s2039 + $0xc8] sm:$0xff]
  %v2066 = vld [vmem:[%s2039 + $0xd0] sm:$0xff]
  %v2067 = vld [vmem:[%s2039 + $0xd8] sm:$0xff]
  %v2068 = vld [vmem:[%s2039 + $0xe0] sm:$0xff]
  %v2069 = vld [vmem:[%s2039 + $0xe8] sm:$0xff]
  %v2070 = vld [vmem:[%s2039 + $0xf0] sm:$0xff]
  %v2071 = vld [vmem:[%s2039 + $0xf8] sm:$0xff]
  %v2104 = vunpack.c.l.b16 %v2040
  %v2105 = vunpack.c.h.b16 %v2040
  %v2106 = vunpack.c.l.b16 %v2041
  %v2107 = vunpack.c.h.b16 %v2041
  %v2108 = vunpack.c.l.b16 %v2042
  %v2109 = vunpack.c.h.b16 %v2042
  %v2110 = vunpack.c.l.b16 %v2043
  %v2111 = vunpack.c.h.b16 %v2043
  %v2112 = vunpack.c.l.b16 %v2044
  %v2113 = vunpack.c.h.b16 %v2044
  %v2114 = vunpack.c.l.b16 %v2045
  %v2115 = vunpack.c.h.b16 %v2045
  %v2116 = vunpack.c.l.b16 %v2046
  %v2117 = vunpack.c.h.b16 %v2046
  %v2118 = vunpack.c.l.b16 %v2047
  %v2119 = vunpack.c.h.b16 %v2047
  %v2120 = vunpack.c.l.b16 %v2048
  %v2121 = vunpack.c.h.b16 %v2048
  %v2122 = vunpack.c.l.b16 %v2049
  %v2123 = vunpack.c.h.b16 %v2049
  %v2124 = vunpack.c.l.b16 %v2050
  %v2125 = vunpack.c.h.b16 %v2050
  %v2126 = vunpack.c.l.b16 %v2051
  %v2127 = vunpack.c.h.b16 %v2051
  %v2128 = vunpack.c.l.b16 %v2052
  %v2129 = vunpack.c.h.b16 %v2052
  %v2130 = vunpack.c.l.b16 %v2053
  %v2131 = vunpack.c.h.b16 %v2053
  %v2132 = vunpack.c.l.b16 %v2054
  %v2133 = vunpack.c.h.b16 %v2054
  %v2134 = vunpack.c.l.b16 %v2055
  %v2135 = vunpack.c.h.b16 %v2055
  %v2136 = vunpack.c.l.b16 %v2056
  %v2137 = vunpack.c.h.b16 %v2056
  %v2138 = vunpack.c.l.b16 %v2057
  %v2139 = vunpack.c.h.b16 %v2057
  %v2140 = vunpack.c.l.b16 %v2058
  %v2141 = vunpack.c.h.b16 %v2058
  %v2142 = vunpack.c.l.b16 %v2059
  %v2143 = vunpack.c.h.b16 %v2059
  %v2144 = vunpack.c.l.b16 %v2060
  %v2145 = vunpack.c.h.b16 %v2060
  %v2146 = vunpack.c.l.b16 %v2061
  %v2147 = vunpack.c.h.b16 %v2061
  %v2148 = vunpack.c.l.b16 %v2062
  %v2149 = vunpack.c.h.b16 %v2062
  %v2150 = vunpack.c.l.b16 %v2063
  %v2151 = vunpack.c.h.b16 %v2063
  %v2152 = vunpack.c.l.b16 %v2064
  %v2153 = vunpack.c.h.b16 %v2064
  %v2154 = vunpack.c.l.b16 %v2065
  %v2155 = vunpack.c.h.b16 %v2065
  %v2156 = vunpack.c.l.b16 %v2066
  %v2157 = vunpack.c.h.b16 %v2066
  %v2158 = vunpack.c.l.b16 %v2067
  %v2159 = vunpack.c.h.b16 %v2067
  %v2160 = vunpack.c.l.b16 %v2068
  %v2161 = vunpack.c.h.b16 %v2068
  %v2162 = vunpack.c.l.b16 %v2069
  %v2163 = vunpack.c.h.b16 %v2069
  %v2164 = vunpack.c.l.b16 %v2070
  %v2165 = vunpack.c.h.b16 %v2070
  %v2166 = vunpack.c.l.b16 %v2071
  %v2167 = vunpack.c.h.b16 %v2071
  %v2168 = vpack.c.b16 %v2108, %v2104
  %v2169 = vpack.c.b16 %v2109, %v2105
  %v2170 = vpack.c.b16 %v2110, %v2106
  %v2171 = vpack.c.b16 %v2111, %v2107
  %v2172 = vpack.c.b16 %v2116, %v2112
  %v2173 = vpack.c.b16 %v2117, %v2113
  %v2174 = vpack.c.b16 %v2118, %v2114
  %v2175 = vpack.c.b16 %v2119, %v2115
  %v2176 = vpack.c.b16 %v2124, %v2120
  %v2177 = vpack.c.b16 %v2125, %v2121
  %v2178 = vpack.c.b16 %v2126, %v2122
  %v2179 = vpack.c.b16 %v2127, %v2123
  %v2180 = vpack.c.b16 %v2132, %v2128
  %v2181 = vpack.c.b16 %v2133, %v2129
  %v2182 = vpack.c.b16 %v2134, %v2130
  %v2183 = vpack.c.b16 %v2135, %v2131
  %v2184 = vpack.c.b16 %v2140, %v2136
  %v2185 = vpack.c.b16 %v2141, %v2137
  %v2186 = vpack.c.b16 %v2142, %v2138
  %v2187 = vpack.c.b16 %v2143, %v2139
  %v2188 = vpack.c.b16 %v2148, %v2144
  %v2189 = vpack.c.b16 %v2149, %v2145
  %v2190 = vpack.c.b16 %v2150, %v2146
  %v2191 = vpack.c.b16 %v2151, %v2147
  %v2192 = vpack.c.b16 %v2156, %v2152
  %v2193 = vpack.c.b16 %v2157, %v2153
  %v2194 = vpack.c.b16 %v2158, %v2154
  %v2195 = vpack.c.b16 %v2159, %v2155
  %v2196 = vpack.c.b16 %v2164, %v2160
  %v2197 = vpack.c.b16 %v2165, %v2161
  %v2198 = vpack.c.b16 %v2166, %v2162
  %v2199 = vpack.c.b16 %v2167, %v2163
  %2232 = vmatpush.bf16.msra.mxu0 %v2196
  %2233 = vmatpush.bf16.msra.mxu0 %v2192
  %2234 = vmatpush.bf16.msra.mxu0 %v2188
  %2235 = vmatpush.bf16.msra.mxu0 %v2184
  %2236 = vmatpush.bf16.msra.mxu0 %v2180
  %2237 = vmatpush.bf16.msra.mxu0 %v2176
  %2238 = vmatpush.bf16.msra.mxu0 %v2172
  %2239 = vmatpush.bf16.msra.mxu0 %v2168
  %2240 = vmatmul.bf16.gmra.mxu0 %v1794
  %v2241 = vpop.f32.mrf.mxu0
  %v2242 = vadd.f32 0.0, %v2241
  %v2243 = vpop.f32.mrf.mxu0
  %2244 = vdwg.mxu0
  %2245 = vmatpush.bf16.msra.mxu0 %v2197
  %2246 = vmatpush.bf16.msra.mxu0 %v2193
  %2247 = vmatpush.bf16.msra.mxu0 %v2189
  %2248 = vmatpush.bf16.msra.mxu0 %v2185
  %2249 = vmatpush.bf16.msra.mxu0 %v2181
  %2250 = vmatpush.bf16.msra.mxu0 %v2177
  %2251 = vmatpush.bf16.msra.mxu0 %v2173
  %2252 = vmatpush.bf16.msra.mxu0 %v2169
  %2253 = vmatmul.bf16.gmra.mxu0 %v1794
  %v2254 = vpop.f32.mrf.mxu0
  %v2255 = vadd.f32 0.0, %v2254
  %v2256 = vpop.f32.mrf.mxu0
  %2257 = vdwg.mxu0
  %2258 = vmatpush.bf16.msra.mxu0 %v2198
  %2259 = vmatpush.bf16.msra.mxu0 %v2194
  %2260 = vmatpush.bf16.msra.mxu0 %v2190
  %2261 = vmatpush.bf16.msra.mxu0 %v2186
  %2262 = vmatpush.bf16.msra.mxu0 %v2182
  %2263 = vmatpush.bf16.msra.mxu0 %v2178
  %2264 = vmatpush.bf16.msra.mxu0 %v2174
  %2265 = vmatpush.bf16.msra.mxu0 %v2170
  %2266 = vmatmul.bf16.gmra.mxu0 %v1794
  %v2267 = vpop.f32.mrf.mxu0
  %v2268 = vadd.f32 0.0, %v2267
  %v2269 = vpop.f32.mrf.mxu0
  %2270 = vdwg.mxu0
  %2271 = vmatpush.bf16.msra.mxu0 %v2199
  %2272 = vmatpush.bf16.msra.mxu0 %v2195
  %2273 = vmatpush.bf16.msra.mxu0 %v2191
  %2274 = vmatpush.bf16.msra.mxu0 %v2187
  %2275 = vmatpush.bf16.msra.mxu0 %v2183
  %2276 = vmatpush.bf16.msra.mxu0 %v2179
  %2277 = vmatpush.bf16.msra.mxu0 %v2175
  %2278 = vmatpush.bf16.msra.mxu0 %v2171
  %2279 = vmatmul.bf16.gmra.mxu0 %v1794
  %v2280 = vpop.f32.mrf.mxu0
  %v2281 = vadd.f32 0.0, %v2280
  %v2282 = vpop.f32.mrf.mxu0
  %2283 = vdwg.mxu0
  %s2284 = scalar_lea.vmem %s8, 512
  %v2285 = vld [vmem:[%s2284] sm:$0xff]
  %v2286 = vld [vmem:[%s2284 + $0x8] sm:$0xff]
  %v2287 = vld [vmem:[%s2284 + $0x10] sm:$0xff]
  %v2288 = vld [vmem:[%s2284 + $0x18] sm:$0xff]
  %v2289 = vld [vmem:[%s2284 + $0x20] sm:$0xff]
  %v2290 = vld [vmem:[%s2284 + $0x28] sm:$0xff]
  %v2291 = vld [vmem:[%s2284 + $0x30] sm:$0xff]
  %v2292 = vld [vmem:[%s2284 + $0x38] sm:$0xff]
  %v2293 = vld [vmem:[%s2284 + $0x40] sm:$0xff]
  %v2294 = vld [vmem:[%s2284 + $0x48] sm:$0xff]
  %v2295 = vld [vmem:[%s2284 + $0x50] sm:$0xff]
  %v2296 = vld [vmem:[%s2284 + $0x58] sm:$0xff]
  %v2297 = vld [vmem:[%s2284 + $0x60] sm:$0xff]
  %v2298 = vld [vmem:[%s2284 + $0x68] sm:$0xff]
  %v2299 = vld [vmem:[%s2284 + $0x70] sm:$0xff]
  %v2300 = vld [vmem:[%s2284 + $0x78] sm:$0xff]
  %v2301 = vld [vmem:[%s2284 + $0x80] sm:$0xff]
  %v2302 = vld [vmem:[%s2284 + $0x88] sm:$0xff]
  %v2303 = vld [vmem:[%s2284 + $0x90] sm:$0xff]
  %v2304 = vld [vmem:[%s2284 + $0x98] sm:$0xff]
  %v2305 = vld [vmem:[%s2284 + $0xa0] sm:$0xff]
  %v2306 = vld [vmem:[%s2284 + $0xa8] sm:$0xff]
  %v2307 = vld [vmem:[%s2284 + $0xb0] sm:$0xff]
  %v2308 = vld [vmem:[%s2284 + $0xb8] sm:$0xff]
  %v2309 = vld [vmem:[%s2284 + $0xc0] sm:$0xff]
  %v2310 = vld [vmem:[%s2284 + $0xc8] sm:$0xff]
  %v2311 = vld [vmem:[%s2284 + $0xd0] sm:$0xff]
  %v2312 = vld [vmem:[%s2284 + $0xd8] sm:$0xff]
  %v2313 = vld [vmem:[%s2284 + $0xe0] sm:$0xff]
  %v2314 = vld [vmem:[%s2284 + $0xe8] sm:$0xff]
  %v2315 = vld [vmem:[%s2284 + $0xf0] sm:$0xff]
  %v2316 = vld [vmem:[%s2284 + $0xf8] sm:$0xff]
  %v2349 = vunpack.c.l.b16 %v2285
  %v2350 = vunpack.c.h.b16 %v2285
  %v2351 = vunpack.c.l.b16 %v2286
  %v2352 = vunpack.c.h.b16 %v2286
  %v2353 = vunpack.c.l.b16 %v2287
  %v2354 = vunpack.c.h.b16 %v2287
  %v2355 = vunpack.c.l.b16 %v2288
  %v2356 = vunpack.c.h.b16 %v2288
  %v2357 = vunpack.c.l.b16 %v2289
  %v2358 = vunpack.c.h.b16 %v2289
  %v2359 = vunpack.c.l.b16 %v2290
  %v2360 = vunpack.c.h.b16 %v2290
  %v2361 = vunpack.c.l.b16 %v2291
  %v2362 = vunpack.c.h.b16 %v2291
  %v2363 = vunpack.c.l.b16 %v2292
  %v2364 = vunpack.c.h.b16 %v2292
  %v2365 = vunpack.c.l.b16 %v2293
  %v2366 = vunpack.c.h.b16 %v2293
  %v2367 = vunpack.c.l.b16 %v2294
  %v2368 = vunpack.c.h.b16 %v2294
  %v2369 = vunpack.c.l.b16 %v2295
  %v2370 = vunpack.c.h.b16 %v2295
  %v2371 = vunpack.c.l.b16 %v2296
  %v2372 = vunpack.c.h.b16 %v2296
  %v2373 = vunpack.c.l.b16 %v2297
  %v2374 = vunpack.c.h.b16 %v2297
  %v2375 = vunpack.c.l.b16 %v2298
  %v2376 = vunpack.c.h.b16 %v2298
  %v2377 = vunpack.c.l.b16 %v2299
  %v2378 = vunpack.c.h.b16 %v2299
  %v2379 = vunpack.c.l.b16 %v2300
  %v2380 = vunpack.c.h.b16 %v2300
  %v2381 = vunpack.c.l.b16 %v2301
  %v2382 = vunpack.c.h.b16 %v2301
  %v2383 = vunpack.c.l.b16 %v2302
  %v2384 = vunpack.c.h.b16 %v2302
  %v2385 = vunpack.c.l.b16 %v2303
  %v2386 = vunpack.c.h.b16 %v2303
  %v2387 = vunpack.c.l.b16 %v2304
  %v2388 = vunpack.c.h.b16 %v2304
  %v2389 = vunpack.c.l.b16 %v2305
  %v2390 = vunpack.c.h.b16 %v2305
  %v2391 = vunpack.c.l.b16 %v2306
  %v2392 = vunpack.c.h.b16 %v2306
  %v2393 = vunpack.c.l.b16 %v2307
  %v2394 = vunpack.c.h.b16 %v2307
  %v2395 = vunpack.c.l.b16 %v2308
  %v2396 = vunpack.c.h.b16 %v2308
  %v2397 = vunpack.c.l.b16 %v2309
  %v2398 = vunpack.c.h.b16 %v2309
  %v2399 = vunpack.c.l.b16 %v2310
  %v2400 = vunpack.c.h.b16 %v2310
  %v2401 = vunpack.c.l.b16 %v2311
  %v2402 = vunpack.c.h.b16 %v2311
  %v2403 = vunpack.c.l.b16 %v2312
  %v2404 = vunpack.c.h.b16 %v2312
  %v2405 = vunpack.c.l.b16 %v2313
  %v2406 = vunpack.c.h.b16 %v2313
  %v2407 = vunpack.c.l.b16 %v2314
  %v2408 = vunpack.c.h.b16 %v2314
  %v2409 = vunpack.c.l.b16 %v2315
  %v2410 = vunpack.c.h.b16 %v2315
  %v2411 = vunpack.c.l.b16 %v2316
  %v2412 = vunpack.c.h.b16 %v2316
  %v2413 = vpack.c.b16 %v2353, %v2349
  %v2414 = vpack.c.b16 %v2354, %v2350
  %v2415 = vpack.c.b16 %v2355, %v2351
  %v2416 = vpack.c.b16 %v2356, %v2352
  %v2417 = vpack.c.b16 %v2361, %v2357
  %v2418 = vpack.c.b16 %v2362, %v2358
  %v2419 = vpack.c.b16 %v2363, %v2359
  %v2420 = vpack.c.b16 %v2364, %v2360
  %v2421 = vpack.c.b16 %v2369, %v2365
  %v2422 = vpack.c.b16 %v2370, %v2366
  %v2423 = vpack.c.b16 %v2371, %v2367
  %v2424 = vpack.c.b16 %v2372, %v2368
  %v2425 = vpack.c.b16 %v2377, %v2373
  %v2426 = vpack.c.b16 %v2378, %v2374
  %v2427 = vpack.c.b16 %v2379, %v2375
  %v2428 = vpack.c.b16 %v2380, %v2376
  %v2429 = vpack.c.b16 %v2385, %v2381
  %v2430 = vpack.c.b16 %v2386, %v2382
  %v2431 = vpack.c.b16 %v2387, %v2383
  %v2432 = vpack.c.b16 %v2388, %v2384
  %v2433 = vpack.c.b16 %v2393, %v2389
  %v2434 = vpack.c.b16 %v2394, %v2390
  %v2435 = vpack.c.b16 %v2395, %v2391
  %v2436 = vpack.c.b16 %v2396, %v2392
  %v2437 = vpack.c.b16 %v2401, %v2397
  %v2438 = vpack.c.b16 %v2402, %v2398
  %v2439 = vpack.c.b16 %v2403, %v2399
  %v2440 = vpack.c.b16 %v2404, %v2400
  %v2441 = vpack.c.b16 %v2409, %v2405
  %v2442 = vpack.c.b16 %v2410, %v2406
  %v2443 = vpack.c.b16 %v2411, %v2407
  %v2444 = vpack.c.b16 %v2412, %v2408
  %2477 = vmatpush.bf16.msra.mxu0 %v2441
  %2478 = vmatpush.bf16.msra.mxu0 %v2437
  %2479 = vmatpush.bf16.msra.mxu0 %v2433
  %2480 = vmatpush.bf16.msra.mxu0 %v2429
  %2481 = vmatpush.bf16.msra.mxu0 %v2425
  %2482 = vmatpush.bf16.msra.mxu0 %v2421
  %2483 = vmatpush.bf16.msra.mxu0 %v2417
  %2484 = vmatpush.bf16.msra.mxu0 %v2413
  %2485 = vmatmul.bf16.gmra.mxu0 %v1794
  %v2486 = vpop.f32.mrf.mxu0
  %v2487 = vadd.f32 0.0, %v2486
  %v2488 = vpop.f32.mrf.mxu0
  %2489 = vdwg.mxu0
  %2490 = vmatpush.bf16.msra.mxu0 %v2442
  %2491 = vmatpush.bf16.msra.mxu0 %v2438
  %2492 = vmatpush.bf16.msra.mxu0 %v2434
  %2493 = vmatpush.bf16.msra.mxu0 %v2430
  %2494 = vmatpush.bf16.msra.mxu0 %v2426
  %2495 = vmatpush.bf16.msra.mxu0 %v2422
  %2496 = vmatpush.bf16.msra.mxu0 %v2418
  %2497 = vmatpush.bf16.msra.mxu0 %v2414
  %2498 = vmatmul.bf16.gmra.mxu0 %v1794
  %v2499 = vpop.f32.mrf.mxu0
  %v2500 = vadd.f32 0.0, %v2499
  %v2501 = vpop.f32.mrf.mxu0
  %2502 = vdwg.mxu0
  %2503 = vmatpush.bf16.msra.mxu0 %v2443
  %2504 = vmatpush.bf16.msra.mxu0 %v2439
  %2505 = vmatpush.bf16.msra.mxu0 %v2435
  %2506 = vmatpush.bf16.msra.mxu0 %v2431
  %2507 = vmatpush.bf16.msra.mxu0 %v2427
  %2508 = vmatpush.bf16.msra.mxu0 %v2423
  %2509 = vmatpush.bf16.msra.mxu0 %v2419
  %2510 = vmatpush.bf16.msra.mxu0 %v2415
  %2511 = vmatmul.bf16.gmra.mxu0 %v1794
  %v2512 = vpop.f32.mrf.mxu0
  %v2513 = vadd.f32 0.0, %v2512
  %v2514 = vpop.f32.mrf.mxu0
  %2515 = vdwg.mxu0
  %2516 = vmatpush.bf16.msra.mxu0 %v2444
  %2517 = vmatpush.bf16.msra.mxu0 %v2440
  %2518 = vmatpush.bf16.msra.mxu0 %v2436
  %2519 = vmatpush.bf16.msra.mxu0 %v2432
  %2520 = vmatpush.bf16.msra.mxu0 %v2428
  %2521 = vmatpush.bf16.msra.mxu0 %v2424
  %2522 = vmatpush.bf16.msra.mxu0 %v2420
  %2523 = vmatpush.bf16.msra.mxu0 %v2416
  %2524 = vmatmul.bf16.gmra.mxu0 %v1794
  %v2525 = vpop.f32.mrf.mxu0
  %v2526 = vadd.f32 0.0, %v2525
  %v2527 = vpop.f32.mrf.mxu0
  %2528 = vdwg.mxu0
  %v2529 = vld [vmem:[%s7] sm:$0xff]
  %v2530 = vld [vmem:[%s7 + $0x8] sm:$0xff]
  %v2531 = vld [vmem:[%s9] sm:$0xf]
  %v2533 = vperm.slane %v2531, 0
  %v2534 = vperm.slane %v2531, 1
  %v2535 = vperm.slane %v2531, 2
  %v2536 = vperm.slane %v2531, 3
  %vm2541 = vcmask 195584
  %v2543 = vsel %vm2541, %v2529, 0
  %v2546 = vsel %vm2541, %v2530, 0
  %2548 = vmatpush.msra.mxu0 0.0
  %2549 = vmatpush.msra.mxu0 0.0
  %2550 = vmatpush.msra.mxu0 0.0
  %2551 = vmatpush.msra.mxu0 0.0
  %2552 = vmatpush.msra.mxu0 0.0
  %2553 = vmatpush.msra.mxu0 0.0
  %2554 = vmatpush.msra.mxu0 0.0
  %2555 = vmatpush.msra.mxu0 0.0
  %2556 = vmatpush.msra.mxu0 0.0
  %2557 = vmatpush.msra.mxu0 0.0
  %2558 = vmatpush.msra.mxu0 0.0
  %2559 = vmatpush.msra.mxu0 0.0
  %2560 = vmatpush.msra.mxu0 0.0
  %2561 = vmatpush.msra.mxu0 %v2487
  %2562 = vmatpush.msra.mxu0 %v2242
  %2563 = vmatpush.msra.mxu0 %v1997
  %2564 = vmatmul.f32.gmra.mxu0 %v2543
  %v2565 = vpop.f32.mrf.mxu0
  %v2566 = vadd.f32 %v2533, %v2565
  %2567 = vmatmul.f32.gmra.mxu0 %v2546
  %v2568 = vpop.f32.mrf.mxu0
  %v2569 = vadd.f32 %v2533, %v2568
  %2570 = vdwg.mxu0
  %2571 = vmatpush.msra.mxu0 0.0
  %2572 = vmatpush.msra.mxu0 0.0
  %2573 = vmatpush.msra.mxu0 0.0
  %2574 = vmatpush.msra.mxu0 0.0
  %2575 = vmatpush.msra.mxu0 0.0
  %2576 = vmatpush.msra.mxu0 0.0
  %2577 = vmatpush.msra.mxu0 0.0
  %2578 = vmatpush.msra.mxu0 0.0
  %2579 = vmatpush.msra.mxu0 0.0
  %2580 = vmatpush.msra.mxu0 0.0
  %2581 = vmatpush.msra.mxu0 0.0
  %2582 = vmatpush.msra.mxu0 0.0
  %2583 = vmatpush.msra.mxu0 0.0
  %2584 = vmatpush.msra.mxu0 %v2500
  %2585 = vmatpush.msra.mxu0 %v2255
  %2586 = vmatpush.msra.mxu0 %v2010
  %2587 = vmatmul.f32.gmra.mxu0 %v2543
  %v2588 = vpop.f32.mrf.mxu0
  %v2589 = vadd.f32 %v2534, %v2588
  %2590 = vmatmul.f32.gmra.mxu0 %v2546
  %v2591 = vpop.f32.mrf.mxu0
  %v2592 = vadd.f32 %v2534, %v2591
  %2593 = vdwg.mxu0
  %2594 = vmatpush.msra.mxu0 0.0
  %2595 = vmatpush.msra.mxu0 0.0
  %2596 = vmatpush.msra.mxu0 0.0
  %2597 = vmatpush.msra.mxu0 0.0
  %2598 = vmatpush.msra.mxu0 0.0
  %2599 = vmatpush.msra.mxu0 0.0
  %2600 = vmatpush.msra.mxu0 0.0
  %2601 = vmatpush.msra.mxu0 0.0
  %2602 = vmatpush.msra.mxu0 0.0
  %2603 = vmatpush.msra.mxu0 0.0
  %2604 = vmatpush.msra.mxu0 0.0
  %2605 = vmatpush.msra.mxu0 0.0
  %2606 = vmatpush.msra.mxu0 0.0
  %2607 = vmatpush.msra.mxu0 %v2513
  %2608 = vmatpush.msra.mxu0 %v2268
  %2609 = vmatpush.msra.mxu0 %v2023
  %2610 = vmatmul.f32.gmra.mxu0 %v2543
  %v2611 = vpop.f32.mrf.mxu0
  %v2612 = vadd.f32 %v2535, %v2611
  %2613 = vmatmul.f32.gmra.mxu0 %v2546
  %v2614 = vpop.f32.mrf.mxu0
  %v2615 = vadd.f32 %v2535, %v2614
  %2616 = vdwg.mxu0
  %2617 = vmatpush.msra.mxu0 0.0
  %2618 = vmatpush.msra.mxu0 0.0
  %2619 = vmatpush.msra.mxu0 0.0
  %2620 = vmatpush.msra.mxu0 0.0
  %2621 = vmatpush.msra.mxu0 0.0
  %2622 = vmatpush.msra.mxu0 0.0
  %2623 = vmatpush.msra.mxu0 0.0
  %2624 = vmatpush.msra.mxu0 0.0
  %2625 = vmatpush.msra.mxu0 0.0
  %2626 = vmatpush.msra.mxu0 0.0
  %2627 = vmatpush.msra.mxu0 0.0
  %2628 = vmatpush.msra.mxu0 0.0
  %2629 = vmatpush.msra.mxu0 0.0
  %2630 = vmatpush.msra.mxu0 %v2526
  %2631 = vmatpush.msra.mxu0 %v2281
  %2632 = vmatpush.msra.mxu0 %v2036
  %2633 = vmatmul.f32.gmra.mxu0 %v2543
  %v2634 = vpop.f32.mrf.mxu0
  %v2635 = vadd.f32 %v2536, %v2634
  %2636 = vmatmul.f32.gmra.mxu0 %v2546
  %v2637 = vpop.f32.mrf.mxu0
  %v2638 = vadd.f32 %v2536, %v2637
  %2639 = vdwg.mxu0
  %v2640 = vmax.f32 %v2566, 0.0
  %v2641 = vmax.f32 %v2589, 0.0
  %v2642 = vmax.f32 %v2612, 0.0
  %v2643 = vmax.f32 %v2635, 0.0
  %v2644 = vmax.f32 %v2569, 0.0
  %v2645 = vmax.f32 %v2592, 0.0
  %v2646 = vmax.f32 %v2615, 0.0
  %v2647 = vmax.f32 %v2638, 0.0
  %v2648 = vpack.c.bf16 %v2644, %v2640
  %v2649 = vpack.c.bf16 %v2645, %v2641
  %v2650 = vpack.c.bf16 %v2646, %v2642
  %v2651 = vpack.c.bf16 %v2647, %v2643
  %v2652 = vld [vmem:[%s11] sm:$0xf]
  %v2653 = vld [vmem:[%s11 + $0x4] sm:$0xf]
  %v2654 = vld [vmem:[%s11 + $0x8] sm:$0xf]
  %v2655 = vld [vmem:[%s11 + $0xc] sm:$0xf]
  %v2656 = vld [vmem:[%s11 + $0x10] sm:$0xf]
  %v2657 = vld [vmem:[%s11 + $0x14] sm:$0xf]
  %v2658 = vld [vmem:[%s11 + $0x18] sm:$0xf]
  %v2659 = vld [vmem:[%s11 + $0x1c] sm:$0xf]
  %v2660 = vld [vmem:[%s11 + $0x20] sm:$0xf]
  %v2661 = vld [vmem:[%s11 + $0x24] sm:$0xf]
  %v2662 = vld [vmem:[%s11 + $0x28] sm:$0xf]
  %v2663 = vld [vmem:[%s11 + $0x2c] sm:$0xf]
  %v2664 = vld [vmem:[%s11 + $0x30] sm:$0xf]
  %v2665 = vld [vmem:[%s11 + $0x34] sm:$0xf]
  %v2666 = vld [vmem:[%s11 + $0x38] sm:$0xf]
  %v2667 = vld [vmem:[%s11 + $0x3c] sm:$0xf]
  %v2668 = vld [vmem:[%s11 + $0x40] sm:$0xf]
  %v2669 = vld [vmem:[%s11 + $0x44] sm:$0xf]
  %v2670 = vld [vmem:[%s11 + $0x48] sm:$0xf]
  %v2671 = vld [vmem:[%s11 + $0x4c] sm:$0xf]
  %v2672 = vld [vmem:[%s11 + $0x50] sm:$0xf]
  %v2673 = vld [vmem:[%s11 + $0x54] sm:$0xf]
  %v2674 = vld [vmem:[%s11 + $0x58] sm:$0xf]
  %v2675 = vld [vmem:[%s11 + $0x5c] sm:$0xf]
  %v2676 = vld [vmem:[%s11 + $0x60] sm:$0xf]
  %v2677 = vld [vmem:[%s11 + $0x64] sm:$0xf]
  %v2678 = vld [vmem:[%s11 + $0x68] sm:$0xf]
  %v2679 = vld [vmem:[%s11 + $0x6c] sm:$0xf]
  %v2680 = vld [vmem:[%s11 + $0x70] sm:$0xf]
  %v2681 = vld [vmem:[%s11 + $0x74] sm:$0xf]
  %v2682 = vld [vmem:[%s11 + $0x78] sm:$0xf]
  %v2683 = vld [vmem:[%s11 + $0x7c] sm:$0xf]
  %v2684 = vld [vmem:[%s11 + $0x80] sm:$0xf]
  %v2685 = vld [vmem:[%s11 + $0x84] sm:$0xf]
  %v2686 = vld [vmem:[%s11 + $0x88] sm:$0xf]
  %v2687 = vld [vmem:[%s11 + $0x8c] sm:$0xf]
  %v2688 = vld [vmem:[%s11 + $0x90] sm:$0xf]
  %v2689 = vld [vmem:[%s11 + $0x94] sm:$0xf]
  %v2690 = vld [vmem:[%s11 + $0x98] sm:$0xf]
  %v2691 = vld [vmem:[%s11 + $0x9c] sm:$0xf]
  %v2692 = vld [vmem:[%s11 + $0xa0] sm:$0xf]
  %v2693 = vld [vmem:[%s11 + $0xa4] sm:$0xf]
  %v2694 = vld [vmem:[%s11 + $0xa8] sm:$0xf]
  %v2695 = vld [vmem:[%s11 + $0xac] sm:$0xf]
  %v2696 = vld [vmem:[%s11 + $0xb0] sm:$0xf]
  %v2697 = vld [vmem:[%s11 + $0xb4] sm:$0xf]
  %v2698 = vld [vmem:[%s11 + $0xb8] sm:$0xf]
  %v2699 = vld [vmem:[%s11 + $0xbc] sm:$0xf]
  %v2700 = vld [vmem:[%s11 + $0xc0] sm:$0xf]
  %v2701 = vld [vmem:[%s11 + $0xc4] sm:$0xf]
  %v2702 = vld [vmem:[%s11 + $0xc8] sm:$0xf]
  %v2703 = vld [vmem:[%s11 + $0xcc] sm:$0xf]
  %v2704 = vld [vmem:[%s11 + $0xd0] sm:$0xf]
  %v2705 = vld [vmem:[%s11 + $0xd4] sm:$0xf]
  %v2706 = vld [vmem:[%s11 + $0xd8] sm:$0xf]
  %v2707 = vld [vmem:[%s11 + $0xdc] sm:$0xf]
  %v2708 = vld [vmem:[%s11 + $0xe0] sm:$0xf]
  %v2709 = vld [vmem:[%s11 + $0xe4] sm:$0xf]
  %v2710 = vld [vmem:[%s11 + $0xe8] sm:$0xf]
  %v2711 = vld [vmem:[%s11 + $0xec] sm:$0xf]
  %v2712 = vld [vmem:[%s11 + $0xf0] sm:$0xf]
  %v2713 = vld [vmem:[%s11 + $0xf4] sm:$0xf]
  %v2714 = vld [vmem:[%s11 + $0xf8] sm:$0xf]
  %v2715 = vld [vmem:[%s11 + $0xfc] sm:$0xf]
  %v2780 = vunpack.c.l.b16 %v2652
  %v2781 = vunpack.c.l.b16 %v2653
  %v2782 = vunpack.c.l.b16 %v2654
  %v2783 = vunpack.c.l.b16 %v2655
  %v2784 = vunpack.c.l.b16 %v2656
  %v2785 = vunpack.c.l.b16 %v2657
  %v2786 = vunpack.c.l.b16 %v2658
  %v2787 = vunpack.c.l.b16 %v2659
  %v2788 = vunpack.c.l.b16 %v2660
  %v2789 = vunpack.c.l.b16 %v2661
  %v2790 = vunpack.c.l.b16 %v2662
  %v2791 = vunpack.c.l.b16 %v2663
  %v2792 = vunpack.c.l.b16 %v2664
  %v2793 = vunpack.c.l.b16 %v2665
  %v2794 = vunpack.c.l.b16 %v2666
  %v2795 = vunpack.c.l.b16 %v2667
  %v2796 = vunpack.c.l.b16 %v2668
  %v2797 = vunpack.c.l.b16 %v2669
  %v2798 = vunpack.c.l.b16 %v2670
  %v2799 = vunpack.c.l.b16 %v2671
  %v2800 = vunpack.c.l.b16 %v2672
  %v2801 = vunpack.c.l.b16 %v2673
  %v2802 = vunpack.c.l.b16 %v2674
  %v2803 = vunpack.c.l.b16 %v2675
  %v2804 = vunpack.c.l.b16 %v2676
  %v2805 = vunpack.c.l.b16 %v2677
  %v2806 = vunpack.c.l.b16 %v2678
  %v2807 = vunpack.c.l.b16 %v2679
  %v2808 = vunpack.c.l.b16 %v2680
  %v2809 = vunpack.c.l.b16 %v2681
  %v2810 = vunpack.c.l.b16 %v2682
  %v2811 = vunpack.c.l.b16 %v2683
  %v2812 = vunpack.c.l.b16 %v2684
  %v2813 = vunpack.c.l.b16 %v2685
  %v2814 = vunpack.c.l.b16 %v2686
  %v2815 = vunpack.c.l.b16 %v2687
  %v2816 = vunpack.c.l.b16 %v2688
  %v2817 = vunpack.c.l.b16 %v2689
  %v2818 = vunpack.c.l.b16 %v2690
  %v2819 = vunpack.c.l.b16 %v2691
  %v2820 = vunpack.c.l.b16 %v2692
  %v2821 = vunpack.c.l.b16 %v2693
  %v2822 = vunpack.c.l.b16 %v2694
  %v2823 = vunpack.c.l.b16 %v2695
  %v2824 = vunpack.c.l.b16 %v2696
  %v2825 = vunpack.c.l.b16 %v2697
  %v2826 = vunpack.c.l.b16 %v2698
  %v2827 = vunpack.c.l.b16 %v2699
  %v2828 = vunpack.c.l.b16 %v2700
  %v2829 = vunpack.c.l.b16 %v2701
  %v2830 = vunpack.c.l.b16 %v2702
  %v2831 = vunpack.c.l.b16 %v2703
  %v2832 = vunpack.c.l.b16 %v2704
  %v2833 = vunpack.c.l.b16 %v2705
  %v2834 = vunpack.c.l.b16 %v2706
  %v2835 = vunpack.c.l.b16 %v2707
  %v2836 = vunpack.c.l.b16 %v2708
  %v2837 = vunpack.c.l.b16 %v2709
  %v2838 = vunpack.c.l.b16 %v2710
  %v2839 = vunpack.c.l.b16 %v2711
  %v2840 = vunpack.c.l.b16 %v2712
  %v2841 = vunpack.c.l.b16 %v2713
  %v2842 = vunpack.c.l.b16 %v2714
  %v2843 = vunpack.c.l.b16 %v2715
  %v2844 = vpack.c.b16 %v2781, %v2780
  %v2845 = vpack.c.b16 %v2783, %v2782
  %v2846 = vpack.c.b16 %v2785, %v2784
  %v2847 = vpack.c.b16 %v2787, %v2786
  %v2848 = vpack.c.b16 %v2789, %v2788
  %v2849 = vpack.c.b16 %v2791, %v2790
  %v2850 = vpack.c.b16 %v2793, %v2792
  %v2851 = vpack.c.b16 %v2795, %v2794
  %v2852 = vpack.c.b16 %v2797, %v2796
  %v2853 = vpack.c.b16 %v2799, %v2798
  %v2854 = vpack.c.b16 %v2801, %v2800
  %v2855 = vpack.c.b16 %v2803, %v2802
  %v2856 = vpack.c.b16 %v2805, %v2804
  %v2857 = vpack.c.b16 %v2807, %v2806
  %v2858 = vpack.c.b16 %v2809, %v2808
  %v2859 = vpack.c.b16 %v2811, %v2810
  %v2860 = vpack.c.b16 %v2813, %v2812
  %v2861 = vpack.c.b16 %v2815, %v2814
  %v2862 = vpack.c.b16 %v2817, %v2816
  %v2863 = vpack.c.b16 %v2819, %v2818
  %v2864 = vpack.c.b16 %v2821, %v2820
  %v2865 = vpack.c.b16 %v2823, %v2822
  %v2866 = vpack.c.b16 %v2825, %v2824
  %v2867 = vpack.c.b16 %v2827, %v2826
  %v2868 = vpack.c.b16 %v2829, %v2828
  %v2869 = vpack.c.b16 %v2831, %v2830
  %v2870 = vpack.c.b16 %v2833, %v2832
  %v2871 = vpack.c.b16 %v2835, %v2834
  %v2872 = vpack.c.b16 %v2837, %v2836
  %v2873 = vpack.c.b16 %v2839, %v2838
  %v2874 = vpack.c.b16 %v2841, %v2840
  %v2875 = vpack.c.b16 %v2843, %v2842
  %2908 = vmatpush.bf16.msra.mxu0 %v2851
  %2909 = vmatpush.bf16.msra.mxu0 %v2850
  %2910 = vmatpush.bf16.msra.mxu0 %v2849
  %2911 = vmatpush.bf16.msra.mxu0 %v2848
  %2912 = vmatpush.bf16.msra.mxu0 %v2847
  %2913 = vmatpush.bf16.msra.mxu0 %v2846
  %2914 = vmatpush.bf16.msra.mxu0 %v2845
  %2915 = vmatpush.bf16.msra.mxu0 %v2844
  %2916 = vmatmul.bf16.gmra.mxu0 %v2648
  %v2917 = vpop.f32.mrf.mxu0
  %v2918 = vadd.f32 0.0, %v2917
  %v2919 = vpop.f32.mrf.mxu0
  %v2920 = vadd.f32 0.0, %v2919
  %2921 = vdwg.mxu0
  %2922 = vmatpush.bf16.msra.mxu0 %v2859
  %2923 = vmatpush.bf16.msra.mxu0 %v2858
  %2924 = vmatpush.bf16.msra.mxu0 %v2857
  %2925 = vmatpush.bf16.msra.mxu0 %v2856
  %2926 = vmatpush.bf16.msra.mxu0 %v2855
  %2927 = vmatpush.bf16.msra.mxu0 %v2854
  %2928 = vmatpush.bf16.msra.mxu0 %v2853
  %2929 = vmatpush.bf16.msra.mxu0 %v2852
  %2930 = vmatmul.bf16.gmra.mxu0 %v2649
  %v2931 = vpop.f32.mrf.mxu0
  %v2932 = vadd.f32 %v2918, %v2931
  %v2933 = vpop.f32.mrf.mxu0
  %v2934 = vadd.f32 %v2920, %v2933
  %2935 = vdwg.mxu0
  %2936 = vmatpush.bf16.msra.mxu0 %v2867
  %2937 = vmatpush.bf16.msra.mxu0 %v2866
  %2938 = vmatpush.bf16.msra.mxu0 %v2865
  %2939 = vmatpush.bf16.msra.mxu0 %v2864
  %2940 = vmatpush.bf16.msra.mxu0 %v2863
  %2941 = vmatpush.bf16.msra.mxu0 %v2862
  %2942 = vmatpush.bf16.msra.mxu0 %v2861
  %2943 = vmatpush.bf16.msra.mxu0 %v2860
  %2944 = vmatmul.bf16.gmra.mxu0 %v2650
  %v2945 = vpop.f32.mrf.mxu0
  %v2946 = vadd.f32 %v2932, %v2945
  %v2947 = vpop.f32.mrf.mxu0
  %v2948 = vadd.f32 %v2934, %v2947
  %2949 = vdwg.mxu0
  %2950 = vmatpush.bf16.msra.mxu0 %v2875
  %2951 = vmatpush.bf16.msra.mxu0 %v2874
  %2952 = vmatpush.bf16.msra.mxu0 %v2873
  %2953 = vmatpush.bf16.msra.mxu0 %v2872
  %2954 = vmatpush.bf16.msra.mxu0 %v2871
  %2955 = vmatpush.bf16.msra.mxu0 %v2870
  %2956 = vmatpush.bf16.msra.mxu0 %v2869
  %2957 = vmatpush.bf16.msra.mxu0 %v2868
  %2958 = vmatmul.bf16.gmra.mxu0 %v2651
  %v2959 = vpop.f32.mrf.mxu0
  %v2960 = vadd.f32 %v2946, %v2959
  %v2961 = vpop.f32.mrf.mxu0
  %v2962 = vadd.f32 %v2948, %v2961
  %2963 = vdwg.mxu0
  %s2964 = scalar_lea.vmem %s11, 256
  %v2965 = vld [vmem:[%s2964] sm:$0xf]
  %v2966 = vld [vmem:[%s2964 + $0x4] sm:$0xf]
  %v2967 = vld [vmem:[%s2964 + $0x8] sm:$0xf]
  %v2968 = vld [vmem:[%s2964 + $0xc] sm:$0xf]
  %v2969 = vld [vmem:[%s2964 + $0x10] sm:$0xf]
  %v2970 = vld [vmem:[%s2964 + $0x14] sm:$0xf]
  %v2971 = vld [vmem:[%s2964 + $0x18] sm:$0xf]
  %v2972 = vld [vmem:[%s2964 + $0x1c] sm:$0xf]
  %v2973 = vld [vmem:[%s2964 + $0x20] sm:$0xf]
  %v2974 = vld [vmem:[%s2964 + $0x24] sm:$0xf]
  %v2975 = vld [vmem:[%s2964 + $0x28] sm:$0xf]
  %v2976 = vld [vmem:[%s2964 + $0x2c] sm:$0xf]
  %v2977 = vld [vmem:[%s2964 + $0x30] sm:$0xf]
  %v2978 = vld [vmem:[%s2964 + $0x34] sm:$0xf]
  %v2979 = vld [vmem:[%s2964 + $0x38] sm:$0xf]
  %v2980 = vld [vmem:[%s2964 + $0x3c] sm:$0xf]
  %v2981 = vld [vmem:[%s2964 + $0x40] sm:$0xf]
  %v2982 = vld [vmem:[%s2964 + $0x44] sm:$0xf]
  %v2983 = vld [vmem:[%s2964 + $0x48] sm:$0xf]
  %v2984 = vld [vmem:[%s2964 + $0x4c] sm:$0xf]
  %v2985 = vld [vmem:[%s2964 + $0x50] sm:$0xf]
  %v2986 = vld [vmem:[%s2964 + $0x54] sm:$0xf]
  %v2987 = vld [vmem:[%s2964 + $0x58] sm:$0xf]
  %v2988 = vld [vmem:[%s2964 + $0x5c] sm:$0xf]
  %v2989 = vld [vmem:[%s2964 + $0x60] sm:$0xf]
  %v2990 = vld [vmem:[%s2964 + $0x64] sm:$0xf]
  %v2991 = vld [vmem:[%s2964 + $0x68] sm:$0xf]
  %v2992 = vld [vmem:[%s2964 + $0x6c] sm:$0xf]
  %v2993 = vld [vmem:[%s2964 + $0x70] sm:$0xf]
  %v2994 = vld [vmem:[%s2964 + $0x74] sm:$0xf]
  %v2995 = vld [vmem:[%s2964 + $0x78] sm:$0xf]
  %v2996 = vld [vmem:[%s2964 + $0x7c] sm:$0xf]
  %v2997 = vld [vmem:[%s2964 + $0x80] sm:$0xf]
  %v2998 = vld [vmem:[%s2964 + $0x84] sm:$0xf]
  %v2999 = vld [vmem:[%s2964 + $0x88] sm:$0xf]
  %v3000 = vld [vmem:[%s2964 + $0x8c] sm:$0xf]
  %v3001 = vld [vmem:[%s2964 + $0x90] sm:$0xf]
  %v3002 = vld [vmem:[%s2964 + $0x94] sm:$0xf]
  %v3003 = vld [vmem:[%s2964 + $0x98] sm:$0xf]
  %v3004 = vld [vmem:[%s2964 + $0x9c] sm:$0xf]
  %v3005 = vld [vmem:[%s2964 + $0xa0] sm:$0xf]
  %v3006 = vld [vmem:[%s2964 + $0xa4] sm:$0xf]
  %v3007 = vld [vmem:[%s2964 + $0xa8] sm:$0xf]
  %v3008 = vld [vmem:[%s2964 + $0xac] sm:$0xf]
  %v3009 = vld [vmem:[%s2964 + $0xb0] sm:$0xf]
  %v3010 = vld [vmem:[%s2964 + $0xb4] sm:$0xf]
  %v3011 = vld [vmem:[%s2964 + $0xb8] sm:$0xf]
  %v3012 = vld [vmem:[%s2964 + $0xbc] sm:$0xf]
  %v3013 = vld [vmem:[%s2964 + $0xc0] sm:$0xf]
  %v3014 = vld [vmem:[%s2964 + $0xc4] sm:$0xf]
  %v3015 = vld [vmem:[%s2964 + $0xc8] sm:$0xf]
  %v3016 = vld [vmem:[%s2964 + $0xcc] sm:$0xf]
  %v3017 = vld [vmem:[%s2964 + $0xd0] sm:$0xf]
  %v3018 = vld [vmem:[%s2964 + $0xd4] sm:$0xf]
  %v3019 = vld [vmem:[%s2964 + $0xd8] sm:$0xf]
  %v3020 = vld [vmem:[%s2964 + $0xdc] sm:$0xf]
  %v3021 = vld [vmem:[%s2964 + $0xe0] sm:$0xf]
  %v3022 = vld [vmem:[%s2964 + $0xe4] sm:$0xf]
  %v3023 = vld [vmem:[%s2964 + $0xe8] sm:$0xf]
  %v3024 = vld [vmem:[%s2964 + $0xec] sm:$0xf]
  %v3025 = vld [vmem:[%s2964 + $0xf0] sm:$0xf]
  %v3026 = vld [vmem:[%s2964 + $0xf4] sm:$0xf]
  %v3027 = vld [vmem:[%s2964 + $0xf8] sm:$0xf]
  %v3028 = vld [vmem:[%s2964 + $0xfc] sm:$0xf]
  %v3093 = vunpack.c.l.b16 %v2965
  %v3094 = vunpack.c.l.b16 %v2966
  %v3095 = vunpack.c.l.b16 %v2967
  %v3096 = vunpack.c.l.b16 %v2968
  %v3097 = vunpack.c.l.b16 %v2969
  %v3098 = vunpack.c.l.b16 %v2970
  %v3099 = vunpack.c.l.b16 %v2971
  %v3100 = vunpack.c.l.b16 %v2972
  %v3101 = vunpack.c.l.b16 %v2973
  %v3102 = vunpack.c.l.b16 %v2974
  %v3103 = vunpack.c.l.b16 %v2975
  %v3104 = vunpack.c.l.b16 %v2976
  %v3105 = vunpack.c.l.b16 %v2977
  %v3106 = vunpack.c.l.b16 %v2978
  %v3107 = vunpack.c.l.b16 %v2979
  %v3108 = vunpack.c.l.b16 %v2980
  %v3109 = vunpack.c.l.b16 %v2981
  %v3110 = vunpack.c.l.b16 %v2982
  %v3111 = vunpack.c.l.b16 %v2983
  %v3112 = vunpack.c.l.b16 %v2984
  %v3113 = vunpack.c.l.b16 %v2985
  %v3114 = vunpack.c.l.b16 %v2986
  %v3115 = vunpack.c.l.b16 %v2987
  %v3116 = vunpack.c.l.b16 %v2988
  %v3117 = vunpack.c.l.b16 %v2989
  %v3118 = vunpack.c.l.b16 %v2990
  %v3119 = vunpack.c.l.b16 %v2991
  %v3120 = vunpack.c.l.b16 %v2992
  %v3121 = vunpack.c.l.b16 %v2993
  %v3122 = vunpack.c.l.b16 %v2994
  %v3123 = vunpack.c.l.b16 %v2995
  %v3124 = vunpack.c.l.b16 %v2996
  %v3125 = vunpack.c.l.b16 %v2997
  %v3126 = vunpack.c.l.b16 %v2998
  %v3127 = vunpack.c.l.b16 %v2999
  %v3128 = vunpack.c.l.b16 %v3000
  %v3129 = vunpack.c.l.b16 %v3001
  %v3130 = vunpack.c.l.b16 %v3002
  %v3131 = vunpack.c.l.b16 %v3003
  %v3132 = vunpack.c.l.b16 %v3004
  %v3133 = vunpack.c.l.b16 %v3005
  %v3134 = vunpack.c.l.b16 %v3006
  %v3135 = vunpack.c.l.b16 %v3007
  %v3136 = vunpack.c.l.b16 %v3008
  %v3137 = vunpack.c.l.b16 %v3009
  %v3138 = vunpack.c.l.b16 %v3010
  %v3139 = vunpack.c.l.b16 %v3011
  %v3140 = vunpack.c.l.b16 %v3012
  %v3141 = vunpack.c.l.b16 %v3013
  %v3142 = vunpack.c.l.b16 %v3014
  %v3143 = vunpack.c.l.b16 %v3015
  %v3144 = vunpack.c.l.b16 %v3016
  %v3145 = vunpack.c.l.b16 %v3017
  %v3146 = vunpack.c.l.b16 %v3018
  %v3147 = vunpack.c.l.b16 %v3019
  %v3148 = vunpack.c.l.b16 %v3020
  %v3149 = vunpack.c.l.b16 %v3021
  %v3150 = vunpack.c.l.b16 %v3022
  %v3151 = vunpack.c.l.b16 %v3023
  %v3152 = vunpack.c.l.b16 %v3024
  %v3153 = vunpack.c.l.b16 %v3025
  %v3154 = vunpack.c.l.b16 %v3026
  %v3155 = vunpack.c.l.b16 %v3027
  %v3156 = vunpack.c.l.b16 %v3028
  %v3157 = vpack.c.b16 %v3094, %v3093
  %v3158 = vpack.c.b16 %v3096, %v3095
  %v3159 = vpack.c.b16 %v3098, %v3097
  %v3160 = vpack.c.b16 %v3100, %v3099
  %v3161 = vpack.c.b16 %v3102, %v3101
  %v3162 = vpack.c.b16 %v3104, %v3103
  %v3163 = vpack.c.b16 %v3106, %v3105
  %v3164 = vpack.c.b16 %v3108, %v3107
  %v3165 = vpack.c.b16 %v3110, %v3109
  %v3166 = vpack.c.b16 %v3112, %v3111
  %v3167 = vpack.c.b16 %v3114, %v3113
  %v3168 = vpack.c.b16 %v3116, %v3115
  %v3169 = vpack.c.b16 %v3118, %v3117
  %v3170 = vpack.c.b16 %v3120, %v3119
  %v3171 = vpack.c.b16 %v3122, %v3121
  %v3172 = vpack.c.b16 %v3124, %v3123
  %v3173 = vpack.c.b16 %v3126, %v3125
  %v3174 = vpack.c.b16 %v3128, %v3127
  %v3175 = vpack.c.b16 %v3130, %v3129
  %v3176 = vpack.c.b16 %v3132, %v3131
  %v3177 = vpack.c.b16 %v3134, %v3133
  %v3178 = vpack.c.b16 %v3136, %v3135
  %v3179 = vpack.c.b16 %v3138, %v3137
  %v3180 = vpack.c.b16 %v3140, %v3139
  %v3181 = vpack.c.b16 %v3142, %v3141
  %v3182 = vpack.c.b16 %v3144, %v3143
  %v3183 = vpack.c.b16 %v3146, %v3145
  %v3184 = vpack.c.b16 %v3148, %v3147
  %v3185 = vpack.c.b16 %v3150, %v3149
  %v3186 = vpack.c.b16 %v3152, %v3151
  %v3187 = vpack.c.b16 %v3154, %v3153
  %v3188 = vpack.c.b16 %v3156, %v3155
  %3221 = vmatpush.bf16.msra.mxu0 %v3164
  %3222 = vmatpush.bf16.msra.mxu0 %v3163
  %3223 = vmatpush.bf16.msra.mxu0 %v3162
  %3224 = vmatpush.bf16.msra.mxu0 %v3161
  %3225 = vmatpush.bf16.msra.mxu0 %v3160
  %3226 = vmatpush.bf16.msra.mxu0 %v3159
  %3227 = vmatpush.bf16.msra.mxu0 %v3158
  %3228 = vmatpush.bf16.msra.mxu0 %v3157
  %3229 = vmatmul.bf16.gmra.mxu0 %v2648
  %v3230 = vpop.f32.mrf.mxu0
  %v3231 = vadd.f32 0.0, %v3230
  %v3232 = vpop.f32.mrf.mxu0
  %v3233 = vadd.f32 0.0, %v3232
  %3234 = vdwg.mxu0
  %3235 = vmatpush.bf16.msra.mxu0 %v3172
  %3236 = vmatpush.bf16.msra.mxu0 %v3171
  %3237 = vmatpush.bf16.msra.mxu0 %v3170
  %3238 = vmatpush.bf16.msra.mxu0 %v3169
  %3239 = vmatpush.bf16.msra.mxu0 %v3168
  %3240 = vmatpush.bf16.msra.mxu0 %v3167
  %3241 = vmatpush.bf16.msra.mxu0 %v3166
  %3242 = vmatpush.bf16.msra.mxu0 %v3165
  %3243 = vmatmul.bf16.gmra.mxu0 %v2649
  %v3244 = vpop.f32.mrf.mxu0
  %v3245 = vadd.f32 %v3231, %v3244
  %v3246 = vpop.f32.mrf.mxu0
  %v3247 = vadd.f32 %v3233, %v3246
  %3248 = vdwg.mxu0
  %3249 = vmatpush.bf16.msra.mxu0 %v3180
  %3250 = vmatpush.bf16.msra.mxu0 %v3179
  %3251 = vmatpush.bf16.msra.mxu0 %v3178
  %3252 = vmatpush.bf16.msra.mxu0 %v3177
  %3253 = vmatpush.bf16.msra.mxu0 %v3176
  %3254 = vmatpush.bf16.msra.mxu0 %v3175
  %3255 = vmatpush.bf16.msra.mxu0 %v3174
  %3256 = vmatpush.bf16.msra.mxu0 %v3173
  %3257 = vmatmul.bf16.gmra.mxu0 %v2650
  %v3258 = vpop.f32.mrf.mxu0
  %v3259 = vadd.f32 %v3245, %v3258
  %v3260 = vpop.f32.mrf.mxu0
  %v3261 = vadd.f32 %v3247, %v3260
  %3262 = vdwg.mxu0
  %3263 = vmatpush.bf16.msra.mxu0 %v3188
  %3264 = vmatpush.bf16.msra.mxu0 %v3187
  %3265 = vmatpush.bf16.msra.mxu0 %v3186
  %3266 = vmatpush.bf16.msra.mxu0 %v3185
  %3267 = vmatpush.bf16.msra.mxu0 %v3184
  %3268 = vmatpush.bf16.msra.mxu0 %v3183
  %3269 = vmatpush.bf16.msra.mxu0 %v3182
  %3270 = vmatpush.bf16.msra.mxu0 %v3181
  %3271 = vmatmul.bf16.gmra.mxu0 %v2651
  %v3272 = vpop.f32.mrf.mxu0
  %v3273 = vadd.f32 %v3259, %v3272
  %v3274 = vpop.f32.mrf.mxu0
  %v3275 = vadd.f32 %v3261, %v3274
  %3276 = vdwg.mxu0
  %s3277 = scalar_lea.vmem %s11, 512
  %v3278 = vld [vmem:[%s3277] sm:$0xf]
  %v3279 = vld [vmem:[%s3277 + $0x4] sm:$0xf]
  %v3280 = vld [vmem:[%s3277 + $0x8] sm:$0xf]
  %v3281 = vld [vmem:[%s3277 + $0xc] sm:$0xf]
  %v3282 = vld [vmem:[%s3277 + $0x10] sm:$0xf]
  %v3283 = vld [vmem:[%s3277 + $0x14] sm:$0xf]
  %v3284 = vld [vmem:[%s3277 + $0x18] sm:$0xf]
  %v3285 = vld [vmem:[%s3277 + $0x1c] sm:$0xf]
  %v3286 = vld [vmem:[%s3277 + $0x20] sm:$0xf]
  %v3287 = vld [vmem:[%s3277 + $0x24] sm:$0xf]
  %v3288 = vld [vmem:[%s3277 + $0x28] sm:$0xf]
  %v3289 = vld [vmem:[%s3277 + $0x2c] sm:$0xf]
  %v3290 = vld [vmem:[%s3277 + $0x30] sm:$0xf]
  %v3291 = vld [vmem:[%s3277 + $0x34] sm:$0xf]
  %v3292 = vld [vmem:[%s3277 + $0x38] sm:$0xf]
  %v3293 = vld [vmem:[%s3277 + $0x3c] sm:$0xf]
  %v3294 = vld [vmem:[%s3277 + $0x40] sm:$0xf]
  %v3295 = vld [vmem:[%s3277 + $0x44] sm:$0xf]
  %v3296 = vld [vmem:[%s3277 + $0x48] sm:$0xf]
  %v3297 = vld [vmem:[%s3277 + $0x4c] sm:$0xf]
  %v3298 = vld [vmem:[%s3277 + $0x50] sm:$0xf]
  %v3299 = vld [vmem:[%s3277 + $0x54] sm:$0xf]
  %v3300 = vld [vmem:[%s3277 + $0x58] sm:$0xf]
  %v3301 = vld [vmem:[%s3277 + $0x5c] sm:$0xf]
  %v3302 = vld [vmem:[%s3277 + $0x60] sm:$0xf]
  %v3303 = vld [vmem:[%s3277 + $0x64] sm:$0xf]
  %v3304 = vld [vmem:[%s3277 + $0x68] sm:$0xf]
  %v3305 = vld [vmem:[%s3277 + $0x6c] sm:$0xf]
  %v3306 = vld [vmem:[%s3277 + $0x70] sm:$0xf]
  %v3307 = vld [vmem:[%s3277 + $0x74] sm:$0xf]
  %v3308 = vld [vmem:[%s3277 + $0x78] sm:$0xf]
  %v3309 = vld [vmem:[%s3277 + $0x7c] sm:$0xf]
  %v3310 = vld [vmem:[%s3277 + $0x80] sm:$0xf]
  %v3311 = vld [vmem:[%s3277 + $0x84] sm:$0xf]
  %v3312 = vld [vmem:[%s3277 + $0x88] sm:$0xf]
  %v3313 = vld [vmem:[%s3277 + $0x8c] sm:$0xf]
  %v3314 = vld [vmem:[%s3277 + $0x90] sm:$0xf]
  %v3315 = vld [vmem:[%s3277 + $0x94] sm:$0xf]
  %v3316 = vld [vmem:[%s3277 + $0x98] sm:$0xf]
  %v3317 = vld [vmem:[%s3277 + $0x9c] sm:$0xf]
  %v3318 = vld [vmem:[%s3277 + $0xa0] sm:$0xf]
  %v3319 = vld [vmem:[%s3277 + $0xa4] sm:$0xf]
  %v3320 = vld [vmem:[%s3277 + $0xa8] sm:$0xf]
  %v3321 = vld [vmem:[%s3277 + $0xac] sm:$0xf]
  %v3322 = vld [vmem:[%s3277 + $0xb0] sm:$0xf]
  %v3323 = vld [vmem:[%s3277 + $0xb4] sm:$0xf]
  %v3324 = vld [vmem:[%s3277 + $0xb8] sm:$0xf]
  %v3325 = vld [vmem:[%s3277 + $0xbc] sm:$0xf]
  %v3326 = vld [vmem:[%s3277 + $0xc0] sm:$0xf]
  %v3327 = vld [vmem:[%s3277 + $0xc4] sm:$0xf]
  %v3328 = vld [vmem:[%s3277 + $0xc8] sm:$0xf]
  %v3329 = vld [vmem:[%s3277 + $0xcc] sm:$0xf]
  %v3330 = vld [vmem:[%s3277 + $0xd0] sm:$0xf]
  %v3331 = vld [vmem:[%s3277 + $0xd4] sm:$0xf]
  %v3332 = vld [vmem:[%s3277 + $0xd8] sm:$0xf]
  %v3333 = vld [vmem:[%s3277 + $0xdc] sm:$0xf]
  %v3334 = vld [vmem:[%s3277 + $0xe0] sm:$0xf]
  %v3335 = vld [vmem:[%s3277 + $0xe4] sm:$0xf]
  %v3336 = vld [vmem:[%s3277 + $0xe8] sm:$0xf]
  %v3337 = vld [vmem:[%s3277 + $0xec] sm:$0xf]
  %v3338 = vld [vmem:[%s3277 + $0xf0] sm:$0xf]
  %v3339 = vld [vmem:[%s3277 + $0xf4] sm:$0xf]
  %v3340 = vld [vmem:[%s3277 + $0xf8] sm:$0xf]
  %v3341 = vld [vmem:[%s3277 + $0xfc] sm:$0xf]
  %v3406 = vunpack.c.l.b16 %v3278
  %v3407 = vunpack.c.l.b16 %v3279
  %v3408 = vunpack.c.l.b16 %v3280
  %v3409 = vunpack.c.l.b16 %v3281
  %v3410 = vunpack.c.l.b16 %v3282
  %v3411 = vunpack.c.l.b16 %v3283
  %v3412 = vunpack.c.l.b16 %v3284
  %v3413 = vunpack.c.l.b16 %v3285
  %v3414 = vunpack.c.l.b16 %v3286
  %v3415 = vunpack.c.l.b16 %v3287
  %v3416 = vunpack.c.l.b16 %v3288
  %v3417 = vunpack.c.l.b16 %v3289
  %v3418 = vunpack.c.l.b16 %v3290
  %v3419 = vunpack.c.l.b16 %v3291
  %v3420 = vunpack.c.l.b16 %v3292
  %v3421 = vunpack.c.l.b16 %v3293
  %v3422 = vunpack.c.l.b16 %v3294
  %v3423 = vunpack.c.l.b16 %v3295
  %v3424 = vunpack.c.l.b16 %v3296
  %v3425 = vunpack.c.l.b16 %v3297
  %v3426 = vunpack.c.l.b16 %v3298
  %v3427 = vunpack.c.l.b16 %v3299
  %v3428 = vunpack.c.l.b16 %v3300
  %v3429 = vunpack.c.l.b16 %v3301
  %v3430 = vunpack.c.l.b16 %v3302
  %v3431 = vunpack.c.l.b16 %v3303
  %v3432 = vunpack.c.l.b16 %v3304
  %v3433 = vunpack.c.l.b16 %v3305
  %v3434 = vunpack.c.l.b16 %v3306
  %v3435 = vunpack.c.l.b16 %v3307
  %v3436 = vunpack.c.l.b16 %v3308
  %v3437 = vunpack.c.l.b16 %v3309
  %v3438 = vunpack.c.l.b16 %v3310
  %v3439 = vunpack.c.l.b16 %v3311
  %v3440 = vunpack.c.l.b16 %v3312
  %v3441 = vunpack.c.l.b16 %v3313
  %v3442 = vunpack.c.l.b16 %v3314
  %v3443 = vunpack.c.l.b16 %v3315
  %v3444 = vunpack.c.l.b16 %v3316
  %v3445 = vunpack.c.l.b16 %v3317
  %v3446 = vunpack.c.l.b16 %v3318
  %v3447 = vunpack.c.l.b16 %v3319
  %v3448 = vunpack.c.l.b16 %v3320
  %v3449 = vunpack.c.l.b16 %v3321
  %v3450 = vunpack.c.l.b16 %v3322
  %v3451 = vunpack.c.l.b16 %v3323
  %v3452 = vunpack.c.l.b16 %v3324
  %v3453 = vunpack.c.l.b16 %v3325
  %v3454 = vunpack.c.l.b16 %v3326
  %v3455 = vunpack.c.l.b16 %v3327
  %v3456 = vunpack.c.l.b16 %v3328
  %v3457 = vunpack.c.l.b16 %v3329
  %v3458 = vunpack.c.l.b16 %v3330
  %v3459 = vunpack.c.l.b16 %v3331
  %v3460 = vunpack.c.l.b16 %v3332
  %v3461 = vunpack.c.l.b16 %v3333
  %v3462 = vunpack.c.l.b16 %v3334
  %v3463 = vunpack.c.l.b16 %v3335
  %v3464 = vunpack.c.l.b16 %v3336
  %v3465 = vunpack.c.l.b16 %v3337
  %v3466 = vunpack.c.l.b16 %v3338
  %v3467 = vunpack.c.l.b16 %v3339
  %v3468 = vunpack.c.l.b16 %v3340
  %v3469 = vunpack.c.l.b16 %v3341
  %v3470 = vpack.c.b16 %v3407, %v3406
  %v3471 = vpack.c.b16 %v3409, %v3408
  %v3472 = vpack.c.b16 %v3411, %v3410
  %v3473 = vpack.c.b16 %v3413, %v3412
  %v3474 = vpack.c.b16 %v3415, %v3414
  %v3475 = vpack.c.b16 %v3417, %v3416
  %v3476 = vpack.c.b16 %v3419, %v3418
  %v3477 = vpack.c.b16 %v3421, %v3420
  %v3478 = vpack.c.b16 %v3423, %v3422
  %v3479 = vpack.c.b16 %v3425, %v3424
  %v3480 = vpack.c.b16 %v3427, %v3426
  %v3481 = vpack.c.b16 %v3429, %v3428
  %v3482 = vpack.c.b16 %v3431, %v3430
  %v3483 = vpack.c.b16 %v3433, %v3432
  %v3484 = vpack.c.b16 %v3435, %v3434
  %v3485 = vpack.c.b16 %v3437, %v3436
  %v3486 = vpack.c.b16 %v3439, %v3438
  %v3487 = vpack.c.b16 %v3441, %v3440
  %v3488 = vpack.c.b16 %v3443, %v3442
  %v3489 = vpack.c.b16 %v3445, %v3444
  %v3490 = vpack.c.b16 %v3447, %v3446
  %v3491 = vpack.c.b16 %v3449, %v3448
  %v3492 = vpack.c.b16 %v3451, %v3450
  %v3493 = vpack.c.b16 %v3453, %v3452
  %v3494 = vpack.c.b16 %v3455, %v3454
  %v3495 = vpack.c.b16 %v3457, %v3456
  %v3496 = vpack.c.b16 %v3459, %v3458
  %v3497 = vpack.c.b16 %v3461, %v3460
  %v3498 = vpack.c.b16 %v3463, %v3462
  %v3499 = vpack.c.b16 %v3465, %v3464
  %v3500 = vpack.c.b16 %v3467, %v3466
  %v3501 = vpack.c.b16 %v3469, %v3468
  %3534 = vmatpush.bf16.msra.mxu0 %v3477
  %3535 = vmatpush.bf16.msra.mxu0 %v3476
  %3536 = vmatpush.bf16.msra.mxu0 %v3475
  %3537 = vmatpush.bf16.msra.mxu0 %v3474
  %3538 = vmatpush.bf16.msra.mxu0 %v3473
  %3539 = vmatpush.bf16.msra.mxu0 %v3472
  %3540 = vmatpush.bf16.msra.mxu0 %v3471
  %3541 = vmatpush.bf16.msra.mxu0 %v3470
  %3542 = vmatmul.bf16.gmra.mxu0 %v2648
  %v3543 = vpop.f32.mrf.mxu0
  %v3544 = vadd.f32 0.0, %v3543
  %v3545 = vpop.f32.mrf.mxu0
  %v3546 = vadd.f32 0.0, %v3545
  %3547 = vdwg.mxu0
  %3548 = vmatpush.bf16.msra.mxu0 %v3485
  %3549 = vmatpush.bf16.msra.mxu0 %v3484
  %3550 = vmatpush.bf16.msra.mxu0 %v3483
  %3551 = vmatpush.bf16.msra.mxu0 %v3482
  %3552 = vmatpush.bf16.msra.mxu0 %v3481
  %3553 = vmatpush.bf16.msra.mxu0 %v3480
  %3554 = vmatpush.bf16.msra.mxu0 %v3479
  %3555 = vmatpush.bf16.msra.mxu0 %v3478
  %3556 = vmatmul.bf16.gmra.mxu0 %v2649
  %v3557 = vpop.f32.mrf.mxu0
  %v3558 = vadd.f32 %v3544, %v3557
  %v3559 = vpop.f32.mrf.mxu0
  %v3560 = vadd.f32 %v3546, %v3559
  %3561 = vdwg.mxu0
  %3562 = vmatpush.bf16.msra.mxu0 %v3493
  %3563 = vmatpush.bf16.msra.mxu0 %v3492
  %3564 = vmatpush.bf16.msra.mxu0 %v3491
  %3565 = vmatpush.bf16.msra.mxu0 %v3490
  %3566 = vmatpush.bf16.msra.mxu0 %v3489
  %3567 = vmatpush.bf16.msra.mxu0 %v3488
  %3568 = vmatpush.bf16.msra.mxu0 %v3487
  %3569 = vmatpush.bf16.msra.mxu0 %v3486
  %3570 = vmatmul.bf16.gmra.mxu0 %v2650
  %v3571 = vpop.f32.mrf.mxu0
  %v3572 = vadd.f32 %v3558, %v3571
  %v3573 = vpop.f32.mrf.mxu0
  %v3574 = vadd.f32 %v3560, %v3573
  %3575 = vdwg.mxu0
  %3576 = vmatpush.bf16.msra.mxu0 %v3501
  %3577 = vmatpush.bf16.msra.mxu0 %v3500
  %3578 = vmatpush.bf16.msra.mxu0 %v3499
  %3579 = vmatpush.bf16.msra.mxu0 %v3498
  %3580 = vmatpush.bf16.msra.mxu0 %v3497
  %3581 = vmatpush.bf16.msra.mxu0 %v3496
  %3582 = vmatpush.bf16.msra.mxu0 %v3495
  %3583 = vmatpush.bf16.msra.mxu0 %v3494
  %3584 = vmatmul.bf16.gmra.mxu0 %v2651
  %v3585 = vpop.f32.mrf.mxu0
  %v3586 = vadd.f32 %v3572, %v3585
  %v3587 = vpop.f32.mrf.mxu0
  %v3588 = vadd.f32 %v3574, %v3587
  %3589 = vdwg.mxu0
  %v3590 = vld [vmem:[%s10] sm:$0xff]
  %v3591 = vld [vmem:[%s10 + $0x8] sm:$0xff]
  %v3592 = vld [vmem:[%s10 + $0x10] sm:$0xff]
  %v3593 = vld [vmem:[%s10 + $0x18] sm:$0xff]
  %v3594 = vld [vmem:[%s12] sm:$0x1]
  %v3596 = vperm.slane %v3594, 0
  %vm3598 = vcmask 392192
  %v3600 = vsel %vm3598, %v3590, 0
  %v3603 = vsel %vm3598, %v3591, 0
  %v3606 = vsel %vm3598, %v3592, 0
  %v3609 = vsel %vm3598, %v3593, 0
  %3611 = vmatpush.msra.mxu0 0.0
  %3612 = vmatpush.msra.mxu0 0.0
  %3613 = vmatpush.msra.mxu0 0.0
  %3614 = vmatpush.msra.mxu0 0.0
  %3615 = vmatpush.msra.mxu0 0.0
  %3616 = vmatpush.msra.mxu0 0.0
  %3617 = vmatpush.msra.mxu0 0.0
  %3618 = vmatpush.msra.mxu0 0.0
  %3619 = vmatpush.msra.mxu0 0.0
  %3620 = vmatpush.msra.mxu0 0.0
  %3621 = vmatpush.msra.mxu0 %v3588
  %3622 = vmatpush.msra.mxu0 %v3586
  %3623 = vmatpush.msra.mxu0 %v3275
  %3624 = vmatpush.msra.mxu0 %v3273
  %3625 = vmatpush.msra.mxu0 %v2962
  %3626 = vmatpush.msra.mxu0 %v2960
  %3627 = vmatmul.f32.gmra.mxu0 %v3600
  %v3628 = vpop.f32.mrf.mxu0
  %v3629 = vadd.f32 %v3596, %v3628
  %3630 = vmatmul.f32.gmra.mxu0 %v3603
  %v3631 = vpop.f32.mrf.mxu0
  %v3632 = vadd.f32 %v3596, %v3631
  %3633 = vmatmul.f32.gmra.mxu0 %v3606
  %v3634 = vpop.f32.mrf.mxu0
  %v3635 = vadd.f32 %v3596, %v3634
  %3636 = vmatmul.f32.gmra.mxu0 %v3609
  %v3637 = vpop.f32.mrf.mxu0
  %v3638 = vadd.f32 %v3596, %v3637
  %3639 = vdwg.mxu0
  %v3640 = vsub.f32 0.0, %v3629
  %v3641 = vsub.f32 0.0, %v3632
  %v3642 = vsub.f32 0.0, %v3635
  %v3643 = vsub.f32 0.0, %v3638
  %v3644 = vmul.f32 %v3640, 1.442695
  %v3645 = vpow.pop %v3644
  %v3646 = vmul.f32 %v3641, 1.442695
  %v3647 = vpow.pop %v3646
  %v3648 = vmul.f32 %v3642, 1.442695
  %v3649 = vpow.pop %v3648
  %v3650 = vmul.f32 %v3643, 1.442695
  %v3651 = vpow.pop %v3650
  %v3652 = vadd.f32 %v3645, 1.0
  %v3653 = vadd.f32 %v3647, 1.0
  %v3654 = vadd.f32 %v3649, 1.0
  %v3655 = vadd.f32 %v3651, 1.0
  %v3656 = vrcp.pop %v3652
  %v3657 = vmul.f32 %v3652, %v3656
  %v3658 = vsub.f32 1.0, %v3657
  %v3659 = vmul.f32 %v3656, %v3658
  %v3660 = vadd.f32 %v3656, %v3659
  %vm3661 = vweird.f32 %v3652
  %vm3662 = vweird.f32 %v3656
  %vm3663 = vmor %vm3661, %vm3662
  %v3664 = vsel %vm3663, %v3656, %v3660
  %v3665 = vand.u32 2147483647, %v3652
  %vm3666 = vcmp.eq.f32.partialorder %v3665, 8.507059e+37
  %v3667 = vand.u32 %v3652, 2147483648
  %v3668 = vor.u32 1.1754944e-38, %v3667
  %v3669 = vsel %vm3666, %v3668, %v3664
  %v3670 = vmul.f32 1.0, %v3669
  %v3671 = vrcp.pop %v3653
  %v3672 = vmul.f32 %v3653, %v3671
  %v3673 = vsub.f32 1.0, %v3672
  %v3674 = vmul.f32 %v3671, %v3673
  %v3675 = vadd.f32 %v3671, %v3674
  %vm3676 = vweird.f32 %v3653
  %vm3677 = vweird.f32 %v3671
  %vm3678 = vmor %vm3676, %vm3677
  %v3679 = vsel %vm3678, %v3671, %v3675
  %v3680 = vand.u32 2147483647, %v3653
  %vm3681 = vcmp.eq.f32.partialorder %v3680, 8.507059e+37
  %v3682 = vand.u32 %v3653, 2147483648
  %v3683 = vor.u32 1.1754944e-38, %v3682
  %v3684 = vsel %vm3681, %v3683, %v3679
  %v3685 = vmul.f32 1.0, %v3684
  %v3686 = vrcp.pop %v3654
  %v3687 = vmul.f32 %v3654, %v3686
  %v3688 = vsub.f32 1.0, %v3687
  %v3689 = vmul.f32 %v3686, %v3688
  %v3690 = vadd.f32 %v3686, %v3689
  %vm3691 = vweird.f32 %v3654
  %vm3692 = vweird.f32 %v3686
  %vm3693 = vmor %vm3691, %vm3692
  %v3694 = vsel %vm3693, %v3686, %v3690
  %v3695 = vand.u32 2147483647, %v3654
  %vm3696 = vcmp.eq.f32.partialorder %v3695, 8.507059e+37
  %v3697 = vand.u32 %v3654, 2147483648
  %v3698 = vor.u32 1.1754944e-38, %v3697
  %v3699 = vsel %vm3696, %v3698, %v3694
  %v3700 = vmul.f32 1.0, %v3699
  %v3701 = vrcp.pop %v3655
  %v3702 = vmul.f32 %v3655, %v3701
  %v3703 = vsub.f32 1.0, %v3702
  %v3704 = vmul.f32 %v3701, %v3703
  %v3705 = vadd.f32 %v3701, %v3704
  %vm3706 = vweird.f32 %v3655
  %vm3707 = vweird.f32 %v3701
  %vm3708 = vmor %vm3706, %vm3707
  %v3709 = vsel %vm3708, %v3701, %v3705
  %v3710 = vand.u32 2147483647, %v3655
  %vm3711 = vcmp.eq.f32.partialorder %v3710, 8.507059e+37
  %v3712 = vand.u32 %v3655, 2147483648
  %v3713 = vor.u32 1.1754944e-38, %v3712
  %v3714 = vsel %vm3711, %v3713, %v3709
  %v3715 = vmul.f32 1.0, %v3714
  %3716 = vst.msk [vmem:[%s14] sm:$0xff] %vm253, %v3670
  %3717 = vst.msk [vmem:[%s14 + $0x8] sm:$0xff] %vm253, %v3685
  %3718 = vst.msk [vmem:[%s14 + $0x10] sm:$0xff] %vm253, %v3700
  %3719 = vst.msk [vmem:[%s14 + $0x18] sm:$0xff] %vm253, %v3715
  // Predicated region
  $region54: #{autoencoder_forward.1} parent=0 // pred_check
    _
  $region55: #{autoencoder_forward.1} parent=0 // pred_check_branch
    %3721 = sbr.rel (0) target = $region57
  $region56: #{autoencoder_forward.1} parent=0 // pred_region
    _
  $region57: #{autoencoder_forward.1} parent=0 // pred_fallthru
    _
  // Predicated region
  $region58: #{autoencoder_forward.1} parent=0 // pred_check
    _
  $region59: #{autoencoder_forward.1} parent=0 // pred_check_branch
    %3723 = sbr.rel (0) target = $region61
  $region60: #{autoencoder_forward.1} parent=0 // pred_region
    _
  $region61: #{autoencoder_forward.1} parent=0 // pred_fallthru
    _
  // Predicated region
  $region62: #{autoencoder_forward.1} parent=0 // pred_check
    _
  $region63: #{autoencoder_forward.1} parent=0 // pred_check_branch
    %3725 = sbr.rel (0) target = $region65
  $region64: #{autoencoder_forward.1} parent=0 // pred_region
    _
  $region65: #{autoencoder_forward.1} parent=0 // pred_fallthru
    _
  // Predicated region
  $region66: #{autoencoder_forward.1} parent=0 // pred_check
    _
  $region67: #{autoencoder_forward.1} parent=0 // pred_check_branch
    %3727 = sbr.rel (0) target = $region69
  $region68: #{autoencoder_forward.1} parent=0 // pred_region
    _
  $region69: #{autoencoder_forward.1} parent=0 // pred_fallthru
    _

</llo_original>
